<compile_context>
chip_gen: v6e
topology: v6e:2x2x1
jax: 0.10.0
libtpu: 0.0.40
codegen_flags: <defaults>
</compile_context>

<pallas_src>
import functools

import jax
import jax.numpy as jnp
from jax.experimental import pallas as pl
from jax.experimental.pallas import tpu as pltpu


def _round_up(x, m):
    return ((x + m - 1) // m) * m


def _fce_kernel(f_ref, wh_ref, gw_ref, wf_ref, b_ref, out_ref, *, K, unroll):
    """One row-tile of the FCE recurrence.

    Shapes (Dp, Kp are 128-multiples; gate column order i,f,o,g, each gate padded to Dp):
      f_ref   : (tn, Dp)            input features, zero-padded beyond D
      wh_ref  : (Dp, 4*Dp + Kp)     [W_hh^T (per-gate padded) | G^T (padded)]
      gw_ref  : (Kp, 4*Dp)          G @ W_ih[:, D:]^T  (folds r = a @ G into the gates)
      wf_ref  : (Dp, 4*Dp)          W_ih[:, :D]^T
      b_ref   : (1, 4*Dp)           b_ih + b_hh (f32)
      out_ref : (tn, Dp)            h output slab (lane-dense store)
    """
    f = f_ref[...].astype(jnp.float32)       # activations stay f32
    W_h = wh_ref[...]                        # stored dtype (f32 or bf16) -> MXU operand
    GW = gw_ref[...]
    Wf = wf_ref[...]
    bias = b_ref[...].astype(jnp.float32)

    tn, Dp = f.shape
    Kp = GW.shape[0]
    fourD = 4 * Dp
    cdt = W_h.dtype                          # MXU compute dtype

    # Loop-invariant part of the LSTM gates: f-half of the input projection + biases.
    f_proj = jnp.dot(f.astype(cdt), Wf, preferred_element_type=jnp.float32) + bias  # (tn, 4Dp)

    if Kp > K:
        col = jax.lax.broadcasted_iota(jnp.int32, (tn, Kp), 1)
        logit_mask = col < K                 # mask padded logit columns out of the softmax
    else:
        logit_mask = None

    def step(h, c):
        # One fused h-matmul: cols [:4Dp] = h @ W_hh^T, cols [4Dp:] = h @ G^T (attention logits).
        y = jnp.dot(h.astype(cdt), W_h, preferred_element_type=jnp.float32)  # (tn, 4Dp+Kp)
        logits = y[:, fourD:]                                                # lane-aligned slice
        if logit_mask is not None:
            logits = jnp.where(logit_mask, logits, -1e30)
        m = jnp.max(logits, axis=-1, keepdims=True)
        e = jnp.exp(logits - m)
        a = e * pl.reciprocal(jnp.sum(e, axis=-1, keepdims=True), approx=True)

        # gates = [f, r] @ W_ih^T + h @ W_hh^T + b, with r = a @ G folded into a @ GW.
        gates = (jnp.dot(a.astype(cdt), GW, preferred_element_type=jnp.float32)
                 + y[:, :fourD] + f_proj)                                    # (tn, 4Dp)

        sig = jax.nn.sigmoid(gates[:, :3 * Dp])     # i, f, o gates in one EUP pass
        i_g = sig[:, 0 * Dp:1 * Dp]
        f_g = sig[:, 1 * Dp:2 * Dp]
        o_g = sig[:, 2 * Dp:3 * Dp]
        g_g = jnp.tanh(gates[:, 3 * Dp:])
        c_new = f_g * c + i_g * g_g
        h_new = o_g * jnp.tanh(c_new) + f           # residual: h = h + f
        return h_new, c_new

    h = f
    c = jnp.zeros_like(f)
    if unroll:
        # Toy / small D: full unroll gives the LLO scheduler cross-iteration visibility.
        for _ in range(K):
            h, c = step(h, c)
    else:
        # Production D: bound live ranges of the ~(tn, 4Dp+Kp) intermediates.
        h, c = jax.lax.fori_loop(0, K, lambda _, hc: step(hc[0], hc[1]), (h, c))

    out_ref[...] = h.astype(out_ref.dtype)


def fully_contextual_embedding(f, G, w_ih, w_hh, b_ih, b_hh, *,
                               param_dtype=jnp.bfloat16, tile_n=None):
    """f: (N, D), G: (K, D), LSTMCell params in PyTorch layout (gate order i,f,g,o) -> h: (N, D).

    param_dtype: dtype for the MXU weight operands (bf16 recommended for production;
    f32 available for tight-accuracy checks).  Accumulation / activations are f32.
    """
    N, D = f.shape
    K = G.shape[0]
    Dp = _round_up(D, 128)     # lane-aligned per-gate width
    Kp = _round_up(K, 128)     # lane-aligned logit width

    f32 = jnp.float32
    w_ih = w_ih.astype(f32)                      # (4D, 2D)
    w_hh = w_hh.astype(f32)                      # (4D, D)
    G32 = G.astype(f32)                          # (K, D)
    bias = b_ih.astype(f32) + b_hh.astype(f32)   # (4D,)

    # Reorder gate rows (i,f,g,o) -> (i,f,o,g) so the three sigmoid gates are contiguous.
    def reorder(w):
        return jnp.concatenate([w[:2 * D], w[3 * D:4 * D], w[2 * D:3 * D]], axis=0)

    w_ih_p = reorder(w_ih)
    w_hh_p = reorder(w_hh)
    bias_p = reorder(bias).reshape(1, 4 * D)

    # Zero-pad each gate's column block D -> Dp (keeps every in-kernel slice 128-lane aligned;
    # zero weights + zero bias in the pad region keep padded h/c lanes exactly 0).
    def pad_gate_cols(mat):  # (rows, 4D) -> (rows, 4Dp)
        parts = [jnp.pad(mat[:, g * D:(g + 1) * D], ((0, 0), (0, Dp - D))) for g in range(4)]
        return jnp.concatenate(parts, axis=1)

    def pad_rows(mat, target):
        return jnp.pad(mat, ((0, target - mat.shape[0]), (0, 0)))

    Wf_T = pad_rows(pad_gate_cols(w_ih_p[:, :D].T), Dp)                 # (Dp, 4Dp)
    GW = pad_rows(pad_gate_cols(G32 @ w_ih_p[:, D:].T), Kp)             # (Kp, 4Dp)
    Whh_T = pad_rows(pad_gate_cols(w_hh_p.T), Dp)                       # (Dp, 4Dp)
    G_Tp = pad_rows(jnp.pad(G32.T, ((0, 0), (0, Kp - K))), Dp)          # (Dp, Kp)
    W_h = jnp.concatenate([Whh_T, G_Tp], axis=1)                        # (Dp, 4Dp + Kp)
    bias_pad = pad_gate_cols(bias_p)                                    # (1, 4Dp), stays f32

    # MXU operands in the requested compute dtype (bf16 halves HBM/VMEM weight traffic).
    W_h = W_h.astype(param_dtype)
    GW = GW.astype(param_dtype)
    Wf_T = Wf_T.astype(param_dtype)

    # Lane-padded input / output slabs.
    f_pad = jnp.pad(f.astype(f32), ((0, 0), (0, Dp - D)))               # (N, Dp)

    if tile_n is None:
        tile_n = N if N <= 256 else 256
    grid = (pl.cdiv(N, tile_n),)

    # Loop-invariant operands: constant block index across the grid -> single-buffer them.
    def invariant_spec(arr):
        nd = arr.ndim
        return pl.BlockSpec(arr.shape, lambda *_: (0,) * nd,
                            pipeline_mode=pl.Buffered(1))

    # VMEM budget: single-buffered weights + double-buffered f/out row tiles + headroom.
    def nbytes(a):
        return a.size * a.dtype.itemsize

    weight_bytes = nbytes(W_h) + nbytes(GW) + nbytes(Wf_T) + nbytes(bias_pad)
    tile_bytes = 2 * 2 * tile_n * Dp * 4                                 # f + out tiles, f32, x2 buffers
    vmem_limit = int(min(max(2 * (weight_bytes + tile_bytes) + (8 << 20), 32 << 20), 112 << 20))

    # Advisory cost estimate for XLA's scheduler.
    flops_per_row_step = 2 * Dp * (4 * Dp + Kp) + 2 * Kp * 4 * Dp
    flops = int(N * (K * flops_per_row_step + 2 * Dp * 4 * Dp))
    transcendentals = int(N * K * (Kp + 5 * Dp))
    bytes_accessed = int(weight_bytes + 2 * N * Dp * 4)

    unroll = (Dp <= 256) and (K <= 16)

    out_pad = pl.pallas_call(
        functools.partial(_fce_kernel, K=K, unroll=unroll),
        out_shape=jax.ShapeDtypeStruct((N, Dp), f.dtype),
        grid=grid,
        in_specs=[
            pl.BlockSpec((tile_n, Dp), lambda i: (i, 0)),   # f, tiled over rows
            invariant_spec(W_h),
            invariant_spec(GW),
            invariant_spec(Wf_T),
            invariant_spec(bias_pad),
        ],
        out_specs=pl.BlockSpec((tile_n, Dp), lambda i: (i, 0)),
        compiler_params=pltpu.CompilerParams(
            dimension_semantics=("parallel",),
            vmem_limit_bytes=vmem_limit,
        ),
        cost_estimate=pl.CostEstimate(
            flops=flops, transcendentals=transcendentals, bytes_accessed=bytes_accessed),
    )(f_pad, W_h, GW, Wf_T, bias_pad)

    return out_pad[:, :D]


def _reference(f, G, w_ih, w_hh, b_ih, b_hh):
    """Pure-JAX reference mirroring the PyTorch forward (exact softmax, gate order i,f,g,o)."""
    D = f.shape[1]
    h = f
    c = jnp.zeros_like(f)
    for _ in range(G.shape[0]):
        logit = h @ G.T
        a = jax.nn.softmax(logit, axis=1)
        r = a @ G
        x = jnp.concatenate([f, r], axis=1)
        gates = x @ w_ih.T + b_ih + h @ w_hh.T + b_hh
        i_g = jax.nn.sigmoid(gates[:, 0 * D:1 * D])
        f_g = jax.nn.sigmoid(gates[:, 1 * D:2 * D])
        g_g = jnp.tanh(gates[:, 2 * D:3 * D])
        o_g = jax.nn.sigmoid(gates[:, 3 * D:4 * D])
        c = f_g * c + i_g * g_g
        h = o_g * jnp.tanh(c) + f
    return h


if __name__ == "__main__":
    feat_dim = 32   # D
    N = 2           # query batch
    K = 8           # support-set size

    key = jax.random.PRNGKey(0)
    kf, kg, k1, k2, k3, k4 = jax.random.split(key, 6)

    f = jax.random.normal(kf, (N, feat_dim), dtype=jnp.float32)
    G = jax.random.normal(kg, (K, feat_dim), dtype=jnp.float32)

    # Deterministic LSTMCell(feat_dim*2, feat_dim) parameters (PyTorch-style uniform init).
    bound = 1.0 / (feat_dim ** 0.5)
    w_ih = jax.random.uniform(k1, (4 * feat_dim, 2 * feat_dim),
                              minval=-bound, maxval=bound, dtype=jnp.float32)
    w_hh = jax.random.uniform(k2, (4 * feat_dim, feat_dim),
                              minval=-bound, maxval=bound, dtype=jnp.float32)
    b_ih = jax.random.uniform(k3, (4 * feat_dim,),
                              minval=-bound, maxval=bound, dtype=jnp.float32)
    b_hh = jax.random.uniform(k4, (4 * feat_dim,),
                              minval=-bound, maxval=bound, dtype=jnp.float32)

    ref = _reference(f, G, w_ih, w_hh, b_ih, b_hh)

    # Tight-accuracy check: f32 MXU operands.
    out_f32 = fully_contextual_embedding(f, G, w_ih, w_hh, b_ih, b_hh,
                                         param_dtype=jnp.float32)
    out_f32 = jax.block_until_ready(out_f32)
    assert out_f32.shape == (N, feat_dim)
    # 1e-3 covers the approximate EUP reciprocal + the algebraic re-association of the
    # fused gate matmuls.
    assert jnp.allclose(out_f32, ref, atol=1e-3, rtol=1e-3), "f32 mismatch vs reference"

    # Production path: bf16 MXU operands, f32 accumulation/activations (loose smoke check).
    out_bf16 = fully_contextual_embedding(f, G, w_ih, w_hh, b_ih, b_hh,
                                          param_dtype=jnp.bfloat16)
    out_bf16 = jax.block_until_ready(out_bf16)
    assert out_bf16.shape == (N, feat_dim)
    assert jnp.allclose(out_bf16, ref, atol=1e-1, rtol=1e-1), "bf16 mismatch vs reference"

    print("KERNEL_OK")
</pallas_src>

<mosaic_0001>
module attributes {stable_mosaic.version = 11 : i64} {
  func.func @_fce_kernel(%arg0: i32, %arg1: memref<2x128xf32, #tpu.memory_space<vmem>>, %arg2: memref<128x640xf32, #tpu.memory_space<vmem>>, %arg3: memref<128x512xf32, #tpu.memory_space<vmem>>, %arg4: memref<128x512xf32, #tpu.memory_space<vmem>>, %arg5: memref<1x512xf32, #tpu.memory_space<vmem>>, %arg6: memref<2x128xf32, #tpu.memory_space<vmem>>) attributes {dimension_semantics = [#tpu.dimension_semantics<parallel>], iteration_bounds = array<i64: 1>, scalar_prefetch = 0 : i64, scratch_operands = 0 : i64, tpu.core_type = #tpu.core_type<tc>, window_params = [{transform_indices = @transform_0, window_bounds = array<i64: 2, 128>}, {pipeline_mode = #tpu.pipeline_mode<synchronous>, transform_indices = @transform_1, window_bounds = array<i64: 128, 640>}, {pipeline_mode = #tpu.pipeline_mode<synchronous>, transform_indices = @transform_2, window_bounds = array<i64: 128, 512>}, {pipeline_mode = #tpu.pipeline_mode<synchronous>, transform_indices = @transform_3, window_bounds = array<i64: 128, 512>}, {pipeline_mode = #tpu.pipeline_mode<synchronous>, transform_indices = @transform_4, window_bounds = array<i64: 1, 512>}, {transform_indices = @transform_5, window_bounds = array<i64: 2, 128>}]} {
    %c0 = arith.constant 0 : index
    %c0_0 = arith.constant 0 : index
    %0 = vector.load %arg1[%c0, %c0_0] : memref<2x128xf32, #tpu.memory_space<vmem>>, vector<2x128xf32>
    %c0_1 = arith.constant 0 : index
    %c0_2 = arith.constant 0 : index
    %1 = vector.load %arg2[%c0_1, %c0_2] : memref<128x640xf32, #tpu.memory_space<vmem>>, vector<128x640xf32>
    %c0_3 = arith.constant 0 : index
    %c0_4 = arith.constant 0 : index
    %2 = vector.load %arg3[%c0_3, %c0_4] : memref<128x512xf32, #tpu.memory_space<vmem>>, vector<128x512xf32>
    %c0_5 = arith.constant 0 : index
    %c0_6 = arith.constant 0 : index
    %3 = vector.load %arg4[%c0_5, %c0_6] : memref<128x512xf32, #tpu.memory_space<vmem>>, vector<128x512xf32>
    %c0_7 = arith.constant 0 : index
    %c0_8 = arith.constant 0 : index
    %4 = vector.load %arg5[%c0_7, %c0_8] : memref<1x512xf32, #tpu.memory_space<vmem>>, vector<1x512xf32>
    %cst = arith.constant dense<0.000000e+00> : vector<2x512xf32>
    %5 = tpu.matmul %0, %3, %cst {dimension_numbers = #tpu.dot_dimension_numbers<[1], [0], [0], [1], [0, 0, 1, 1], [], []>} : vector<2x128xf32>, vector<128x512xf32>, vector<2x512xf32> -> vector<2x512xf32>
    %6 = vector.broadcast %4 : vector<1x512xf32> to vector<2x512xf32>
    %7 = arith.addf %5, %6 : vector<2x512xf32>
    %8 = tpu.iota {dimensions = array<i32: 1>} : vector<2x128xi32>
    %c8_i32 = arith.constant 8 : i32
    %9 = vector.broadcast %c8_i32 : i32 to vector<2x128xi32>
    %10 = arith.cmpi slt, %8, %9 : vector<2x128xi32>
    %cst_9 = arith.constant 0.000000e+00 : f32
    %11 = vector.broadcast %cst_9 : f32 to vector<2x128xf32>
    %cst_10 = arith.constant dense<0.000000e+00> : vector<2x640xf32>
    %12 = tpu.matmul %0, %1, %cst_10 {dimension_numbers = #tpu.dot_dimension_numbers<[1], [0], [0], [1], [0, 0, 1, 1], [], []>} : vector<2x128xf32>, vector<128x640xf32>, vector<2x640xf32> -> vector<2x640xf32>
    %13 = vector.extract_strided_slice %12 {offsets = [0, 512], sizes = [2, 128], strides = [1, 1]} : vector<2x640xf32> to vector<2x128xf32>
    %cst_11 = arith.constant -1.000000e+30 : f32
    %14 = vector.broadcast %cst_11 : f32 to vector<2x128xf32>
    %15 = arith.select %10, %13, %14 : vector<2x128xi1>, vector<2x128xf32>
    %cst_12 = arith.constant dense<0xFF800000> : vector<2xf32>
    %16 = vector.multi_reduction <maximumf>, %15, %cst_12 [1] : vector<2x128xf32> to vector<2xf32>
    %17 = vector.shape_cast %16 : vector<2xf32> to vector<2x1xf32>
    %18 = vector.broadcast %17 : vector<2x1xf32> to vector<2x128xf32>
    %19 = arith.subf %15, %18 : vector<2x128xf32>
    %20 = math.exp %19 : vector<2x128xf32>
    %cst_13 = arith.constant dense<0.000000e+00> : vector<2xf32>
    %21 = vector.multi_reduction <add>, %20, %cst_13 [1] : vector<2x128xf32> to vector<2xf32>
    %22 = vector.shape_cast %21 : vector<2xf32> to vector<2x1xf32>
    %23 = tpu.reciprocal %22 {approx = true} : vector<2x1xf32> -> vector<2x1xf32>
    %24 = vector.broadcast %23 : vector<2x1xf32> to vector<2x128xf32>
    %25 = arith.mulf %20, %24 : vector<2x128xf32>
    %cst_14 = arith.constant dense<0.000000e+00> : vector<2x512xf32>
    %26 = tpu.matmul %25, %2, %cst_14 {dimension_numbers = #tpu.dot_dimension_numbers<[1], [0], [0], [1], [0, 0, 1, 1], [], []>} : vector<2x128xf32>, vector<128x512xf32>, vector<2x512xf32> -> vector<2x512xf32>
    %27 = vector.extract_strided_slice %12 {offsets = [0, 0], sizes = [2, 512], strides = [1, 1]} : vector<2x640xf32> to vector<2x512xf32>
    %28 = arith.addf %26, %27 : vector<2x512xf32>
    %29 = arith.addf %28, %7 : vector<2x512xf32>
    %30 = vector.extract_strided_slice %29 {offsets = [0, 0], sizes = [2, 384], strides = [1, 1]} : vector<2x512xf32> to vector<2x384xf32>
    %31 = arith.negf %30 : vector<2x384xf32>
    %32 = math.exp %31 : vector<2x384xf32>
    %cst_15 = arith.constant 1.000000e+00 : f32
    %33 = vector.broadcast %cst_15 : f32 to vector<2x384xf32>
    %34 = arith.addf %33, %32 : vector<2x384xf32>
    %35 = arith.divf %33, %34 : vector<2x384xf32>
    %36 = vector.extract_strided_slice %35 {offsets = [0, 0], sizes = [2, 128], strides = [1, 1]} : vector<2x384xf32> to vector<2x128xf32>
    %37 = vector.extract_strided_slice %35 {offsets = [0, 128], sizes = [2, 128], strides = [1, 1]} : vector<2x384xf32> to vector<2x128xf32>
    %38 = vector.extract_strided_slice %35 {offsets = [0, 256], sizes = [2, 128], strides = [1, 1]} : vector<2x384xf32> to vector<2x128xf32>
    %39 = vector.extract_strided_slice %29 {offsets = [0, 384], sizes = [2, 128], strides = [1, 1]} : vector<2x512xf32> to vector<2x128xf32>
    %40 = math.tanh %39 : vector<2x128xf32>
    %41 = arith.mulf %37, %11 : vector<2x128xf32>
    %42 = arith.mulf %36, %40 : vector<2x128xf32>
    %43 = arith.addf %41, %42 : vector<2x128xf32>
    %44 = math.tanh %43 : vector<2x128xf32>
    %45 = arith.mulf %38, %44 : vector<2x128xf32>
    %46 = arith.addf %45, %0 : vector<2x128xf32>
    %cst_16 = arith.constant dense<0.000000e+00> : vector<2x640xf32>
    %47 = tpu.matmul %46, %1, %cst_16 {dimension_numbers = #tpu.dot_dimension_numbers<[1], [0], [0], [1], [0, 0, 1, 1], [], []>} : vector<2x128xf32>, vector<128x640xf32>, vector<2x640xf32> -> vector<2x640xf32>
    %48 = vector.extract_strided_slice %47 {offsets = [0, 512], sizes = [2, 128], strides = [1, 1]} : vector<2x640xf32> to vector<2x128xf32>
    %cst_17 = arith.constant -1.000000e+30 : f32
    %49 = vector.broadcast %cst_17 : f32 to vector<2x128xf32>
    %50 = arith.select %10, %48, %49 : vector<2x128xi1>, vector<2x128xf32>
    %cst_18 = arith.constant dense<0xFF800000> : vector<2xf32>
    %51 = vector.multi_reduction <maximumf>, %50, %cst_18 [1] : vector<2x128xf32> to vector<2xf32>
    %52 = vector.shape_cast %51 : vector<2xf32> to vector<2x1xf32>
    %53 = vector.broadcast %52 : vector<2x1xf32> to vector<2x128xf32>
    %54 = arith.subf %50, %53 : vector<2x128xf32>
    %55 = math.exp %54 : vector<2x128xf32>
    %cst_19 = arith.constant dense<0.000000e+00> : vector<2xf32>
    %56 = vector.multi_reduction <add>, %55, %cst_19 [1] : vector<2x128xf32> to vector<2xf32>
    %57 = vector.shape_cast %56 : vector<2xf32> to vector<2x1xf32>
    %58 = tpu.reciprocal %57 {approx = true} : vector<2x1xf32> -> vector<2x1xf32>
    %59 = vector.broadcast %58 : vector<2x1xf32> to vector<2x128xf32>
    %60 = arith.mulf %55, %59 : vector<2x128xf32>
    %cst_20 = arith.constant dense<0.000000e+00> : vector<2x512xf32>
    %61 = tpu.matmul %60, %2, %cst_20 {dimension_numbers = #tpu.dot_dimension_numbers<[1], [0], [0], [1], [0, 0, 1, 1], [], []>} : vector<2x128xf32>, vector<128x512xf32>, vector<2x512xf32> -> vector<2x512xf32>
    %62 = vector.extract_strided_slice %47 {offsets = [0, 0], sizes = [2, 512], strides = [1, 1]} : vector<2x640xf32> to vector<2x512xf32>
    %63 = arith.addf %61, %62 : vector<2x512xf32>
    %64 = arith.addf %63, %7 : vector<2x512xf32>
    %65 = vector.extract_strided_slice %64 {offsets = [0, 0], sizes = [2, 384], strides = [1, 1]} : vector<2x512xf32> to vector<2x384xf32>
    %66 = arith.negf %65 : vector<2x384xf32>
    %67 = math.exp %66 : vector<2x384xf32>
    %cst_21 = arith.constant 1.000000e+00 : f32
    %68 = vector.broadcast %cst_21 : f32 to vector<2x384xf32>
    %69 = arith.addf %68, %67 : vector<2x384xf32>
    %70 = arith.divf %68, %69 : vector<2x384xf32>
    %71 = vector.extract_strided_slice %70 {offsets = [0, 0], sizes = [2, 128], strides = [1, 1]} : vector<2x384xf32> to vector<2x128xf32>
    %72 = vector.extract_strided_slice %70 {offsets = [0, 128], sizes = [2, 128], strides = [1, 1]} : vector<2x384xf32> to vector<2x128xf32>
    %73 = vector.extract_strided_slice %70 {offsets = [0, 256], sizes = [2, 128], strides = [1, 1]} : vector<2x384xf32> to vector<2x128xf32>
    %74 = vector.extract_strided_slice %64 {offsets = [0, 384], sizes = [2, 128], strides = [1, 1]} : vector<2x512xf32> to vector<2x128xf32>
    %75 = math.tanh %74 : vector<2x128xf32>
    %76 = arith.mulf %72, %43 : vector<2x128xf32>
    %77 = arith.mulf %71, %75 : vector<2x128xf32>
    %78 = arith.addf %76, %77 : vector<2x128xf32>
    %79 = math.tanh %78 : vector<2x128xf32>
    %80 = arith.mulf %73, %79 : vector<2x128xf32>
    %81 = arith.addf %80, %0 : vector<2x128xf32>
    %cst_22 = arith.constant dense<0.000000e+00> : vector<2x640xf32>
    %82 = tpu.matmul %81, %1, %cst_22 {dimension_numbers = #tpu.dot_dimension_numbers<[1], [0], [0], [1], [0, 0, 1, 1], [], []>} : vector<2x128xf32>, vector<128x640xf32>, vector<2x640xf32> -> vector<2x640xf32>
    %83 = vector.extract_strided_slice %82 {offsets = [0, 512], sizes = [2, 128], strides = [1, 1]} : vector<2x640xf32> to vector<2x128xf32>
    %cst_23 = arith.constant -1.000000e+30 : f32
    %84 = vector.broadcast %cst_23 : f32 to vector<2x128xf32>
    %85 = arith.select %10, %83, %84 : vector<2x128xi1>, vector<2x128xf32>
    %cst_24 = arith.constant dense<0xFF800000> : vector<2xf32>
    %86 = vector.multi_reduction <maximumf>, %85, %cst_24 [1] : vector<2x128xf32> to vector<2xf32>
    %87 = vector.shape_cast %86 : vector<2xf32> to vector<2x1xf32>
    %88 = vector.broadcast %87 : vector<2x1xf32> to vector<2x128xf32>
    %89 = arith.subf %85, %88 : vector<2x128xf32>
    %90 = math.exp %89 : vector<2x128xf32>
    %cst_25 = arith.constant dense<0.000000e+00> : vector<2xf32>
    %91 = vector.multi_reduction <add>, %90, %cst_25 [1] : vector<2x128xf32> to vector<2xf32>
    %92 = vector.shape_cast %91 : vector<2xf32> to vector<2x1xf32>
    %93 = tpu.reciprocal %92 {approx = true} : vector<2x1xf32> -> vector<2x1xf32>
    %94 = vector.broadcast %93 : vector<2x1xf32> to vector<2x128xf32>
    %95 = arith.mulf %90, %94 : vector<2x128xf32>
    %cst_26 = arith.constant dense<0.000000e+00> : vector<2x512xf32>
    %96 = tpu.matmul %95, %2, %cst_26 {dimension_numbers = #tpu.dot_dimension_numbers<[1], [0], [0], [1], [0, 0, 1, 1], [], []>} : vector<2x128xf32>, vector<128x512xf32>, vector<2x512xf32> -> vector<2x512xf32>
    %97 = vector.extract_strided_slice %82 {offsets = [0, 0], sizes = [2, 512], strides = [1, 1]} : vector<2x640xf32> to vector<2x512xf32>
    %98 = arith.addf %96, %97 : vector<2x512xf32>
    %99 = arith.addf %98, %7 : vector<2x512xf32>
    %100 = vector.extract_strided_slice %99 {offsets = [0, 0], sizes = [2, 384], strides = [1, 1]} : vector<2x512xf32> to vector<2x384xf32>
    %101 = arith.negf %100 : vector<2x384xf32>
    %102 = math.exp %101 : vector<2x384xf32>
    %cst_27 = arith.constant 1.000000e+00 : f32
    %103 = vector.broadcast %cst_27 : f32 to vector<2x384xf32>
    %104 = arith.addf %103, %102 : vector<2x384xf32>
    %105 = arith.divf %103, %104 : vector<2x384xf32>
    %106 = vector.extract_strided_slice %105 {offsets = [0, 0], sizes = [2, 128], strides = [1, 1]} : vector<2x384xf32> to vector<2x128xf32>
    %107 = vector.extract_strided_slice %105 {offsets = [0, 128], sizes = [2, 128], strides = [1, 1]} : vector<2x384xf32> to vector<2x128xf32>
    %108 = vector.extract_strided_slice %105 {offsets = [0, 256], sizes = [2, 128], strides = [1, 1]} : vector<2x384xf32> to vector<2x128xf32>
    %109 = vector.extract_strided_slice %99 {offsets = [0, 384], sizes = [2, 128], strides = [1, 1]} : vector<2x512xf32> to vector<2x128xf32>
    %110 = math.tanh %109 : vector<2x128xf32>
    %111 = arith.mulf %107, %78 : vector<2x128xf32>
    %112 = arith.mulf %106, %110 : vector<2x128xf32>
    %113 = arith.addf %111, %112 : vector<2x128xf32>
    %114 = math.tanh %113 : vector<2x128xf32>
    %115 = arith.mulf %108, %114 : vector<2x128xf32>
    %116 = arith.addf %115, %0 : vector<2x128xf32>
    %cst_28 = arith.constant dense<0.000000e+00> : vector<2x640xf32>
    %117 = tpu.matmul %116, %1, %cst_28 {dimension_numbers = #tpu.dot_dimension_numbers<[1], [0], [0], [1], [0, 0, 1, 1], [], []>} : vector<2x128xf32>, vector<128x640xf32>, vector<2x640xf32> -> vector<2x640xf32>
    %118 = vector.extract_strided_slice %117 {offsets = [0, 512], sizes = [2, 128], strides = [1, 1]} : vector<2x640xf32> to vector<2x128xf32>
    %cst_29 = arith.constant -1.000000e+30 : f32
    %119 = vector.broadcast %cst_29 : f32 to vector<2x128xf32>
    %120 = arith.select %10, %118, %119 : vector<2x128xi1>, vector<2x128xf32>
    %cst_30 = arith.constant dense<0xFF800000> : vector<2xf32>
    %121 = vector.multi_reduction <maximumf>, %120, %cst_30 [1] : vector<2x128xf32> to vector<2xf32>
    %122 = vector.shape_cast %121 : vector<2xf32> to vector<2x1xf32>
    %123 = vector.broadcast %122 : vector<2x1xf32> to vector<2x128xf32>
    %124 = arith.subf %120, %123 : vector<2x128xf32>
    %125 = math.exp %124 : vector<2x128xf32>
    %cst_31 = arith.constant dense<0.000000e+00> : vector<2xf32>
    %126 = vector.multi_reduction <add>, %125, %cst_31 [1] : vector<2x128xf32> to vector<2xf32>
    %127 = vector.shape_cast %126 : vector<2xf32> to vector<2x1xf32>
    %128 = tpu.reciprocal %127 {approx = true} : vector<2x1xf32> -> vector<2x1xf32>
    %129 = vector.broadcast %128 : vector<2x1xf32> to vector<2x128xf32>
    %130 = arith.mulf %125, %129 : vector<2x128xf32>
    %cst_32 = arith.constant dense<0.000000e+00> : vector<2x512xf32>
    %131 = tpu.matmul %130, %2, %cst_32 {dimension_numbers = #tpu.dot_dimension_numbers<[1], [0], [0], [1], [0, 0, 1, 1], [], []>} : vector<2x128xf32>, vector<128x512xf32>, vector<2x512xf32> -> vector<2x512xf32>
    %132 = vector.extract_strided_slice %117 {offsets = [0, 0], sizes = [2, 512], strides = [1, 1]} : vector<2x640xf32> to vector<2x512xf32>
    %133 = arith.addf %131, %132 : vector<2x512xf32>
    %134 = arith.addf %133, %7 : vector<2x512xf32>
    %135 = vector.extract_strided_slice %134 {offsets = [0, 0], sizes = [2, 384], strides = [1, 1]} : vector<2x512xf32> to vector<2x384xf32>
    %136 = arith.negf %135 : vector<2x384xf32>
    %137 = math.exp %136 : vector<2x384xf32>
    %cst_33 = arith.constant 1.000000e+00 : f32
    %138 = vector.broadcast %cst_33 : f32 to vector<2x384xf32>
    %139 = arith.addf %138, %137 : vector<2x384xf32>
    %140 = arith.divf %138, %139 : vector<2x384xf32>
    %141 = vector.extract_strided_slice %140 {offsets = [0, 0], sizes = [2, 128], strides = [1, 1]} : vector<2x384xf32> to vector<2x128xf32>
    %142 = vector.extract_strided_slice %140 {offsets = [0, 128], sizes = [2, 128], strides = [1, 1]} : vector<2x384xf32> to vector<2x128xf32>
    %143 = vector.extract_strided_slice %140 {offsets = [0, 256], sizes = [2, 128], strides = [1, 1]} : vector<2x384xf32> to vector<2x128xf32>
    %144 = vector.extract_strided_slice %134 {offsets = [0, 384], sizes = [2, 128], strides = [1, 1]} : vector<2x512xf32> to vector<2x128xf32>
    %145 = math.tanh %144 : vector<2x128xf32>
    %146 = arith.mulf %142, %113 : vector<2x128xf32>
    %147 = arith.mulf %141, %145 : vector<2x128xf32>
    %148 = arith.addf %146, %147 : vector<2x128xf32>
    %149 = math.tanh %148 : vector<2x128xf32>
    %150 = arith.mulf %143, %149 : vector<2x128xf32>
    %151 = arith.addf %150, %0 : vector<2x128xf32>
    %cst_34 = arith.constant dense<0.000000e+00> : vector<2x640xf32>
    %152 = tpu.matmul %151, %1, %cst_34 {dimension_numbers = #tpu.dot_dimension_numbers<[1], [0], [0], [1], [0, 0, 1, 1], [], []>} : vector<2x128xf32>, vector<128x640xf32>, vector<2x640xf32> -> vector<2x640xf32>
    %153 = vector.extract_strided_slice %152 {offsets = [0, 512], sizes = [2, 128], strides = [1, 1]} : vector<2x640xf32> to vector<2x128xf32>
    %cst_35 = arith.constant -1.000000e+30 : f32
    %154 = vector.broadcast %cst_35 : f32 to vector<2x128xf32>
    %155 = arith.select %10, %153, %154 : vector<2x128xi1>, vector<2x128xf32>
    %cst_36 = arith.constant dense<0xFF800000> : vector<2xf32>
    %156 = vector.multi_reduction <maximumf>, %155, %cst_36 [1] : vector<2x128xf32> to vector<2xf32>
    %157 = vector.shape_cast %156 : vector<2xf32> to vector<2x1xf32>
    %158 = vector.broadcast %157 : vector<2x1xf32> to vector<2x128xf32>
    %159 = arith.subf %155, %158 : vector<2x128xf32>
    %160 = math.exp %159 : vector<2x128xf32>
    %cst_37 = arith.constant dense<0.000000e+00> : vector<2xf32>
    %161 = vector.multi_reduction <add>, %160, %cst_37 [1] : vector<2x128xf32> to vector<2xf32>
    %162 = vector.shape_cast %161 : vector<2xf32> to vector<2x1xf32>
    %163 = tpu.reciprocal %162 {approx = true} : vector<2x1xf32> -> vector<2x1xf32>
    %164 = vector.broadcast %163 : vector<2x1xf32> to vector<2x128xf32>
    %165 = arith.mulf %160, %164 : vector<2x128xf32>
    %cst_38 = arith.constant dense<0.000000e+00> : vector<2x512xf32>
    %166 = tpu.matmul %165, %2, %cst_38 {dimension_numbers = #tpu.dot_dimension_numbers<[1], [0], [0], [1], [0, 0, 1, 1], [], []>} : vector<2x128xf32>, vector<128x512xf32>, vector<2x512xf32> -> vector<2x512xf32>
    %167 = vector.extract_strided_slice %152 {offsets = [0, 0], sizes = [2, 512], strides = [1, 1]} : vector<2x640xf32> to vector<2x512xf32>
    %168 = arith.addf %166, %167 : vector<2x512xf32>
    %169 = arith.addf %168, %7 : vector<2x512xf32>
    %170 = vector.extract_strided_slice %169 {offsets = [0, 0], sizes = [2, 384], strides = [1, 1]} : vector<2x512xf32> to vector<2x384xf32>
    %171 = arith.negf %170 : vector<2x384xf32>
    %172 = math.exp %171 : vector<2x384xf32>
    %cst_39 = arith.constant 1.000000e+00 : f32
    %173 = vector.broadcast %cst_39 : f32 to vector<2x384xf32>
    %174 = arith.addf %173, %172 : vector<2x384xf32>
    %175 = arith.divf %173, %174 : vector<2x384xf32>
    %176 = vector.extract_strided_slice %175 {offsets = [0, 0], sizes = [2, 128], strides = [1, 1]} : vector<2x384xf32> to vector<2x128xf32>
    %177 = vector.extract_strided_slice %175 {offsets = [0, 128], sizes = [2, 128], strides = [1, 1]} : vector<2x384xf32> to vector<2x128xf32>
    %178 = vector.extract_strided_slice %175 {offsets = [0, 256], sizes = [2, 128], strides = [1, 1]} : vector<2x384xf32> to vector<2x128xf32>
    %179 = vector.extract_strided_slice %169 {offsets = [0, 384], sizes = [2, 128], strides = [1, 1]} : vector<2x512xf32> to vector<2x128xf32>
    %180 = math.tanh %179 : vector<2x128xf32>
    %181 = arith.mulf %177, %148 : vector<2x128xf32>
    %182 = arith.mulf %176, %180 : vector<2x128xf32>
    %183 = arith.addf %181, %182 : vector<2x128xf32>
    %184 = math.tanh %183 : vector<2x128xf32>
    %185 = arith.mulf %178, %184 : vector<2x128xf32>
    %186 = arith.addf %185, %0 : vector<2x128xf32>
    %cst_40 = arith.constant dense<0.000000e+00> : vector<2x640xf32>
    %187 = tpu.matmul %186, %1, %cst_40 {dimension_numbers = #tpu.dot_dimension_numbers<[1], [0], [0], [1], [0, 0, 1, 1], [], []>} : vector<2x128xf32>, vector<128x640xf32>, vector<2x640xf32> -> vector<2x640xf32>
    %188 = vector.extract_strided_slice %187 {offsets = [0, 512], sizes = [2, 128], strides = [1, 1]} : vector<2x640xf32> to vector<2x128xf32>
    %cst_41 = arith.constant -1.000000e+30 : f32
    %189 = vector.broadcast %cst_41 : f32 to vector<2x128xf32>
    %190 = arith.select %10, %188, %189 : vector<2x128xi1>, vector<2x128xf32>
    %cst_42 = arith.constant dense<0xFF800000> : vector<2xf32>
    %191 = vector.multi_reduction <maximumf>, %190, %cst_42 [1] : vector<2x128xf32> to vector<2xf32>
    %192 = vector.shape_cast %191 : vector<2xf32> to vector<2x1xf32>
    %193 = vector.broadcast %192 : vector<2x1xf32> to vector<2x128xf32>
    %194 = arith.subf %190, %193 : vector<2x128xf32>
    %195 = math.exp %194 : vector<2x128xf32>
    %cst_43 = arith.constant dense<0.000000e+00> : vector<2xf32>
    %196 = vector.multi_reduction <add>, %195, %cst_43 [1] : vector<2x128xf32> to vector<2xf32>
    %197 = vector.shape_cast %196 : vector<2xf32> to vector<2x1xf32>
    %198 = tpu.reciprocal %197 {approx = true} : vector<2x1xf32> -> vector<2x1xf32>
    %199 = vector.broadcast %198 : vector<2x1xf32> to vector<2x128xf32>
    %200 = arith.mulf %195, %199 : vector<2x128xf32>
    %cst_44 = arith.constant dense<0.000000e+00> : vector<2x512xf32>
    %201 = tpu.matmul %200, %2, %cst_44 {dimension_numbers = #tpu.dot_dimension_numbers<[1], [0], [0], [1], [0, 0, 1, 1], [], []>} : vector<2x128xf32>, vector<128x512xf32>, vector<2x512xf32> -> vector<2x512xf32>
    %202 = vector.extract_strided_slice %187 {offsets = [0, 0], sizes = [2, 512], strides = [1, 1]} : vector<2x640xf32> to vector<2x512xf32>
    %203 = arith.addf %201, %202 : vector<2x512xf32>
    %204 = arith.addf %203, %7 : vector<2x512xf32>
    %205 = vector.extract_strided_slice %204 {offsets = [0, 0], sizes = [2, 384], strides = [1, 1]} : vector<2x512xf32> to vector<2x384xf32>
    %206 = arith.negf %205 : vector<2x384xf32>
    %207 = math.exp %206 : vector<2x384xf32>
    %cst_45 = arith.constant 1.000000e+00 : f32
    %208 = vector.broadcast %cst_45 : f32 to vector<2x384xf32>
    %209 = arith.addf %208, %207 : vector<2x384xf32>
    %210 = arith.divf %208, %209 : vector<2x384xf32>
    %211 = vector.extract_strided_slice %210 {offsets = [0, 0], sizes = [2, 128], strides = [1, 1]} : vector<2x384xf32> to vector<2x128xf32>
    %212 = vector.extract_strided_slice %210 {offsets = [0, 128], sizes = [2, 128], strides = [1, 1]} : vector<2x384xf32> to vector<2x128xf32>
    %213 = vector.extract_strided_slice %210 {offsets = [0, 256], sizes = [2, 128], strides = [1, 1]} : vector<2x384xf32> to vector<2x128xf32>
    %214 = vector.extract_strided_slice %204 {offsets = [0, 384], sizes = [2, 128], strides = [1, 1]} : vector<2x512xf32> to vector<2x128xf32>
    %215 = math.tanh %214 : vector<2x128xf32>
    %216 = arith.mulf %212, %183 : vector<2x128xf32>
    %217 = arith.mulf %211, %215 : vector<2x128xf32>
    %218 = arith.addf %216, %217 : vector<2x128xf32>
    %219 = math.tanh %218 : vector<2x128xf32>
    %220 = arith.mulf %213, %219 : vector<2x128xf32>
    %221 = arith.addf %220, %0 : vector<2x128xf32>
    %cst_46 = arith.constant dense<0.000000e+00> : vector<2x640xf32>
    %222 = tpu.matmul %221, %1, %cst_46 {dimension_numbers = #tpu.dot_dimension_numbers<[1], [0], [0], [1], [0, 0, 1, 1], [], []>} : vector<2x128xf32>, vector<128x640xf32>, vector<2x640xf32> -> vector<2x640xf32>
    %223 = vector.extract_strided_slice %222 {offsets = [0, 512], sizes = [2, 128], strides = [1, 1]} : vector<2x640xf32> to vector<2x128xf32>
    %cst_47 = arith.constant -1.000000e+30 : f32
    %224 = vector.broadcast %cst_47 : f32 to vector<2x128xf32>
    %225 = arith.select %10, %223, %224 : vector<2x128xi1>, vector<2x128xf32>
    %cst_48 = arith.constant dense<0xFF800000> : vector<2xf32>
    %226 = vector.multi_reduction <maximumf>, %225, %cst_48 [1] : vector<2x128xf32> to vector<2xf32>
    %227 = vector.shape_cast %226 : vector<2xf32> to vector<2x1xf32>
    %228 = vector.broadcast %227 : vector<2x1xf32> to vector<2x128xf32>
    %229 = arith.subf %225, %228 : vector<2x128xf32>
    %230 = math.exp %229 : vector<2x128xf32>
    %cst_49 = arith.constant dense<0.000000e+00> : vector<2xf32>
    %231 = vector.multi_reduction <add>, %230, %cst_49 [1] : vector<2x128xf32> to vector<2xf32>
    %232 = vector.shape_cast %231 : vector<2xf32> to vector<2x1xf32>
    %233 = tpu.reciprocal %232 {approx = true} : vector<2x1xf32> -> vector<2x1xf32>
    %234 = vector.broadcast %233 : vector<2x1xf32> to vector<2x128xf32>
    %235 = arith.mulf %230, %234 : vector<2x128xf32>
    %cst_50 = arith.constant dense<0.000000e+00> : vector<2x512xf32>
    %236 = tpu.matmul %235, %2, %cst_50 {dimension_numbers = #tpu.dot_dimension_numbers<[1], [0], [0], [1], [0, 0, 1, 1], [], []>} : vector<2x128xf32>, vector<128x512xf32>, vector<2x512xf32> -> vector<2x512xf32>
    %237 = vector.extract_strided_slice %222 {offsets = [0, 0], sizes = [2, 512], strides = [1, 1]} : vector<2x640xf32> to vector<2x512xf32>
    %238 = arith.addf %236, %237 : vector<2x512xf32>
    %239 = arith.addf %238, %7 : vector<2x512xf32>
    %240 = vector.extract_strided_slice %239 {offsets = [0, 0], sizes = [2, 384], strides = [1, 1]} : vector<2x512xf32> to vector<2x384xf32>
    %241 = arith.negf %240 : vector<2x384xf32>
    %242 = math.exp %241 : vector<2x384xf32>
    %cst_51 = arith.constant 1.000000e+00 : f32
    %243 = vector.broadcast %cst_51 : f32 to vector<2x384xf32>
    %244 = arith.addf %243, %242 : vector<2x384xf32>
    %245 = arith.divf %243, %244 : vector<2x384xf32>
    %246 = vector.extract_strided_slice %245 {offsets = [0, 0], sizes = [2, 128], strides = [1, 1]} : vector<2x384xf32> to vector<2x128xf32>
    %247 = vector.extract_strided_slice %245 {offsets = [0, 128], sizes = [2, 128], strides = [1, 1]} : vector<2x384xf32> to vector<2x128xf32>
    %248 = vector.extract_strided_slice %245 {offsets = [0, 256], sizes = [2, 128], strides = [1, 1]} : vector<2x384xf32> to vector<2x128xf32>
    %249 = vector.extract_strided_slice %239 {offsets = [0, 384], sizes = [2, 128], strides = [1, 1]} : vector<2x512xf32> to vector<2x128xf32>
    %250 = math.tanh %249 : vector<2x128xf32>
    %251 = arith.mulf %247, %218 : vector<2x128xf32>
    %252 = arith.mulf %246, %250 : vector<2x128xf32>
    %253 = arith.addf %251, %252 : vector<2x128xf32>
    %254 = math.tanh %253 : vector<2x128xf32>
    %255 = arith.mulf %248, %254 : vector<2x128xf32>
    %256 = arith.addf %255, %0 : vector<2x128xf32>
    %cst_52 = arith.constant dense<0.000000e+00> : vector<2x640xf32>
    %257 = tpu.matmul %256, %1, %cst_52 {dimension_numbers = #tpu.dot_dimension_numbers<[1], [0], [0], [1], [0, 0, 1, 1], [], []>} : vector<2x128xf32>, vector<128x640xf32>, vector<2x640xf32> -> vector<2x640xf32>
    %258 = vector.extract_strided_slice %257 {offsets = [0, 512], sizes = [2, 128], strides = [1, 1]} : vector<2x640xf32> to vector<2x128xf32>
    %cst_53 = arith.constant -1.000000e+30 : f32
    %259 = vector.broadcast %cst_53 : f32 to vector<2x128xf32>
    %260 = arith.select %10, %258, %259 : vector<2x128xi1>, vector<2x128xf32>
    %cst_54 = arith.constant dense<0xFF800000> : vector<2xf32>
    %261 = vector.multi_reduction <maximumf>, %260, %cst_54 [1] : vector<2x128xf32> to vector<2xf32>
    %262 = vector.shape_cast %261 : vector<2xf32> to vector<2x1xf32>
    %263 = vector.broadcast %262 : vector<2x1xf32> to vector<2x128xf32>
    %264 = arith.subf %260, %263 : vector<2x128xf32>
    %265 = math.exp %264 : vector<2x128xf32>
    %cst_55 = arith.constant dense<0.000000e+00> : vector<2xf32>
    %266 = vector.multi_reduction <add>, %265, %cst_55 [1] : vector<2x128xf32> to vector<2xf32>
    %267 = vector.shape_cast %266 : vector<2xf32> to vector<2x1xf32>
    %268 = tpu.reciprocal %267 {approx = true} : vector<2x1xf32> -> vector<2x1xf32>
    %269 = vector.broadcast %268 : vector<2x1xf32> to vector<2x128xf32>
    %270 = arith.mulf %265, %269 : vector<2x128xf32>
    %cst_56 = arith.constant dense<0.000000e+00> : vector<2x512xf32>
    %271 = tpu.matmul %270, %2, %cst_56 {dimension_numbers = #tpu.dot_dimension_numbers<[1], [0], [0], [1], [0, 0, 1, 1], [], []>} : vector<2x128xf32>, vector<128x512xf32>, vector<2x512xf32> -> vector<2x512xf32>
    %272 = vector.extract_strided_slice %257 {offsets = [0, 0], sizes = [2, 512], strides = [1, 1]} : vector<2x640xf32> to vector<2x512xf32>
    %273 = arith.addf %271, %272 : vector<2x512xf32>
    %274 = arith.addf %273, %7 : vector<2x512xf32>
    %275 = vector.extract_strided_slice %274 {offsets = [0, 0], sizes = [2, 384], strides = [1, 1]} : vector<2x512xf32> to vector<2x384xf32>
    %276 = arith.negf %275 : vector<2x384xf32>
    %277 = math.exp %276 : vector<2x384xf32>
    %cst_57 = arith.constant 1.000000e+00 : f32
    %278 = vector.broadcast %cst_57 : f32 to vector<2x384xf32>
    %279 = arith.addf %278, %277 : vector<2x384xf32>
    %280 = arith.divf %278, %279 : vector<2x384xf32>
    %281 = vector.extract_strided_slice %280 {offsets = [0, 0], sizes = [2, 128], strides = [1, 1]} : vector<2x384xf32> to vector<2x128xf32>
    %282 = vector.extract_strided_slice %280 {offsets = [0, 128], sizes = [2, 128], strides = [1, 1]} : vector<2x384xf32> to vector<2x128xf32>
    %283 = vector.extract_strided_slice %280 {offsets = [0, 256], sizes = [2, 128], strides = [1, 1]} : vector<2x384xf32> to vector<2x128xf32>
    %284 = vector.extract_strided_slice %274 {offsets = [0, 384], sizes = [2, 128], strides = [1, 1]} : vector<2x512xf32> to vector<2x128xf32>
    %285 = math.tanh %284 : vector<2x128xf32>
    %286 = arith.mulf %282, %253 : vector<2x128xf32>
    %287 = arith.mulf %281, %285 : vector<2x128xf32>
    %288 = arith.addf %286, %287 : vector<2x128xf32>
    %289 = math.tanh %288 : vector<2x128xf32>
    %290 = arith.mulf %283, %289 : vector<2x128xf32>
    %291 = arith.addf %290, %0 : vector<2x128xf32>
    %c0_58 = arith.constant 0 : index
    %c0_59 = arith.constant 0 : index
    %292 = vector.load %arg6[%c0_58, %c0_59] : memref<2x128xf32, #tpu.memory_space<vmem>>, vector<2x128xf32>
    tpu.vector_store %arg6[%c0_58, %c0_59], %291 {strides = array<i32>} : memref<2x128xf32, #tpu.memory_space<vmem>>, vector<2x128xf32>,
    return
  }
  func.func @transform_0(%arg0: i32) -> (i32, i32) {
    %c0_i32 = arith.constant 0 : i32
    %c0_i32_0 = arith.constant 0 : i32
    return %arg0, %c0_i32 : i32, i32
  }
  func.func @transform_1(%arg0: i32) -> (i32, i32) {
    %c0_i32 = arith.constant 0 : i32
    %c0_i32_0 = arith.constant 0 : i32
    %c0_i32_1 = arith.constant 0 : i32
    return %c0_i32, %c0_i32_0 : i32, i32
  }
  func.func @transform_2(%arg0: i32) -> (i32, i32) {
    %c0_i32 = arith.constant 0 : i32
    %c0_i32_0 = arith.constant 0 : i32
    %c0_i32_1 = arith.constant 0 : i32
    return %c0_i32, %c0_i32_0 : i32, i32
  }
  func.func @transform_3(%arg0: i32) -> (i32, i32) {
    %c0_i32 = arith.constant 0 : i32
    %c0_i32_0 = arith.constant 0 : i32
    %c0_i32_1 = arith.constant 0 : i32
    return %c0_i32, %c0_i32_0 : i32, i32
  }
  func.func @transform_4(%arg0: i32) -> (i32, i32) {
    %c0_i32 = arith.constant 0 : i32
    %c0_i32_0 = arith.constant 0 : i32
    %c0_i32_1 = arith.constant 0 : i32
    return %c0_i32, %c0_i32_0 : i32, i32
  }
  func.func @transform_5(%arg0: i32) -> (i32, i32) {
    %c0_i32 = arith.constant 0 : i32
    %c0_i32_0 = arith.constant 0 : i32
    return %arg0, %c0_i32 : i32, i32
  }
}

</mosaic_0001>

<llo_original>
// kernel: tpu_custom_call.1
$region0: #{tpu_custom_call.1}
  #allocation0 [shape = 'u32[]', space=smem, size = 0x4, offset = 0x4, fixed_abs, tag = 'smem constant byte address 0x4 - core index']
  #allocation1 [shape = 'u32[144,128]{1,0:T(1,128)}', space=vmem, size = 0x12000, scoped, tag = 'internal scratch']
  %s0 = inlined_call_operand.hbm [shape: f32[2,128], index: 0, kind: input, shape index: {}]
  %s1 = inlined_call_operand.hbm [shape: f32[128,640], index: 1, kind: input, shape index: {}]
  %s2 = inlined_call_operand.hbm [shape: f32[128,512], index: 2, kind: input, shape index: {}]
  %s3 = inlined_call_operand.hbm [shape: f32[128,512], index: 3, kind: input, shape index: {}]
  %s4 = inlined_call_operand.vmem [shape: f32[1,512], index: 4, kind: input, shape index: {}]
  %s5 = inlined_call_operand.hbm [shape: f32[2,128], index: 5, kind: output, shape index: {}]
  %s6 = sld [smem:[#allocation0]]
  $region46: #{tpu_custom_call.1} parent=0
    _
  %s8 = ssub.s32 1, %s6
  %s9 = scalar_select 0, %s8, %s6
  $region1: #{tpu_custom_call.1} parent=0
    #allocation2 [shape = 'u8[1024]{0}', space=vmem, size = 0x400, scoped, tag = 'input window, operand 0, single buffered']
    #allocation3 [shape = 's32[1]{0}', space=sflag, size = 0x4, scoped, tag = 'scoped memory for tpu_custom_call.1']
    #allocation4 [shape = 's32[1]{0}', space=sflag, size = 0x4, scoped, tag = 'scoped memory for tpu_custom_call.1']
    #allocation5 [shape = 'u8[327680]{0}', space=vmem, size = 0x50000, scoped, tag = 'input window, operand 1, single buffered']
    #allocation6 [shape = 's32[1]{0}', space=sflag, size = 0x4, scoped, tag = 'scoped memory for tpu_custom_call.1']
    #allocation7 [shape = 'u8[262144]{0}', space=vmem, size = 0x40000, scoped, tag = 'input window, operand 2, single buffered']
    #allocation8 [shape = 'u8[262144]{0}', space=vmem, size = 0x40000, scoped, tag = 'input window, operand 3, single buffered']
    #allocation9 [shape = 's32[1]{0}', space=sflag, size = 0x4, scoped, tag = 'scoped memory for tpu_custom_call.1']
    #allocation10 [shape = 'u8[1024]{0}', space=vmem, size = 0x400, scoped, tag = 'output window, operand 0, single buffered']
    %10 = vsyncpa [#allocation3], 0
    %11 = vsyncpa [#allocation6], 0
    %12 = vsyncpa [#allocation9], 0
    %13 = vsyncpa [#allocation4], 0
    // Predicated region
    $region2: #{tpu_custom_call.1} parent=1 // pred_check
      _
    $region3: #{tpu_custom_call.1} parent=1 // pred_check_branch
      %15 = sbr.rel (0) target = $region5
    $region4: #{tpu_custom_call.1} parent=1 // pred_region
      %s17 = ssub.s32 32, 32
      %18 = vsyncadd [#allocation3], %s17
      %s20 = sshll.u32 [#allocation2], 4
      %s21 = int_to_ptr.vmem [resolvable:$true] %s20
      %23 = dma.hbm_to_vmem [thread:$0]  %s0, 32, %s21, [#allocation3]
    $region5: #{tpu_custom_call.1} parent=1 // pred_fallthru
      _
    // Predicated region
    $region6: #{tpu_custom_call.1} parent=1 // pred_check
      _
    $region7: #{tpu_custom_call.1} parent=1 // pred_check_branch
      %25 = sbr.rel (0) target = $region9
    $region8: #{tpu_custom_call.1} parent=1 // pred_region
      %s27 = ssub.s32 10240, 10240
      %28 = vsyncadd [#allocation6], %s27
      %s29 = sshll.u32 [#allocation5], 4
      %s30 = int_to_ptr.vmem [resolvable:$true] %s29
      %35 = dma.hbm_to_vmem [thread:$0]  %s1, 10240, %s30, [#allocation6], 640, 640, 40
    $region9: #{tpu_custom_call.1} parent=1 // pred_fallthru
      _
    // Predicated region
    $region10: #{tpu_custom_call.1} parent=1 // pred_check
      _
    $region11: #{tpu_custom_call.1} parent=1 // pred_check_branch
      %37 = sbr.rel (0) target = $region13
    $region12: #{tpu_custom_call.1} parent=1 // pred_region
      %s39 = ssub.s32 8192, 8192
      %40 = vsyncadd [#allocation6], %s39
      %s41 = sshll.u32 [#allocation7], 4
      %s42 = int_to_ptr.vmem [resolvable:$true] %s41
      %47 = dma.hbm_to_vmem [thread:$0]  %s2, 8192, %s42, [#allocation6], 512, 512, 32
    $region13: #{tpu_custom_call.1} parent=1 // pred_fallthru
      _
    // Predicated region
    $region14: #{tpu_custom_call.1} parent=1 // pred_check
      _
    $region15: #{tpu_custom_call.1} parent=1 // pred_check_branch
      %49 = sbr.rel (0) target = $region17
    $region16: #{tpu_custom_call.1} parent=1 // pred_region
      %s51 = ssub.s32 8192, 8192
      %52 = vsyncadd [#allocation9], %s51
      %s53 = sshll.u32 [#allocation8], 4
      %s54 = int_to_ptr.vmem [resolvable:$true] %s53
      %59 = dma.hbm_to_vmem [thread:$0]  %s3, 8192, %s54, [#allocation9], 512, 512, 32
    $region17: #{tpu_custom_call.1} parent=1 // pred_fallthru
      _
    // Predicated region
    $region18: #{tpu_custom_call.1} parent=1 // pred_check
      _
    $region19: #{tpu_custom_call.1} parent=1 // pred_check_branch
      %61 = sbr.rel (0) target = $region21
    $region20: #{tpu_custom_call.1} parent=1 // pred_region
      _
    $region21: #{tpu_custom_call.1} parent=1 // pred_fallthru
      _
    // Predicated region
    $region22: #{tpu_custom_call.1} parent=1 // pred_check
      _
    $region23: #{tpu_custom_call.1} parent=1 // pred_check_branch
      %63 = sbr.rel (0) target = $region25
    $region24: #{tpu_custom_call.1} parent=1 // pred_region
      %64 = dma.done [#allocation3], 32
    $region25: #{tpu_custom_call.1} parent=1 // pred_fallthru
      _
    // Predicated region
    $region26: #{tpu_custom_call.1} parent=1 // pred_check
      _
    $region27: #{tpu_custom_call.1} parent=1 // pred_check_branch
      %66 = sbr.rel (0) target = $region29
    $region28: #{tpu_custom_call.1} parent=1 // pred_region
      %67 = dma.done [#allocation6], 10240
    $region29: #{tpu_custom_call.1} parent=1 // pred_fallthru
      _
    // Predicated region
    $region30: #{tpu_custom_call.1} parent=1 // pred_check
      _
    $region31: #{tpu_custom_call.1} parent=1 // pred_check_branch
      %69 = sbr.rel (0) target = $region33
    $region32: #{tpu_custom_call.1} parent=1 // pred_region
      %70 = dma.done [#allocation6], 8192
    $region33: #{tpu_custom_call.1} parent=1 // pred_fallthru
      _
    // Predicated region
    $region34: #{tpu_custom_call.1} parent=1 // pred_check
      _
    $region35: #{tpu_custom_call.1} parent=1 // pred_check_branch
      %72 = sbr.rel (0) target = $region37
    $region36: #{tpu_custom_call.1} parent=1 // pred_region
      %73 = dma.done [#allocation9], 8192
    $region37: #{tpu_custom_call.1} parent=1 // pred_fallthru
      _
    %v74 = vld [vmem:[#allocation2] sm:$0x3]
    %v75 = vld [vmem:[#allocation5] sm:$0xff]
    %v76 = vld [vmem:[#allocation5 + $0x8] sm:$0xff]
    %v77 = vld [vmem:[#allocation5 + $0x10] sm:$0xff]
    %v78 = vld [vmem:[#allocation5 + $0x18] sm:$0xff]
    %v79 = vld [vmem:[#allocation5 + $0x20] sm:$0xff]
    %v80 = vld [vmem:[#allocation5 + $0x28] sm:$0xff]
    %v81 = vld [vmem:[#allocation5 + $0x30] sm:$0xff]
    %v82 = vld [vmem:[#allocation5 + $0x38] sm:$0xff]
    %v83 = vld [vmem:[#allocation5 + $0x40] sm:$0xff]
    %v84 = vld [vmem:[#allocation5 + $0x48] sm:$0xff]
    %v85 = vld [vmem:[#allocation5 + $0x50] sm:$0xff]
    %v86 = vld [vmem:[#allocation5 + $0x58] sm:$0xff]
    %v87 = vld [vmem:[#allocation5 + $0x60] sm:$0xff]
    %v88 = vld [vmem:[#allocation5 + $0x68] sm:$0xff]
    %v89 = vld [vmem:[#allocation5 + $0x70] sm:$0xff]
    %v90 = vld [vmem:[#allocation5 + $0x78] sm:$0xff]
    %v91 = vld [vmem:[#allocation5 + $0x80] sm:$0xff]
    %v92 = vld [vmem:[#allocation5 + $0x88] sm:$0xff]
    %v93 = vld [vmem:[#allocation5 + $0x90] sm:$0xff]
    %v94 = vld [vmem:[#allocation5 + $0x98] sm:$0xff]
    %v95 = vld [vmem:[#allocation5 + $0xa0] sm:$0xff]
    %v96 = vld [vmem:[#allocation5 + $0xa8] sm:$0xff]
    %v97 = vld [vmem:[#allocation5 + $0xb0] sm:$0xff]
    %v98 = vld [vmem:[#allocation5 + $0xb8] sm:$0xff]
    %v99 = vld [vmem:[#allocation5 + $0xc0] sm:$0xff]
    %v100 = vld [vmem:[#allocation5 + $0xc8] sm:$0xff]
    %v101 = vld [vmem:[#allocation5 + $0xd0] sm:$0xff]
    %v102 = vld [vmem:[#allocation5 + $0xd8] sm:$0xff]
    %v103 = vld [vmem:[#allocation5 + $0xe0] sm:$0xff]
    %v104 = vld [vmem:[#allocation5 + $0xe8] sm:$0xff]
    %v105 = vld [vmem:[#allocation5 + $0xf0] sm:$0xff]
    %v106 = vld [vmem:[#allocation5 + $0xf8] sm:$0xff]
    %v107 = vld [vmem:[#allocation5 + $0x100] sm:$0xff]
    %v108 = vld [vmem:[#allocation5 + $0x108] sm:$0xff]
    %v109 = vld [vmem:[#allocation5 + $0x110] sm:$0xff]
    %v110 = vld [vmem:[#allocation5 + $0x118] sm:$0xff]
    %v111 = vld [vmem:[#allocation5 + $0x120] sm:$0xff]
    %v112 = vld [vmem:[#allocation5 + $0x128] sm:$0xff]
    %v113 = vld [vmem:[#allocation5 + $0x130] sm:$0xff]
    %v114 = vld [vmem:[#allocation5 + $0x138] sm:$0xff]
    %v115 = vld [vmem:[#allocation5 + $0x140] sm:$0xff]
    %v116 = vld [vmem:[#allocation5 + $0x148] sm:$0xff]
    %v117 = vld [vmem:[#allocation5 + $0x150] sm:$0xff]
    %v118 = vld [vmem:[#allocation5 + $0x158] sm:$0xff]
    %v119 = vld [vmem:[#allocation5 + $0x160] sm:$0xff]
    %v120 = vld [vmem:[#allocation5 + $0x168] sm:$0xff]
    %v121 = vld [vmem:[#allocation5 + $0x170] sm:$0xff]
    %v122 = vld [vmem:[#allocation5 + $0x178] sm:$0xff]
    %v123 = vld [vmem:[#allocation5 + $0x180] sm:$0xff]
    %v124 = vld [vmem:[#allocation5 + $0x188] sm:$0xff]
    %v125 = vld [vmem:[#allocation5 + $0x190] sm:$0xff]
    %v126 = vld [vmem:[#allocation5 + $0x198] sm:$0xff]
    %v127 = vld [vmem:[#allocation5 + $0x1a0] sm:$0xff]
    %v128 = vld [vmem:[#allocation5 + $0x1a8] sm:$0xff]
    %v129 = vld [vmem:[#allocation5 + $0x1b0] sm:$0xff]
    %v130 = vld [vmem:[#allocation5 + $0x1b8] sm:$0xff]
    %v131 = vld [vmem:[#allocation5 + $0x1c0] sm:$0xff]
    %v132 = vld [vmem:[#allocation5 + $0x1c8] sm:$0xff]
    %v133 = vld [vmem:[#allocation5 + $0x1d0] sm:$0xff]
    %v134 = vld [vmem:[#allocation5 + $0x1d8] sm:$0xff]
    %v135 = vld [vmem:[#allocation5 + $0x1e0] sm:$0xff]
    %v136 = vld [vmem:[#allocation5 + $0x1e8] sm:$0xff]
    %v137 = vld [vmem:[#allocation5 + $0x1f0] sm:$0xff]
    %v138 = vld [vmem:[#allocation5 + $0x1f8] sm:$0xff]
    %v139 = vld [vmem:[#allocation5 + $0x200] sm:$0xff]
    %v140 = vld [vmem:[#allocation5 + $0x208] sm:$0xff]
    %v141 = vld [vmem:[#allocation5 + $0x210] sm:$0xff]
    %v142 = vld [vmem:[#allocation5 + $0x218] sm:$0xff]
    %v143 = vld [vmem:[#allocation5 + $0x220] sm:$0xff]
    %v144 = vld [vmem:[#allocation5 + $0x228] sm:$0xff]
    %v145 = vld [vmem:[#allocation5 + $0x230] sm:$0xff]
    %v146 = vld [vmem:[#allocation5 + $0x238] sm:$0xff]
    %v147 = vld [vmem:[#allocation5 + $0x240] sm:$0xff]
    %v148 = vld [vmem:[#allocation5 + $0x248] sm:$0xff]
    %v149 = vld [vmem:[#allocation5 + $0x250] sm:$0xff]
    %v150 = vld [vmem:[#allocation5 + $0x258] sm:$0xff]
    %v151 = vld [vmem:[#allocation5 + $0x260] sm:$0xff]
    %v152 = vld [vmem:[#allocation5 + $0x268] sm:$0xff]
    %v153 = vld [vmem:[#allocation5 + $0x270] sm:$0xff]
    %v154 = vld [vmem:[#allocation5 + $0x278] sm:$0xff]
    %v155 = vld [vmem:[#allocation7] sm:$0xff]
    %v156 = vld [vmem:[#allocation7 + $0x8] sm:$0xff]
    %v157 = vld [vmem:[#allocation7 + $0x10] sm:$0xff]
    %v158 = vld [vmem:[#allocation7 + $0x18] sm:$0xff]
    %v159 = vld [vmem:[#allocation7 + $0x20] sm:$0xff]
    %v160 = vld [vmem:[#allocation7 + $0x28] sm:$0xff]
    %v161 = vld [vmem:[#allocation7 + $0x30] sm:$0xff]
    %v162 = vld [vmem:[#allocation7 + $0x38] sm:$0xff]
    %v163 = vld [vmem:[#allocation7 + $0x40] sm:$0xff]
    %v164 = vld [vmem:[#allocation7 + $0x48] sm:$0xff]
    %v165 = vld [vmem:[#allocation7 + $0x50] sm:$0xff]
    %v166 = vld [vmem:[#allocation7 + $0x58] sm:$0xff]
    %v167 = vld [vmem:[#allocation7 + $0x60] sm:$0xff]
    %v168 = vld [vmem:[#allocation7 + $0x68] sm:$0xff]
    %v169 = vld [vmem:[#allocation7 + $0x70] sm:$0xff]
    %v170 = vld [vmem:[#allocation7 + $0x78] sm:$0xff]
    %v171 = vld [vmem:[#allocation7 + $0x80] sm:$0xff]
    %v172 = vld [vmem:[#allocation7 + $0x88] sm:$0xff]
    %v173 = vld [vmem:[#allocation7 + $0x90] sm:$0xff]
    %v174 = vld [vmem:[#allocation7 + $0x98] sm:$0xff]
    %v175 = vld [vmem:[#allocation7 + $0xa0] sm:$0xff]
    %v176 = vld [vmem:[#allocation7 + $0xa8] sm:$0xff]
    %v177 = vld [vmem:[#allocation7 + $0xb0] sm:$0xff]
    %v178 = vld [vmem:[#allocation7 + $0xb8] sm:$0xff]
    %v179 = vld [vmem:[#allocation7 + $0xc0] sm:$0xff]
    %v180 = vld [vmem:[#allocation7 + $0xc8] sm:$0xff]
    %v181 = vld [vmem:[#allocation7 + $0xd0] sm:$0xff]
    %v182 = vld [vmem:[#allocation7 + $0xd8] sm:$0xff]
    %v183 = vld [vmem:[#allocation7 + $0xe0] sm:$0xff]
    %v184 = vld [vmem:[#allocation7 + $0xe8] sm:$0xff]
    %v185 = vld [vmem:[#allocation7 + $0xf0] sm:$0xff]
    %v186 = vld [vmem:[#allocation7 + $0xf8] sm:$0xff]
    %v187 = vld [vmem:[#allocation7 + $0x100] sm:$0xff]
    %v188 = vld [vmem:[#allocation7 + $0x108] sm:$0xff]
    %v189 = vld [vmem:[#allocation7 + $0x110] sm:$0xff]
    %v190 = vld [vmem:[#allocation7 + $0x118] sm:$0xff]
    %v191 = vld [vmem:[#allocation7 + $0x120] sm:$0xff]
    %v192 = vld [vmem:[#allocation7 + $0x128] sm:$0xff]
    %v193 = vld [vmem:[#allocation7 + $0x130] sm:$0xff]
    %v194 = vld [vmem:[#allocation7 + $0x138] sm:$0xff]
    %v195 = vld [vmem:[#allocation7 + $0x140] sm:$0xff]
    %v196 = vld [vmem:[#allocation7 + $0x148] sm:$0xff]
    %v197 = vld [vmem:[#allocation7 + $0x150] sm:$0xff]
    %v198 = vld [vmem:[#allocation7 + $0x158] sm:$0xff]
    %v199 = vld [vmem:[#allocation7 + $0x160] sm:$0xff]
    %v200 = vld [vmem:[#allocation7 + $0x168] sm:$0xff]
    %v201 = vld [vmem:[#allocation7 + $0x170] sm:$0xff]
    %v202 = vld [vmem:[#allocation7 + $0x178] sm:$0xff]
    %v203 = vld [vmem:[#allocation7 + $0x180] sm:$0xff]
    %v204 = vld [vmem:[#allocation7 + $0x188] sm:$0xff]
    %v205 = vld [vmem:[#allocation7 + $0x190] sm:$0xff]
    %v206 = vld [vmem:[#allocation7 + $0x198] sm:$0xff]
    %v207 = vld [vmem:[#allocation7 + $0x1a0] sm:$0xff]
    %v208 = vld [vmem:[#allocation7 + $0x1a8] sm:$0xff]
    %v209 = vld [vmem:[#allocation7 + $0x1b0] sm:$0xff]
    %v210 = vld [vmem:[#allocation7 + $0x1b8] sm:$0xff]
    %v211 = vld [vmem:[#allocation7 + $0x1c0] sm:$0xff]
    %v212 = vld [vmem:[#allocation7 + $0x1c8] sm:$0xff]
    %v213 = vld [vmem:[#allocation7 + $0x1d0] sm:$0xff]
    %v214 = vld [vmem:[#allocation7 + $0x1d8] sm:$0xff]
    %v215 = vld [vmem:[#allocation7 + $0x1e0] sm:$0xff]
    %v216 = vld [vmem:[#allocation7 + $0x1e8] sm:$0xff]
    %v217 = vld [vmem:[#allocation7 + $0x1f0] sm:$0xff]
    %v218 = vld [vmem:[#allocation7 + $0x1f8] sm:$0xff]
    %v219 = vld [vmem:[#allocation8] sm:$0xff]
    %v220 = vld [vmem:[#allocation8 + $0x8] sm:$0xff]
    %v221 = vld [vmem:[#allocation8 + $0x10] sm:$0xff]
    %v222 = vld [vmem:[#allocation8 + $0x18] sm:$0xff]
    %v223 = vld [vmem:[#allocation8 + $0x20] sm:$0xff]
    %v224 = vld [vmem:[#allocation8 + $0x28] sm:$0xff]
    %v225 = vld [vmem:[#allocation8 + $0x30] sm:$0xff]
    %v226 = vld [vmem:[#allocation8 + $0x38] sm:$0xff]
    %v227 = vld [vmem:[#allocation8 + $0x40] sm:$0xff]
    %v228 = vld [vmem:[#allocation8 + $0x48] sm:$0xff]
    %v229 = vld [vmem:[#allocation8 + $0x50] sm:$0xff]
    %v230 = vld [vmem:[#allocation8 + $0x58] sm:$0xff]
    %v231 = vld [vmem:[#allocation8 + $0x60] sm:$0xff]
    %v232 = vld [vmem:[#allocation8 + $0x68] sm:$0xff]
    %v233 = vld [vmem:[#allocation8 + $0x70] sm:$0xff]
    %v234 = vld [vmem:[#allocation8 + $0x78] sm:$0xff]
    %v235 = vld [vmem:[#allocation8 + $0x80] sm:$0xff]
    %v236 = vld [vmem:[#allocation8 + $0x88] sm:$0xff]
    %v237 = vld [vmem:[#allocation8 + $0x90] sm:$0xff]
    %v238 = vld [vmem:[#allocation8 + $0x98] sm:$0xff]
    %v239 = vld [vmem:[#allocation8 + $0xa0] sm:$0xff]
    %v240 = vld [vmem:[#allocation8 + $0xa8] sm:$0xff]
    %v241 = vld [vmem:[#allocation8 + $0xb0] sm:$0xff]
    %v242 = vld [vmem:[#allocation8 + $0xb8] sm:$0xff]
    %v243 = vld [vmem:[#allocation8 + $0xc0] sm:$0xff]
    %v244 = vld [vmem:[#allocation8 + $0xc8] sm:$0xff]
    %v245 = vld [vmem:[#allocation8 + $0xd0] sm:$0xff]
    %v246 = vld [vmem:[#allocation8 + $0xd8] sm:$0xff]
    %v247 = vld [vmem:[#allocation8 + $0xe0] sm:$0xff]
    %v248 = vld [vmem:[#allocation8 + $0xe8] sm:$0xff]
    %v249 = vld [vmem:[#allocation8 + $0xf0] sm:$0xff]
    %v250 = vld [vmem:[#allocation8 + $0xf8] sm:$0xff]
    %v251 = vld [vmem:[#allocation8 + $0x100] sm:$0xff]
    %v252 = vld [vmem:[#allocation8 + $0x108] sm:$0xff]
    %v253 = vld [vmem:[#allocation8 + $0x110] sm:$0xff]
    %v254 = vld [vmem:[#allocation8 + $0x118] sm:$0xff]
    %v255 = vld [vmem:[#allocation8 + $0x120] sm:$0xff]
    %v256 = vld [vmem:[#allocation8 + $0x128] sm:$0xff]
    %v257 = vld [vmem:[#allocation8 + $0x130] sm:$0xff]
    %v258 = vld [vmem:[#allocation8 + $0x138] sm:$0xff]
    %v259 = vld [vmem:[#allocation8 + $0x140] sm:$0xff]
    %v260 = vld [vmem:[#allocation8 + $0x148] sm:$0xff]
    %v261 = vld [vmem:[#allocation8 + $0x150] sm:$0xff]
    %v262 = vld [vmem:[#allocation8 + $0x158] sm:$0xff]
    %v263 = vld [vmem:[#allocation8 + $0x160] sm:$0xff]
    %v264 = vld [vmem:[#allocation8 + $0x168] sm:$0xff]
    %v265 = vld [vmem:[#allocation8 + $0x170] sm:$0xff]
    %v266 = vld [vmem:[#allocation8 + $0x178] sm:$0xff]
    %v267 = vld [vmem:[#allocation8 + $0x180] sm:$0xff]
    %v268 = vld [vmem:[#allocation8 + $0x188] sm:$0xff]
    %v269 = vld [vmem:[#allocation8 + $0x190] sm:$0xff]
    %v270 = vld [vmem:[#allocation8 + $0x198] sm:$0xff]
    %v271 = vld [vmem:[#allocation8 + $0x1a0] sm:$0xff]
    %v272 = vld [vmem:[#allocation8 + $0x1a8] sm:$0xff]
    %v273 = vld [vmem:[#allocation8 + $0x1b0] sm:$0xff]
    %v274 = vld [vmem:[#allocation8 + $0x1b8] sm:$0xff]
    %v275 = vld [vmem:[#allocation8 + $0x1c0] sm:$0xff]
    %v276 = vld [vmem:[#allocation8 + $0x1c8] sm:$0xff]
    %v277 = vld [vmem:[#allocation8 + $0x1d0] sm:$0xff]
    %v278 = vld [vmem:[#allocation8 + $0x1d8] sm:$0xff]
    %v279 = vld [vmem:[#allocation8 + $0x1e0] sm:$0xff]
    %v280 = vld [vmem:[#allocation8 + $0x1e8] sm:$0xff]
    %v281 = vld [vmem:[#allocation8 + $0x1f0] sm:$0xff]
    %v282 = vld [vmem:[#allocation8 + $0x1f8] sm:$0xff]
    %v283 = vld [vmem:[%s4] sm:$0xf]
    %v285 = vlaneseq
    %v286 = vshrl.u32 %v285, 7
    %v287 = vsub.s32 0, %v286
    %v288 = vrot.slane %v283, %v287
    %v289 = vlaneseq
    %v290 = vshrl.u32 %v289, 7
    %v291 = vsub.s32 1, %v290
    %v292 = vrot.slane %v283, %v291
    %v293 = vlaneseq
    %v294 = vshrl.u32 %v293, 7
    %v295 = vsub.s32 2, %v294
    %v296 = vrot.slane %v283, %v295
    %v297 = vlaneseq
    %v298 = vshrl.u32 %v297, 7
    %v299 = vsub.s32 3, %v298
    %v300 = vrot.slane %v283, %v299
    %305 = vmatprep.subr.mxu0 %v280
    %306 = vmatpush1.msra.mxu0 %v279
    %307 = vmatprep.subr.mxu0 %v276
    %308 = vmatpush1.msra.mxu0 %v275
    %309 = vmatprep.subr.mxu0 %v272
    %310 = vmatpush1.msra.mxu0 %v271
    %311 = vmatprep.subr.mxu0 %v268
    %312 = vmatpush1.msra.mxu0 %v267
    %313 = vmatprep.subr.mxu0 %v264
    %314 = vmatpush1.msra.mxu0 %v263
    %315 = vmatprep.subr.mxu0 %v260
    %316 = vmatpush1.msra.mxu0 %v259
    %317 = vmatprep.subr.mxu0 %v256
    %318 = vmatpush1.msra.mxu0 %v255
    %319 = vmatprep.subr.mxu0 %v252
    %320 = vmatpush1.msra.mxu0 %v251
    %321 = vmatprep.subr.mxu0 %v248
    %322 = vmatpush1.msra.mxu0 %v247
    %323 = vmatprep.subr.mxu0 %v244
    %324 = vmatpush1.msra.mxu0 %v243
    %325 = vmatprep.subr.mxu0 %v240
    %326 = vmatpush1.msra.mxu0 %v239
    %327 = vmatprep.subr.mxu0 %v236
    %328 = vmatpush1.msra.mxu0 %v235
    %329 = vmatprep.subr.mxu0 %v232
    %330 = vmatpush1.msra.mxu0 %v231
    %331 = vmatprep.subr.mxu0 %v228
    %332 = vmatpush1.msra.mxu0 %v227
    %333 = vmatprep.subr.mxu0 %v224
    %334 = vmatpush1.msra.mxu0 %v223
    %335 = vmatprep.subr.mxu0 %v220
    %336 = vmatpush1.msra.mxu0 %v219
    %337 = vmatprep.subr.mxu0 0.0
    %338 = vmatpush2.msra.mxu0 0.0
    %339 = vmatprep.subr.mxu0 0.0
    %340 = vmatpush2.msra.mxu0 0.0
    %341 = vmatprep.subr.mxu0 0.0
    %342 = vmatpush2.msra.mxu0 0.0
    %343 = vmatprep.subr.mxu0 0.0
    %344 = vmatpush2.msra.mxu0 0.0
    %345 = vmatprep.subr.mxu0 0.0
    %346 = vmatpush2.msra.mxu0 0.0
    %347 = vmatprep.subr.mxu0 0.0
    %348 = vmatpush2.msra.mxu0 0.0
    %349 = vmatprep.subr.mxu0 0.0
    %350 = vmatpush2.msra.mxu0 0.0
    %351 = vmatprep.subr.mxu0 0.0
    %352 = vmatpush2.msra.mxu0 0.0
    %353 = vmatprep.subr.mxu0 0.0
    %354 = vmatpush2.msra.mxu0 0.0
    %355 = vmatprep.subr.mxu0 0.0
    %356 = vmatpush2.msra.mxu0 0.0
    %357 = vmatprep.subr.mxu0 0.0
    %358 = vmatpush2.msra.mxu0 0.0
    %359 = vmatprep.subr.mxu0 0.0
    %360 = vmatpush2.msra.mxu0 0.0
    %361 = vmatprep.subr.mxu0 0.0
    %362 = vmatpush2.msra.mxu0 0.0
    %363 = vmatprep.subr.mxu0 0.0
    %364 = vmatpush2.msra.mxu0 0.0
    %365 = vmatprep.subr.mxu0 0.0
    %366 = vmatpush2.msra.mxu0 0.0
    %367 = vmatprep.subr.mxu0 0.0
    %368 = vmatpush2.msra.mxu0 0.0
    %369 = vmatprep.mubr.f32.mxu0 0.0
    %370 = vmatmul.mubr.f32.gmra.mxu0 %v74
    %v371 = vpop.f32.mrf.mxu0
    %v372 = vadd.f32 %v288, %v371
    %v373 = vpop.f32.mrf.mxu0
    %v374 = vadd.f32 %v292, %v373
    %375 = vdwg.mxu0
    %376 = vmatprep.subr.mxu0 %v282
    %377 = vmatpush1.msra.mxu0 %v281
    %378 = vmatprep.subr.mxu0 %v278
    %379 = vmatpush1.msra.mxu0 %v277
    %380 = vmatprep.subr.mxu0 %v274
    %381 = vmatpush1.msra.mxu0 %v273
    %382 = vmatprep.subr.mxu0 %v270
    %383 = vmatpush1.msra.mxu0 %v269
    %384 = vmatprep.subr.mxu0 %v266
    %385 = vmatpush1.msra.mxu0 %v265
    %386 = vmatprep.subr.mxu0 %v262
    %387 = vmatpush1.msra.mxu0 %v261
    %388 = vmatprep.subr.mxu0 %v258
    %389 = vmatpush1.msra.mxu0 %v257
    %390 = vmatprep.subr.mxu0 %v254
    %391 = vmatpush1.msra.mxu0 %v253
    %392 = vmatprep.subr.mxu0 %v250
    %393 = vmatpush1.msra.mxu0 %v249
    %394 = vmatprep.subr.mxu0 %v246
    %395 = vmatpush1.msra.mxu0 %v245
    %396 = vmatprep.subr.mxu0 %v242
    %397 = vmatpush1.msra.mxu0 %v241
    %398 = vmatprep.subr.mxu0 %v238
    %399 = vmatpush1.msra.mxu0 %v237
    %400 = vmatprep.subr.mxu0 %v234
    %401 = vmatpush1.msra.mxu0 %v233
    %402 = vmatprep.subr.mxu0 %v230
    %403 = vmatpush1.msra.mxu0 %v229
    %404 = vmatprep.subr.mxu0 %v226
    %405 = vmatpush1.msra.mxu0 %v225
    %406 = vmatprep.subr.mxu0 %v222
    %407 = vmatpush1.msra.mxu0 %v221
    %408 = vmatprep.subr.mxu0 0.0
    %409 = vmatpush2.msra.mxu0 0.0
    %410 = vmatprep.subr.mxu0 0.0
    %411 = vmatpush2.msra.mxu0 0.0
    %412 = vmatprep.subr.mxu0 0.0
    %413 = vmatpush2.msra.mxu0 0.0
    %414 = vmatprep.subr.mxu0 0.0
    %415 = vmatpush2.msra.mxu0 0.0
    %416 = vmatprep.subr.mxu0 0.0
    %417 = vmatpush2.msra.mxu0 0.0
    %418 = vmatprep.subr.mxu0 0.0
    %419 = vmatpush2.msra.mxu0 0.0
    %420 = vmatprep.subr.mxu0 0.0
    %421 = vmatpush2.msra.mxu0 0.0
    %422 = vmatprep.subr.mxu0 0.0
    %423 = vmatpush2.msra.mxu0 0.0
    %424 = vmatprep.subr.mxu0 0.0
    %425 = vmatpush2.msra.mxu0 0.0
    %426 = vmatprep.subr.mxu0 0.0
    %427 = vmatpush2.msra.mxu0 0.0
    %428 = vmatprep.subr.mxu0 0.0
    %429 = vmatpush2.msra.mxu0 0.0
    %430 = vmatprep.subr.mxu0 0.0
    %431 = vmatpush2.msra.mxu0 0.0
    %432 = vmatprep.subr.mxu0 0.0
    %433 = vmatpush2.msra.mxu0 0.0
    %434 = vmatprep.subr.mxu0 0.0
    %435 = vmatpush2.msra.mxu0 0.0
    %436 = vmatprep.subr.mxu0 0.0
    %437 = vmatpush2.msra.mxu0 0.0
    %438 = vmatprep.subr.mxu0 0.0
    %439 = vmatpush2.msra.mxu0 0.0
    %440 = vmatprep.mubr.f32.mxu0 0.0
    %441 = vmatmul.mubr.f32.gmra.mxu0 %v74
    %v442 = vpop.f32.mrf.mxu0
    %v443 = vadd.f32 %v296, %v442
    %v444 = vpop.f32.mrf.mxu0
    %v445 = vadd.f32 %v300, %v444
    %446 = vdwg.mxu0
    %v447 = vlaneseq
    %v448 = vand.u32 %v447, 127
    %vm449 = vcmp.lt.s32.totalorder %v448, 8
    %450 = vmatprep.subr.mxu0 %v151
    %451 = vmatpush1.msra.mxu0 %v150
    %452 = vmatprep.subr.mxu0 %v146
    %453 = vmatpush1.msra.mxu0 %v145
    %454 = vmatprep.subr.mxu0 %v141
    %455 = vmatpush1.msra.mxu0 %v140
    %456 = vmatprep.subr.mxu0 %v136
    %457 = vmatpush1.msra.mxu0 %v135
    %458 = vmatprep.subr.mxu0 %v131
    %459 = vmatpush1.msra.mxu0 %v130
    %460 = vmatprep.subr.mxu0 %v126
    %461 = vmatpush1.msra.mxu0 %v125
    %462 = vmatprep.subr.mxu0 %v121
    %463 = vmatpush1.msra.mxu0 %v120
    %464 = vmatprep.subr.mxu0 %v116
    %465 = vmatpush1.msra.mxu0 %v115
    %466 = vmatprep.subr.mxu0 %v111
    %467 = vmatpush1.msra.mxu0 %v110
    %468 = vmatprep.subr.mxu0 %v106
    %469 = vmatpush1.msra.mxu0 %v105
    %470 = vmatprep.subr.mxu0 %v101
    %471 = vmatpush1.msra.mxu0 %v100
    %472 = vmatprep.subr.mxu0 %v96
    %473 = vmatpush1.msra.mxu0 %v95
    %474 = vmatprep.subr.mxu0 %v91
    %475 = vmatpush1.msra.mxu0 %v90
    %476 = vmatprep.subr.mxu0 %v86
    %477 = vmatpush1.msra.mxu0 %v85
    %478 = vmatprep.subr.mxu0 %v81
    %479 = vmatpush1.msra.mxu0 %v80
    %480 = vmatprep.subr.mxu0 %v76
    %481 = vmatpush1.msra.mxu0 %v75
    %482 = vmatprep.subr.mxu0 0.0
    %483 = vmatpush2.msra.mxu0 0.0
    %484 = vmatprep.subr.mxu0 0.0
    %485 = vmatpush2.msra.mxu0 0.0
    %486 = vmatprep.subr.mxu0 0.0
    %487 = vmatpush2.msra.mxu0 0.0
    %488 = vmatprep.subr.mxu0 0.0
    %489 = vmatpush2.msra.mxu0 0.0
    %490 = vmatprep.subr.mxu0 0.0
    %491 = vmatpush2.msra.mxu0 0.0
    %492 = vmatprep.subr.mxu0 0.0
    %493 = vmatpush2.msra.mxu0 0.0
    %494 = vmatprep.subr.mxu0 0.0
    %495 = vmatpush2.msra.mxu0 0.0
    %496 = vmatprep.subr.mxu0 0.0
    %497 = vmatpush2.msra.mxu0 0.0
    %498 = vmatprep.subr.mxu0 0.0
    %499 = vmatpush2.msra.mxu0 0.0
    %500 = vmatprep.subr.mxu0 0.0
    %501 = vmatpush2.msra.mxu0 0.0
    %502 = vmatprep.subr.mxu0 0.0
    %503 = vmatpush2.msra.mxu0 0.0
    %504 = vmatprep.subr.mxu0 0.0
    %505 = vmatpush2.msra.mxu0 0.0
    %506 = vmatprep.subr.mxu0 0.0
    %507 = vmatpush2.msra.mxu0 0.0
    %508 = vmatprep.subr.mxu0 0.0
    %509 = vmatpush2.msra.mxu0 0.0
    %510 = vmatprep.subr.mxu0 0.0
    %511 = vmatpush2.msra.mxu0 0.0
    %512 = vmatprep.subr.mxu0 0.0
    %513 = vmatpush2.msra.mxu0 0.0
    %514 = vmatprep.mubr.f32.mxu0 0.0
    %515 = vmatmul.mubr.f32.gmra.mxu0 %v74
    %v516 = vpop.f32.mrf.mxu0
    %v517 = vadd.f32 0.0, %v516
    %v518 = vpop.f32.mrf.mxu0
    %v519 = vadd.f32 0.0, %v518
    %520 = vdwg.mxu0
    %521 = vmatprep.subr.mxu0 %v153
    %522 = vmatpush1.msra.mxu0 %v152
    %523 = vmatprep.subr.mxu0 %v148
    %524 = vmatpush1.msra.mxu0 %v147
    %525 = vmatprep.subr.mxu0 %v143
    %526 = vmatpush1.msra.mxu0 %v142
    %527 = vmatprep.subr.mxu0 %v138
    %528 = vmatpush1.msra.mxu0 %v137
    %529 = vmatprep.subr.mxu0 %v133
    %530 = vmatpush1.msra.mxu0 %v132
    %531 = vmatprep.subr.mxu0 %v128
    %532 = vmatpush1.msra.mxu0 %v127
    %533 = vmatprep.subr.mxu0 %v123
    %534 = vmatpush1.msra.mxu0 %v122
    %535 = vmatprep.subr.mxu0 %v118
    %536 = vmatpush1.msra.mxu0 %v117
    %537 = vmatprep.subr.mxu0 %v113
    %538 = vmatpush1.msra.mxu0 %v112
    %539 = vmatprep.subr.mxu0 %v108
    %540 = vmatpush1.msra.mxu0 %v107
    %541 = vmatprep.subr.mxu0 %v103
    %542 = vmatpush1.msra.mxu0 %v102
    %543 = vmatprep.subr.mxu0 %v98
    %544 = vmatpush1.msra.mxu0 %v97
    %545 = vmatprep.subr.mxu0 %v93
    %546 = vmatpush1.msra.mxu0 %v92
    %547 = vmatprep.subr.mxu0 %v88
    %548 = vmatpush1.msra.mxu0 %v87
    %549 = vmatprep.subr.mxu0 %v83
    %550 = vmatpush1.msra.mxu0 %v82
    %551 = vmatprep.subr.mxu0 %v78
    %552 = vmatpush1.msra.mxu0 %v77
    %553 = vmatprep.subr.mxu0 0.0
    %554 = vmatpush2.msra.mxu0 0.0
    %555 = vmatprep.subr.mxu0 0.0
    %556 = vmatpush2.msra.mxu0 0.0
    %557 = vmatprep.subr.mxu0 0.0
    %558 = vmatpush2.msra.mxu0 0.0
    %559 = vmatprep.subr.mxu0 0.0
    %560 = vmatpush2.msra.mxu0 0.0
    %561 = vmatprep.subr.mxu0 0.0
    %562 = vmatpush2.msra.mxu0 0.0
    %563 = vmatprep.subr.mxu0 0.0
    %564 = vmatpush2.msra.mxu0 0.0
    %565 = vmatprep.subr.mxu0 0.0
    %566 = vmatpush2.msra.mxu0 0.0
    %567 = vmatprep.subr.mxu0 0.0
    %568 = vmatpush2.msra.mxu0 0.0
    %569 = vmatprep.subr.mxu0 0.0
    %570 = vmatpush2.msra.mxu0 0.0
    %571 = vmatprep.subr.mxu0 0.0
    %572 = vmatpush2.msra.mxu0 0.0
    %573 = vmatprep.subr.mxu0 0.0
    %574 = vmatpush2.msra.mxu0 0.0
    %575 = vmatprep.subr.mxu0 0.0
    %576 = vmatpush2.msra.mxu0 0.0
    %577 = vmatprep.subr.mxu0 0.0
    %578 = vmatpush2.msra.mxu0 0.0
    %579 = vmatprep.subr.mxu0 0.0
    %580 = vmatpush2.msra.mxu0 0.0
    %581 = vmatprep.subr.mxu0 0.0
    %582 = vmatpush2.msra.mxu0 0.0
    %583 = vmatprep.subr.mxu0 0.0
    %584 = vmatpush2.msra.mxu0 0.0
    %585 = vmatprep.mubr.f32.mxu0 0.0
    %586 = vmatmul.mubr.f32.gmra.mxu0 %v74
    %v587 = vpop.f32.mrf.mxu0
    %v588 = vadd.f32 0.0, %v587
    %v589 = vpop.f32.mrf.mxu0
    %v590 = vadd.f32 0.0, %v589
    %591 = vdwg.mxu0
    %592 = vmatprep.subr.mxu0 0.0
    %593 = vmatpush1.msra.mxu0 %v154
    %594 = vmatprep.subr.mxu0 0.0
    %595 = vmatpush1.msra.mxu0 %v149
    %596 = vmatprep.subr.mxu0 0.0
    %597 = vmatpush1.msra.mxu0 %v144
    %598 = vmatprep.subr.mxu0 0.0
    %599 = vmatpush1.msra.mxu0 %v139
    %600 = vmatprep.subr.mxu0 0.0
    %601 = vmatpush1.msra.mxu0 %v134
    %602 = vmatprep.subr.mxu0 0.0
    %603 = vmatpush1.msra.mxu0 %v129
    %604 = vmatprep.subr.mxu0 0.0
    %605 = vmatpush1.msra.mxu0 %v124
    %606 = vmatprep.subr.mxu0 0.0
    %607 = vmatpush1.msra.mxu0 %v119
    %608 = vmatprep.subr.mxu0 0.0
    %609 = vmatpush1.msra.mxu0 %v114
    %610 = vmatprep.subr.mxu0 0.0
    %611 = vmatpush1.msra.mxu0 %v109
    %612 = vmatprep.subr.mxu0 0.0
    %613 = vmatpush1.msra.mxu0 %v104
    %614 = vmatprep.subr.mxu0 0.0
    %615 = vmatpush1.msra.mxu0 %v99
    %616 = vmatprep.subr.mxu0 0.0
    %617 = vmatpush1.msra.mxu0 %v94
    %618 = vmatprep.subr.mxu0 0.0
    %619 = vmatpush1.msra.mxu0 %v89
    %620 = vmatprep.subr.mxu0 0.0
    %621 = vmatpush1.msra.mxu0 %v84
    %622 = vmatprep.subr.mxu0 0.0
    %623 = vmatpush1.msra.mxu0 %v79
    %624 = vmatprep.subr.mxu0 0.0
    %625 = vmatpush2.msra.mxu0 0.0
    %626 = vmatprep.subr.mxu0 0.0
    %627 = vmatpush2.msra.mxu0 0.0
    %628 = vmatprep.subr.mxu0 0.0
    %629 = vmatpush2.msra.mxu0 0.0
    %630 = vmatprep.subr.mxu0 0.0
    %631 = vmatpush2.msra.mxu0 0.0
    %632 = vmatprep.subr.mxu0 0.0
    %633 = vmatpush2.msra.mxu0 0.0
    %634 = vmatprep.subr.mxu0 0.0
    %635 = vmatpush2.msra.mxu0 0.0
    %636 = vmatprep.subr.mxu0 0.0
    %637 = vmatpush2.msra.mxu0 0.0
    %638 = vmatprep.subr.mxu0 0.0
    %639 = vmatpush2.msra.mxu0 0.0
    %640 = vmatprep.subr.mxu0 0.0
    %641 = vmatpush2.msra.mxu0 0.0
    %642 = vmatprep.subr.mxu0 0.0
    %643 = vmatpush2.msra.mxu0 0.0
    %644 = vmatprep.subr.mxu0 0.0
    %645 = vmatpush2.msra.mxu0 0.0
    %646 = vmatprep.subr.mxu0 0.0
    %647 = vmatpush2.msra.mxu0 0.0
    %648 = vmatprep.subr.mxu0 0.0
    %649 = vmatpush2.msra.mxu0 0.0
    %650 = vmatprep.subr.mxu0 0.0
    %651 = vmatpush2.msra.mxu0 0.0
    %652 = vmatprep.subr.mxu0 0.0
    %653 = vmatpush2.msra.mxu0 0.0
    %654 = vmatprep.subr.mxu0 0.0
    %655 = vmatpush2.msra.mxu0 0.0
    %656 = vmatprep.mubr.f32.mxu0 0.0
    %657 = vmatmul.mubr.f32.gmra.mxu0 %v74
    %v658 = vpop.f32.mrf.mxu0
    %v659 = vadd.f32 0.0, %v658
    %v660 = vpop.f32.mrf.mxu0
    %661 = vdwg.mxu0
    %v662 = vsel %vm449, %v659, -1e+30
    %vm663 = vcmask 1041408
    %v664 = vsel %vm663, %v662, -inf
    %665 = vmax.xlane.f32.xlu0 %v664
    %v666 = vpop.xlane.xlu0 %665
    %v667 = vsub.f32 %v662, %v666
    %v668 = vmul.f32 %v667, 1.442695
    %v669 = vpow.pop %v668
    %v670 = vsel %vm663, %v669, 0.0
    %671 = vadd.xlane.f32.xlu0 %v670
    %v672 = vpop.xlane.xlu0 %671
    %v673 = vrcp.pop %v672
    %v674 = vmul.f32 %v669, %v673
    %675 = vmatprep.subr.mxu0 %v216
    %676 = vmatpush1.msra.mxu0 %v215
    %677 = vmatprep.subr.mxu0 %v212
    %678 = vmatpush1.msra.mxu0 %v211
    %679 = vmatprep.subr.mxu0 %v208
    %680 = vmatpush1.msra.mxu0 %v207
    %681 = vmatprep.subr.mxu0 %v204
    %682 = vmatpush1.msra.mxu0 %v203
    %683 = vmatprep.subr.mxu0 %v200
    %684 = vmatpush1.msra.mxu0 %v199
    %685 = vmatprep.subr.mxu0 %v196
    %686 = vmatpush1.msra.mxu0 %v195
    %687 = vmatprep.subr.mxu0 %v192
    %688 = vmatpush1.msra.mxu0 %v191
    %689 = vmatprep.subr.mxu0 %v188
    %690 = vmatpush1.msra.mxu0 %v187
    %691 = vmatprep.subr.mxu0 %v184
    %692 = vmatpush1.msra.mxu0 %v183
    %693 = vmatprep.subr.mxu0 %v180
    %694 = vmatpush1.msra.mxu0 %v179
    %695 = vmatprep.subr.mxu0 %v176
    %696 = vmatpush1.msra.mxu0 %v175
    %697 = vmatprep.subr.mxu0 %v172
    %698 = vmatpush1.msra.mxu0 %v171
    %699 = vmatprep.subr.mxu0 %v168
    %700 = vmatpush1.msra.mxu0 %v167
    %701 = vmatprep.subr.mxu0 %v164
    %702 = vmatpush1.msra.mxu0 %v163
    %703 = vmatprep.subr.mxu0 %v160
    %704 = vmatpush1.msra.mxu0 %v159
    %705 = vmatprep.subr.mxu0 %v156
    %706 = vmatpush1.msra.mxu0 %v155
    %707 = vmatprep.subr.mxu0 0.0
    %708 = vmatpush2.msra.mxu0 0.0
    %709 = vmatprep.subr.mxu0 0.0
    %710 = vmatpush2.msra.mxu0 0.0
    %711 = vmatprep.subr.mxu0 0.0
    %712 = vmatpush2.msra.mxu0 0.0
    %713 = vmatprep.subr.mxu0 0.0
    %714 = vmatpush2.msra.mxu0 0.0
    %715 = vmatprep.subr.mxu0 0.0
    %716 = vmatpush2.msra.mxu0 0.0
    %717 = vmatprep.subr.mxu0 0.0
    %718 = vmatpush2.msra.mxu0 0.0
    %719 = vmatprep.subr.mxu0 0.0
    %720 = vmatpush2.msra.mxu0 0.0
    %721 = vmatprep.subr.mxu0 0.0
    %722 = vmatpush2.msra.mxu0 0.0
    %723 = vmatprep.subr.mxu0 0.0
    %724 = vmatpush2.msra.mxu0 0.0
    %725 = vmatprep.subr.mxu0 0.0
    %726 = vmatpush2.msra.mxu0 0.0
    %727 = vmatprep.subr.mxu0 0.0
    %728 = vmatpush2.msra.mxu0 0.0
    %729 = vmatprep.subr.mxu0 0.0
    %730 = vmatpush2.msra.mxu0 0.0
    %731 = vmatprep.subr.mxu0 0.0
    %732 = vmatpush2.msra.mxu0 0.0
    %733 = vmatprep.subr.mxu0 0.0
    %734 = vmatpush2.msra.mxu0 0.0
    %735 = vmatprep.subr.mxu0 0.0
    %736 = vmatpush2.msra.mxu0 0.0
    %737 = vmatprep.subr.mxu0 0.0
    %738 = vmatpush2.msra.mxu0 0.0
    %739 = vmatprep.mubr.f32.mxu0 0.0
    %740 = vmatmul.mubr.f32.gmra.mxu0 %v674
    %v741 = vpop.f32.mrf.mxu0
    %v742 = vadd.f32 %v517, %v741
    %v743 = vpop.f32.mrf.mxu0
    %v744 = vadd.f32 %v519, %v743
    %745 = vdwg.mxu0
    %746 = vmatprep.subr.mxu0 %v218
    %747 = vmatpush1.msra.mxu0 %v217
    %748 = vmatprep.subr.mxu0 %v214
    %749 = vmatpush1.msra.mxu0 %v213
    %750 = vmatprep.subr.mxu0 %v210
    %751 = vmatpush1.msra.mxu0 %v209
    %752 = vmatprep.subr.mxu0 %v206
    %753 = vmatpush1.msra.mxu0 %v205
    %754 = vmatprep.subr.mxu0 %v202
    %755 = vmatpush1.msra.mxu0 %v201
    %756 = vmatprep.subr.mxu0 %v198
    %757 = vmatpush1.msra.mxu0 %v197
    %758 = vmatprep.subr.mxu0 %v194
    %759 = vmatpush1.msra.mxu0 %v193
    %760 = vmatprep.subr.mxu0 %v190
    %761 = vmatpush1.msra.mxu0 %v189
    %762 = vmatprep.subr.mxu0 %v186
    %763 = vmatpush1.msra.mxu0 %v185
    %764 = vmatprep.subr.mxu0 %v182
    %765 = vmatpush1.msra.mxu0 %v181
    %766 = vmatprep.subr.mxu0 %v178
    %767 = vmatpush1.msra.mxu0 %v177
    %768 = vmatprep.subr.mxu0 %v174
    %769 = vmatpush1.msra.mxu0 %v173
    %770 = vmatprep.subr.mxu0 %v170
    %771 = vmatpush1.msra.mxu0 %v169
    %772 = vmatprep.subr.mxu0 %v166
    %773 = vmatpush1.msra.mxu0 %v165
    %774 = vmatprep.subr.mxu0 %v162
    %775 = vmatpush1.msra.mxu0 %v161
    %776 = vmatprep.subr.mxu0 %v158
    %777 = vmatpush1.msra.mxu0 %v157
    %778 = vmatprep.subr.mxu0 0.0
    %779 = vmatpush2.msra.mxu0 0.0
    %780 = vmatprep.subr.mxu0 0.0
    %781 = vmatpush2.msra.mxu0 0.0
    %782 = vmatprep.subr.mxu0 0.0
    %783 = vmatpush2.msra.mxu0 0.0
    %784 = vmatprep.subr.mxu0 0.0
    %785 = vmatpush2.msra.mxu0 0.0
    %786 = vmatprep.subr.mxu0 0.0
    %787 = vmatpush2.msra.mxu0 0.0
    %788 = vmatprep.subr.mxu0 0.0
    %789 = vmatpush2.msra.mxu0 0.0
    %790 = vmatprep.subr.mxu0 0.0
    %791 = vmatpush2.msra.mxu0 0.0
    %792 = vmatprep.subr.mxu0 0.0
    %793 = vmatpush2.msra.mxu0 0.0
    %794 = vmatprep.subr.mxu0 0.0
    %795 = vmatpush2.msra.mxu0 0.0
    %796 = vmatprep.subr.mxu0 0.0
    %797 = vmatpush2.msra.mxu0 0.0
    %798 = vmatprep.subr.mxu0 0.0
    %799 = vmatpush2.msra.mxu0 0.0
    %800 = vmatprep.subr.mxu0 0.0
    %801 = vmatpush2.msra.mxu0 0.0
    %802 = vmatprep.subr.mxu0 0.0
    %803 = vmatpush2.msra.mxu0 0.0
    %804 = vmatprep.subr.mxu0 0.0
    %805 = vmatpush2.msra.mxu0 0.0
    %806 = vmatprep.subr.mxu0 0.0
    %807 = vmatpush2.msra.mxu0 0.0
    %808 = vmatprep.subr.mxu0 0.0
    %809 = vmatpush2.msra.mxu0 0.0
    %810 = vmatprep.mubr.f32.mxu0 0.0
    %811 = vmatmul.mubr.f32.gmra.mxu0 %v674
    %v812 = vpop.f32.mrf.mxu0
    %v813 = vadd.f32 %v588, %v812
    %v814 = vpop.f32.mrf.mxu0
    %v815 = vadd.f32 %v590, %v814
    %816 = vdwg.mxu0
    %v817 = vadd.f32 %v742, %v372
    %v818 = vadd.f32 %v744, %v374
    %v819 = vadd.f32 %v813, %v443
    %v820 = vadd.f32 %v815, %v445
    %v821 = vxor.u32 %v817, 2147483648
    %v822 = vxor.u32 %v818, 2147483648
    %v823 = vxor.u32 %v819, 2147483648
    %v824 = vmul.f32 %v821, 1.442695
    %v825 = vpow.pop %v824
    %v826 = vmul.f32 %v822, 1.442695
    %v827 = vpow.pop %v826
    %v828 = vmul.f32 %v823, 1.442695
    %v829 = vpow.pop %v828
    %v830 = vadd.f32 %v825, 1.0
    %v831 = vadd.f32 %v827, 1.0
    %v832 = vadd.f32 %v829, 1.0
    %v833 = vrcp.pop %v830
    %v834 = vmul.f32 1.0, %v833
    %v835 = vrcp.pop %v831
    %v836 = vmul.f32 1.0, %v835
    %v837 = vrcp.pop %v832
    %v838 = vmul.f32 1.0, %v837
    %v839 = vtanh.pop %v820
    %v840 = vmul.f32 %v836, 0.0
    %v841 = vmul.f32 %v834, %v839
    %v842 = vadd.f32 %v840, %v841
    %v843 = vtanh.pop %v842
    %v844 = vmul.f32 %v838, %v843
    %v845 = vadd.f32 %v844, %v74
    %846 = vmatprep.subr.mxu0 %v151
    %847 = vmatpush1.msra.mxu0 %v150
    %848 = vmatprep.subr.mxu0 %v146
    %849 = vmatpush1.msra.mxu0 %v145
    %850 = vmatprep.subr.mxu0 %v141
    %851 = vmatpush1.msra.mxu0 %v140
    %852 = vmatprep.subr.mxu0 %v136
    %853 = vmatpush1.msra.mxu0 %v135
    %854 = vmatprep.subr.mxu0 %v131
    %855 = vmatpush1.msra.mxu0 %v130
    %856 = vmatprep.subr.mxu0 %v126
    %857 = vmatpush1.msra.mxu0 %v125
    %858 = vmatprep.subr.mxu0 %v121
    %859 = vmatpush1.msra.mxu0 %v120
    %860 = vmatprep.subr.mxu0 %v116
    %861 = vmatpush1.msra.mxu0 %v115
    %862 = vmatprep.subr.mxu0 %v111
    %863 = vmatpush1.msra.mxu0 %v110
    %864 = vmatprep.subr.mxu0 %v106
    %865 = vmatpush1.msra.mxu0 %v105
    %866 = vmatprep.subr.mxu0 %v101
    %867 = vmatpush1.msra.mxu0 %v100
    %868 = vmatprep.subr.mxu0 %v96
    %869 = vmatpush1.msra.mxu0 %v95
    %870 = vmatprep.subr.mxu0 %v91
    %871 = vmatpush1.msra.mxu0 %v90
    %872 = vmatprep.subr.mxu0 %v86
    %873 = vmatpush1.msra.mxu0 %v85
    %874 = vmatprep.subr.mxu0 %v81
    %875 = vmatpush1.msra.mxu0 %v80
    %876 = vmatprep.subr.mxu0 %v76
    %877 = vmatpush1.msra.mxu0 %v75
    %878 = vmatprep.subr.mxu0 0.0
    %879 = vmatpush2.msra.mxu0 0.0
    %880 = vmatprep.subr.mxu0 0.0
    %881 = vmatpush2.msra.mxu0 0.0
    %882 = vmatprep.subr.mxu0 0.0
    %883 = vmatpush2.msra.mxu0 0.0
    %884 = vmatprep.subr.mxu0 0.0
    %885 = vmatpush2.msra.mxu0 0.0
    %886 = vmatprep.subr.mxu0 0.0
    %887 = vmatpush2.msra.mxu0 0.0
    %888 = vmatprep.subr.mxu0 0.0
    %889 = vmatpush2.msra.mxu0 0.0
    %890 = vmatprep.subr.mxu0 0.0
    %891 = vmatpush2.msra.mxu0 0.0
    %892 = vmatprep.subr.mxu0 0.0
    %893 = vmatpush2.msra.mxu0 0.0
    %894 = vmatprep.subr.mxu0 0.0
    %895 = vmatpush2.msra.mxu0 0.0
    %896 = vmatprep.subr.mxu0 0.0
    %897 = vmatpush2.msra.mxu0 0.0
    %898 = vmatprep.subr.mxu0 0.0
    %899 = vmatpush2.msra.mxu0 0.0
    %900 = vmatprep.subr.mxu0 0.0
    %901 = vmatpush2.msra.mxu0 0.0
    %902 = vmatprep.subr.mxu0 0.0
    %903 = vmatpush2.msra.mxu0 0.0
    %904 = vmatprep.subr.mxu0 0.0
    %905 = vmatpush2.msra.mxu0 0.0
    %906 = vmatprep.subr.mxu0 0.0
    %907 = vmatpush2.msra.mxu0 0.0
    %908 = vmatprep.subr.mxu0 0.0
    %909 = vmatpush2.msra.mxu0 0.0
    %910 = vmatprep.mubr.f32.mxu0 0.0
    %911 = vmatmul.mubr.f32.gmra.mxu0 %v845
    %v912 = vpop.f32.mrf.mxu0
    %v913 = vadd.f32 0.0, %v912
    %v914 = vpop.f32.mrf.mxu0
    %v915 = vadd.f32 0.0, %v914
    %916 = vdwg.mxu0
    %917 = vmatprep.subr.mxu0 %v153
    %918 = vmatpush1.msra.mxu0 %v152
    %919 = vmatprep.subr.mxu0 %v148
    %920 = vmatpush1.msra.mxu0 %v147
    %921 = vmatprep.subr.mxu0 %v143
    %922 = vmatpush1.msra.mxu0 %v142
    %923 = vmatprep.subr.mxu0 %v138
    %924 = vmatpush1.msra.mxu0 %v137
    %925 = vmatprep.subr.mxu0 %v133
    %926 = vmatpush1.msra.mxu0 %v132
    %927 = vmatprep.subr.mxu0 %v128
    %928 = vmatpush1.msra.mxu0 %v127
    %929 = vmatprep.subr.mxu0 %v123
    %930 = vmatpush1.msra.mxu0 %v122
    %931 = vmatprep.subr.mxu0 %v118
    %932 = vmatpush1.msra.mxu0 %v117
    %933 = vmatprep.subr.mxu0 %v113
    %934 = vmatpush1.msra.mxu0 %v112
    %935 = vmatprep.subr.mxu0 %v108
    %936 = vmatpush1.msra.mxu0 %v107
    %937 = vmatprep.subr.mxu0 %v103
    %938 = vmatpush1.msra.mxu0 %v102
    %939 = vmatprep.subr.mxu0 %v98
    %940 = vmatpush1.msra.mxu0 %v97
    %941 = vmatprep.subr.mxu0 %v93
    %942 = vmatpush1.msra.mxu0 %v92
    %943 = vmatprep.subr.mxu0 %v88
    %944 = vmatpush1.msra.mxu0 %v87
    %945 = vmatprep.subr.mxu0 %v83
    %946 = vmatpush1.msra.mxu0 %v82
    %947 = vmatprep.subr.mxu0 %v78
    %948 = vmatpush1.msra.mxu0 %v77
    %949 = vmatprep.subr.mxu0 0.0
    %950 = vmatpush2.msra.mxu0 0.0
    %951 = vmatprep.subr.mxu0 0.0
    %952 = vmatpush2.msra.mxu0 0.0
    %953 = vmatprep.subr.mxu0 0.0
    %954 = vmatpush2.msra.mxu0 0.0
    %955 = vmatprep.subr.mxu0 0.0
    %956 = vmatpush2.msra.mxu0 0.0
    %957 = vmatprep.subr.mxu0 0.0
    %958 = vmatpush2.msra.mxu0 0.0
    %959 = vmatprep.subr.mxu0 0.0
    %960 = vmatpush2.msra.mxu0 0.0
    %961 = vmatprep.subr.mxu0 0.0
    %962 = vmatpush2.msra.mxu0 0.0
    %963 = vmatprep.subr.mxu0 0.0
    %964 = vmatpush2.msra.mxu0 0.0
    %965 = vmatprep.subr.mxu0 0.0
    %966 = vmatpush2.msra.mxu0 0.0
    %967 = vmatprep.subr.mxu0 0.0
    %968 = vmatpush2.msra.mxu0 0.0
    %969 = vmatprep.subr.mxu0 0.0
    %970 = vmatpush2.msra.mxu0 0.0
    %971 = vmatprep.subr.mxu0 0.0
    %972 = vmatpush2.msra.mxu0 0.0
    %973 = vmatprep.subr.mxu0 0.0
    %974 = vmatpush2.msra.mxu0 0.0
    %975 = vmatprep.subr.mxu0 0.0
    %976 = vmatpush2.msra.mxu0 0.0
    %977 = vmatprep.subr.mxu0 0.0
    %978 = vmatpush2.msra.mxu0 0.0
    %979 = vmatprep.subr.mxu0 0.0
    %980 = vmatpush2.msra.mxu0 0.0
    %981 = vmatprep.mubr.f32.mxu0 0.0
    %982 = vmatmul.mubr.f32.gmra.mxu0 %v845
    %v983 = vpop.f32.mrf.mxu0
    %v984 = vadd.f32 0.0, %v983
    %v985 = vpop.f32.mrf.mxu0
    %v986 = vadd.f32 0.0, %v985
    %987 = vdwg.mxu0
    %988 = vmatprep.subr.mxu0 0.0
    %989 = vmatpush1.msra.mxu0 %v154
    %990 = vmatprep.subr.mxu0 0.0
    %991 = vmatpush1.msra.mxu0 %v149
    %992 = vmatprep.subr.mxu0 0.0
    %993 = vmatpush1.msra.mxu0 %v144
    %994 = vmatprep.subr.mxu0 0.0
    %995 = vmatpush1.msra.mxu0 %v139
    %996 = vmatprep.subr.mxu0 0.0
    %997 = vmatpush1.msra.mxu0 %v134
    %998 = vmatprep.subr.mxu0 0.0
    %999 = vmatpush1.msra.mxu0 %v129
    %1000 = vmatprep.subr.mxu0 0.0
    %1001 = vmatpush1.msra.mxu0 %v124
    %1002 = vmatprep.subr.mxu0 0.0
    %1003 = vmatpush1.msra.mxu0 %v119
    %1004 = vmatprep.subr.mxu0 0.0
    %1005 = vmatpush1.msra.mxu0 %v114
    %1006 = vmatprep.subr.mxu0 0.0
    %1007 = vmatpush1.msra.mxu0 %v109
    %1008 = vmatprep.subr.mxu0 0.0
    %1009 = vmatpush1.msra.mxu0 %v104
    %1010 = vmatprep.subr.mxu0 0.0
    %1011 = vmatpush1.msra.mxu0 %v99
    %1012 = vmatprep.subr.mxu0 0.0
    %1013 = vmatpush1.msra.mxu0 %v94
    %1014 = vmatprep.subr.mxu0 0.0
    %1015 = vmatpush1.msra.mxu0 %v89
    %1016 = vmatprep.subr.mxu0 0.0
    %1017 = vmatpush1.msra.mxu0 %v84
    %1018 = vmatprep.subr.mxu0 0.0
    %1019 = vmatpush1.msra.mxu0 %v79
    %1020 = vmatprep.subr.mxu0 0.0
    %1021 = vmatpush2.msra.mxu0 0.0
    %1022 = vmatprep.subr.mxu0 0.0
    %1023 = vmatpush2.msra.mxu0 0.0
    %1024 = vmatprep.subr.mxu0 0.0
    %1025 = vmatpush2.msra.mxu0 0.0
    %1026 = vmatprep.subr.mxu0 0.0
    %1027 = vmatpush2.msra.mxu0 0.0
    %1028 = vmatprep.subr.mxu0 0.0
    %1029 = vmatpush2.msra.mxu0 0.0
    %1030 = vmatprep.subr.mxu0 0.0
    %1031 = vmatpush2.msra.mxu0 0.0
    %1032 = vmatprep.subr.mxu0 0.0
    %1033 = vmatpush2.msra.mxu0 0.0
    %1034 = vmatprep.subr.mxu0 0.0
    %1035 = vmatpush2.msra.mxu0 0.0
    %1036 = vmatprep.subr.mxu0 0.0
    %1037 = vmatpush2.msra.mxu0 0.0
    %1038 = vmatprep.subr.mxu0 0.0
    %1039 = vmatpush2.msra.mxu0 0.0
    %1040 = vmatprep.subr.mxu0 0.0
    %1041 = vmatpush2.msra.mxu0 0.0
    %1042 = vmatprep.subr.mxu0 0.0
    %1043 = vmatpush2.msra.mxu0 0.0
    %1044 = vmatprep.subr.mxu0 0.0
    %1045 = vmatpush2.msra.mxu0 0.0
    %1046 = vmatprep.subr.mxu0 0.0
    %1047 = vmatpush2.msra.mxu0 0.0
    %1048 = vmatprep.subr.mxu0 0.0
    %1049 = vmatpush2.msra.mxu0 0.0
    %1050 = vmatprep.subr.mxu0 0.0
    %1051 = vmatpush2.msra.mxu0 0.0
    %1052 = vmatprep.mubr.f32.mxu0 0.0
    %1053 = vmatmul.mubr.f32.gmra.mxu0 %v845
    %v1054 = vpop.f32.mrf.mxu0
    %v1055 = vadd.f32 0.0, %v1054
    %v1056 = vpop.f32.mrf.mxu0
    %1057 = vdwg.mxu0
    %v1058 = vsel %vm449, %v1055, -1e+30
    %v1059 = vsel %vm663, %v1058, -inf
    %1060 = vmax.xlane.f32.xlu0 %v1059
    %v1061 = vpop.xlane.xlu0 %1060
    %v1062 = vsub.f32 %v1058, %v1061
    %v1063 = vmul.f32 %v1062, 1.442695
    %v1064 = vpow.pop %v1063
    %v1065 = vsel %vm663, %v1064, 0.0
    %1066 = vadd.xlane.f32.xlu0 %v1065
    %v1067 = vpop.xlane.xlu0 %1066
    %v1068 = vrcp.pop %v1067
    %v1069 = vmul.f32 %v1064, %v1068
    %1070 = vmatprep.subr.mxu0 %v216
    %1071 = vmatpush1.msra.mxu0 %v215
    %1072 = vmatprep.subr.mxu0 %v212
    %1073 = vmatpush1.msra.mxu0 %v211
    %1074 = vmatprep.subr.mxu0 %v208
    %1075 = vmatpush1.msra.mxu0 %v207
    %1076 = vmatprep.subr.mxu0 %v204
    %1077 = vmatpush1.msra.mxu0 %v203
    %1078 = vmatprep.subr.mxu0 %v200
    %1079 = vmatpush1.msra.mxu0 %v199
    %1080 = vmatprep.subr.mxu0 %v196
    %1081 = vmatpush1.msra.mxu0 %v195
    %1082 = vmatprep.subr.mxu0 %v192
    %1083 = vmatpush1.msra.mxu0 %v191
    %1084 = vmatprep.subr.mxu0 %v188
    %1085 = vmatpush1.msra.mxu0 %v187
    %1086 = vmatprep.subr.mxu0 %v184
    %1087 = vmatpush1.msra.mxu0 %v183
    %1088 = vmatprep.subr.mxu0 %v180
    %1089 = vmatpush1.msra.mxu0 %v179
    %1090 = vmatprep.subr.mxu0 %v176
    %1091 = vmatpush1.msra.mxu0 %v175
    %1092 = vmatprep.subr.mxu0 %v172
    %1093 = vmatpush1.msra.mxu0 %v171
    %1094 = vmatprep.subr.mxu0 %v168
    %1095 = vmatpush1.msra.mxu0 %v167
    %1096 = vmatprep.subr.mxu0 %v164
    %1097 = vmatpush1.msra.mxu0 %v163
    %1098 = vmatprep.subr.mxu0 %v160
    %1099 = vmatpush1.msra.mxu0 %v159
    %1100 = vmatprep.subr.mxu0 %v156
    %1101 = vmatpush1.msra.mxu0 %v155
    %1102 = vmatprep.subr.mxu0 0.0
    %1103 = vmatpush2.msra.mxu0 0.0
    %1104 = vmatprep.subr.mxu0 0.0
    %1105 = vmatpush2.msra.mxu0 0.0
    %1106 = vmatprep.subr.mxu0 0.0
    %1107 = vmatpush2.msra.mxu0 0.0
    %1108 = vmatprep.subr.mxu0 0.0
    %1109 = vmatpush2.msra.mxu0 0.0
    %1110 = vmatprep.subr.mxu0 0.0
    %1111 = vmatpush2.msra.mxu0 0.0
    %1112 = vmatprep.subr.mxu0 0.0
    %1113 = vmatpush2.msra.mxu0 0.0
    %1114 = vmatprep.subr.mxu0 0.0
    %1115 = vmatpush2.msra.mxu0 0.0
    %1116 = vmatprep.subr.mxu0 0.0
    %1117 = vmatpush2.msra.mxu0 0.0
    %1118 = vmatprep.subr.mxu0 0.0
    %1119 = vmatpush2.msra.mxu0 0.0
    %1120 = vmatprep.subr.mxu0 0.0
    %1121 = vmatpush2.msra.mxu0 0.0
    %1122 = vmatprep.subr.mxu0 0.0
    %1123 = vmatpush2.msra.mxu0 0.0
    %1124 = vmatprep.subr.mxu0 0.0
    %1125 = vmatpush2.msra.mxu0 0.0
    %1126 = vmatprep.subr.mxu0 0.0
    %1127 = vmatpush2.msra.mxu0 0.0
    %1128 = vmatprep.subr.mxu0 0.0
    %1129 = vmatpush2.msra.mxu0 0.0
    %1130 = vmatprep.subr.mxu0 0.0
    %1131 = vmatpush2.msra.mxu0 0.0
    %1132 = vmatprep.subr.mxu0 0.0
    %1133 = vmatpush2.msra.mxu0 0.0
    %1134 = vmatprep.mubr.f32.mxu0 0.0
    %1135 = vmatmul.mubr.f32.gmra.mxu0 %v1069
    %v1136 = vpop.f32.mrf.mxu0
    %v1137 = vadd.f32 %v913, %v1136
    %v1138 = vpop.f32.mrf.mxu0
    %v1139 = vadd.f32 %v915, %v1138
    %1140 = vdwg.mxu0
    %1141 = vmatprep.subr.mxu0 %v218
    %1142 = vmatpush1.msra.mxu0 %v217
    %1143 = vmatprep.subr.mxu0 %v214
    %1144 = vmatpush1.msra.mxu0 %v213
    %1145 = vmatprep.subr.mxu0 %v210
    %1146 = vmatpush1.msra.mxu0 %v209
    %1147 = vmatprep.subr.mxu0 %v206
    %1148 = vmatpush1.msra.mxu0 %v205
    %1149 = vmatprep.subr.mxu0 %v202
    %1150 = vmatpush1.msra.mxu0 %v201
    %1151 = vmatprep.subr.mxu0 %v198
    %1152 = vmatpush1.msra.mxu0 %v197
    %1153 = vmatprep.subr.mxu0 %v194
    %1154 = vmatpush1.msra.mxu0 %v193
    %1155 = vmatprep.subr.mxu0 %v190
    %1156 = vmatpush1.msra.mxu0 %v189
    %1157 = vmatprep.subr.mxu0 %v186
    %1158 = vmatpush1.msra.mxu0 %v185
    %1159 = vmatprep.subr.mxu0 %v182
    %1160 = vmatpush1.msra.mxu0 %v181
    %1161 = vmatprep.subr.mxu0 %v178
    %1162 = vmatpush1.msra.mxu0 %v177
    %1163 = vmatprep.subr.mxu0 %v174
    %1164 = vmatpush1.msra.mxu0 %v173
    %1165 = vmatprep.subr.mxu0 %v170
    %1166 = vmatpush1.msra.mxu0 %v169
    %1167 = vmatprep.subr.mxu0 %v166
    %1168 = vmatpush1.msra.mxu0 %v165
    %1169 = vmatprep.subr.mxu0 %v162
    %1170 = vmatpush1.msra.mxu0 %v161
    %1171 = vmatprep.subr.mxu0 %v158
    %1172 = vmatpush1.msra.mxu0 %v157
    %1173 = vmatprep.subr.mxu0 0.0
    %1174 = vmatpush2.msra.mxu0 0.0
    %1175 = vmatprep.subr.mxu0 0.0
    %1176 = vmatpush2.msra.mxu0 0.0
    %1177 = vmatprep.subr.mxu0 0.0
    %1178 = vmatpush2.msra.mxu0 0.0
    %1179 = vmatprep.subr.mxu0 0.0
    %1180 = vmatpush2.msra.mxu0 0.0
    %1181 = vmatprep.subr.mxu0 0.0
    %1182 = vmatpush2.msra.mxu0 0.0
    %1183 = vmatprep.subr.mxu0 0.0
    %1184 = vmatpush2.msra.mxu0 0.0
    %1185 = vmatprep.subr.mxu0 0.0
    %1186 = vmatpush2.msra.mxu0 0.0
    %1187 = vmatprep.subr.mxu0 0.0
    %1188 = vmatpush2.msra.mxu0 0.0
    %1189 = vmatprep.subr.mxu0 0.0
    %1190 = vmatpush2.msra.mxu0 0.0
    %1191 = vmatprep.subr.mxu0 0.0
    %1192 = vmatpush2.msra.mxu0 0.0
    %1193 = vmatprep.subr.mxu0 0.0
    %1194 = vmatpush2.msra.mxu0 0.0
    %1195 = vmatprep.subr.mxu0 0.0
    %1196 = vmatpush2.msra.mxu0 0.0
    %1197 = vmatprep.subr.mxu0 0.0
    %1198 = vmatpush2.msra.mxu0 0.0
    %1199 = vmatprep.subr.mxu0 0.0
    %1200 = vmatpush2.msra.mxu0 0.0
    %1201 = vmatprep.subr.mxu0 0.0
    %1202 = vmatpush2.msra.mxu0 0.0
    %1203 = vmatprep.subr.mxu0 0.0
    %1204 = vmatpush2.msra.mxu0 0.0
    %1205 = vmatprep.mubr.f32.mxu0 0.0
    %1206 = vmatmul.mubr.f32.gmra.mxu0 %v1069
    %v1207 = vpop.f32.mrf.mxu0
    %v1208 = vadd.f32 %v984, %v1207
    %v1209 = vpop.f32.mrf.mxu0
    %v1210 = vadd.f32 %v986, %v1209
    %1211 = vdwg.mxu0
    %v1212 = vadd.f32 %v1137, %v372
    %v1213 = vadd.f32 %v1139, %v374
    %v1214 = vadd.f32 %v1208, %v443
    %v1215 = vadd.f32 %v1210, %v445
    %v1216 = vxor.u32 %v1212, 2147483648
    %v1217 = vxor.u32 %v1213, 2147483648
    %v1218 = vxor.u32 %v1214, 2147483648
    %v1219 = vmul.f32 %v1216, 1.442695
    %v1220 = vpow.pop %v1219
    %v1221 = vmul.f32 %v1217, 1.442695
    %v1222 = vpow.pop %v1221
    %v1223 = vmul.f32 %v1218, 1.442695
    %v1224 = vpow.pop %v1223
    %v1225 = vadd.f32 %v1220, 1.0
    %v1226 = vadd.f32 %v1222, 1.0
    %v1227 = vadd.f32 %v1224, 1.0
    %v1228 = vrcp.pop %v1225
    %v1229 = vmul.f32 1.0, %v1228
    %v1230 = vrcp.pop %v1226
    %v1231 = vmul.f32 1.0, %v1230
    %v1232 = vrcp.pop %v1227
    %v1233 = vmul.f32 1.0, %v1232
    %v1234 = vtanh.pop %v1215
    %v1235 = vmul.f32 %v1231, %v842
    %v1236 = vmul.f32 %v1229, %v1234
    %v1237 = vadd.f32 %v1235, %v1236
    %v1238 = vtanh.pop %v1237
    %v1239 = vmul.f32 %v1233, %v1238
    %v1240 = vadd.f32 %v1239, %v74
    %1241 = vmatprep.subr.mxu0 %v151
    %1242 = vmatpush1.msra.mxu0 %v150
    %1243 = vmatprep.subr.mxu0 %v146
    %1244 = vmatpush1.msra.mxu0 %v145
    %1245 = vmatprep.subr.mxu0 %v141
    %1246 = vmatpush1.msra.mxu0 %v140
    %1247 = vmatprep.subr.mxu0 %v136
    %1248 = vmatpush1.msra.mxu0 %v135
    %1249 = vmatprep.subr.mxu0 %v131
    %1250 = vmatpush1.msra.mxu0 %v130
    %1251 = vmatprep.subr.mxu0 %v126
    %1252 = vmatpush1.msra.mxu0 %v125
    %1253 = vmatprep.subr.mxu0 %v121
    %1254 = vmatpush1.msra.mxu0 %v120
    %1255 = vmatprep.subr.mxu0 %v116
    %1256 = vmatpush1.msra.mxu0 %v115
    %1257 = vmatprep.subr.mxu0 %v111
    %1258 = vmatpush1.msra.mxu0 %v110
    %1259 = vmatprep.subr.mxu0 %v106
    %1260 = vmatpush1.msra.mxu0 %v105
    %1261 = vmatprep.subr.mxu0 %v101
    %1262 = vmatpush1.msra.mxu0 %v100
    %1263 = vmatprep.subr.mxu0 %v96
    %1264 = vmatpush1.msra.mxu0 %v95
    %1265 = vmatprep.subr.mxu0 %v91
    %1266 = vmatpush1.msra.mxu0 %v90
    %1267 = vmatprep.subr.mxu0 %v86
    %1268 = vmatpush1.msra.mxu0 %v85
    %1269 = vmatprep.subr.mxu0 %v81
    %1270 = vmatpush1.msra.mxu0 %v80
    %1271 = vmatprep.subr.mxu0 %v76
    %1272 = vmatpush1.msra.mxu0 %v75
    %1273 = vmatprep.subr.mxu0 0.0
    %1274 = vmatpush2.msra.mxu0 0.0
    %1275 = vmatprep.subr.mxu0 0.0
    %1276 = vmatpush2.msra.mxu0 0.0
    %1277 = vmatprep.subr.mxu0 0.0
    %1278 = vmatpush2.msra.mxu0 0.0
    %1279 = vmatprep.subr.mxu0 0.0
    %1280 = vmatpush2.msra.mxu0 0.0
    %1281 = vmatprep.subr.mxu0 0.0
    %1282 = vmatpush2.msra.mxu0 0.0
    %1283 = vmatprep.subr.mxu0 0.0
    %1284 = vmatpush2.msra.mxu0 0.0
    %1285 = vmatprep.subr.mxu0 0.0
    %1286 = vmatpush2.msra.mxu0 0.0
    %1287 = vmatprep.subr.mxu0 0.0
    %1288 = vmatpush2.msra.mxu0 0.0
    %1289 = vmatprep.subr.mxu0 0.0
    %1290 = vmatpush2.msra.mxu0 0.0
    %1291 = vmatprep.subr.mxu0 0.0
    %1292 = vmatpush2.msra.mxu0 0.0
    %1293 = vmatprep.subr.mxu0 0.0
    %1294 = vmatpush2.msra.mxu0 0.0
    %1295 = vmatprep.subr.mxu0 0.0
    %1296 = vmatpush2.msra.mxu0 0.0
    %1297 = vmatprep.subr.mxu0 0.0
    %1298 = vmatpush2.msra.mxu0 0.0
    %1299 = vmatprep.subr.mxu0 0.0
    %1300 = vmatpush2.msra.mxu0 0.0
    %1301 = vmatprep.subr.mxu0 0.0
    %1302 = vmatpush2.msra.mxu0 0.0
    %1303 = vmatprep.subr.mxu0 0.0
    %1304 = vmatpush2.msra.mxu0 0.0
    %1305 = vmatprep.mubr.f32.mxu0 0.0
    %1306 = vmatmul.mubr.f32.gmra.mxu0 %v1240
    %v1307 = vpop.f32.mrf.mxu0
    %v1308 = vadd.f32 0.0, %v1307
    %v1309 = vpop.f32.mrf.mxu0
    %v1310 = vadd.f32 0.0, %v1309
    %1311 = vdwg.mxu0
    %1312 = vmatprep.subr.mxu0 %v153
    %1313 = vmatpush1.msra.mxu0 %v152
    %1314 = vmatprep.subr.mxu0 %v148
    %1315 = vmatpush1.msra.mxu0 %v147
    %1316 = vmatprep.subr.mxu0 %v143
    %1317 = vmatpush1.msra.mxu0 %v142
    %1318 = vmatprep.subr.mxu0 %v138
    %1319 = vmatpush1.msra.mxu0 %v137
    %1320 = vmatprep.subr.mxu0 %v133
    %1321 = vmatpush1.msra.mxu0 %v132
    %1322 = vmatprep.subr.mxu0 %v128
    %1323 = vmatpush1.msra.mxu0 %v127
    %1324 = vmatprep.subr.mxu0 %v123
    %1325 = vmatpush1.msra.mxu0 %v122
    %1326 = vmatprep.subr.mxu0 %v118
    %1327 = vmatpush1.msra.mxu0 %v117
    %1328 = vmatprep.subr.mxu0 %v113
    %1329 = vmatpush1.msra.mxu0 %v112
    %1330 = vmatprep.subr.mxu0 %v108
    %1331 = vmatpush1.msra.mxu0 %v107
    %1332 = vmatprep.subr.mxu0 %v103
    %1333 = vmatpush1.msra.mxu0 %v102
    %1334 = vmatprep.subr.mxu0 %v98
    %1335 = vmatpush1.msra.mxu0 %v97
    %1336 = vmatprep.subr.mxu0 %v93
    %1337 = vmatpush1.msra.mxu0 %v92
    %1338 = vmatprep.subr.mxu0 %v88
    %1339 = vmatpush1.msra.mxu0 %v87
    %1340 = vmatprep.subr.mxu0 %v83
    %1341 = vmatpush1.msra.mxu0 %v82
    %1342 = vmatprep.subr.mxu0 %v78
    %1343 = vmatpush1.msra.mxu0 %v77
    %1344 = vmatprep.subr.mxu0 0.0
    %1345 = vmatpush2.msra.mxu0 0.0
    %1346 = vmatprep.subr.mxu0 0.0
    %1347 = vmatpush2.msra.mxu0 0.0
    %1348 = vmatprep.subr.mxu0 0.0
    %1349 = vmatpush2.msra.mxu0 0.0
    %1350 = vmatprep.subr.mxu0 0.0
    %1351 = vmatpush2.msra.mxu0 0.0
    %1352 = vmatprep.subr.mxu0 0.0
    %1353 = vmatpush2.msra.mxu0 0.0
    %1354 = vmatprep.subr.mxu0 0.0
    %1355 = vmatpush2.msra.mxu0 0.0
    %1356 = vmatprep.subr.mxu0 0.0
    %1357 = vmatpush2.msra.mxu0 0.0
    %1358 = vmatprep.subr.mxu0 0.0
    %1359 = vmatpush2.msra.mxu0 0.0
    %1360 = vmatprep.subr.mxu0 0.0
    %1361 = vmatpush2.msra.mxu0 0.0
    %1362 = vmatprep.subr.mxu0 0.0
    %1363 = vmatpush2.msra.mxu0 0.0
    %1364 = vmatprep.subr.mxu0 0.0
    %1365 = vmatpush2.msra.mxu0 0.0
    %1366 = vmatprep.subr.mxu0 0.0
    %1367 = vmatpush2.msra.mxu0 0.0
    %1368 = vmatprep.subr.mxu0 0.0
    %1369 = vmatpush2.msra.mxu0 0.0
    %1370 = vmatprep.subr.mxu0 0.0
    %1371 = vmatpush2.msra.mxu0 0.0
    %1372 = vmatprep.subr.mxu0 0.0
    %1373 = vmatpush2.msra.mxu0 0.0
    %1374 = vmatprep.subr.mxu0 0.0
    %1375 = vmatpush2.msra.mxu0 0.0
    %1376 = vmatprep.mubr.f32.mxu0 0.0
    %1377 = vmatmul.mubr.f32.gmra.mxu0 %v1240
    %v1378 = vpop.f32.mrf.mxu0
    %v1379 = vadd.f32 0.0, %v1378
    %v1380 = vpop.f32.mrf.mxu0
    %v1381 = vadd.f32 0.0, %v1380
    %1382 = vdwg.mxu0
    %1383 = vmatprep.subr.mxu0 0.0
    %1384 = vmatpush1.msra.mxu0 %v154
    %1385 = vmatprep.subr.mxu0 0.0
    %1386 = vmatpush1.msra.mxu0 %v149
    %1387 = vmatprep.subr.mxu0 0.0
    %1388 = vmatpush1.msra.mxu0 %v144
    %1389 = vmatprep.subr.mxu0 0.0
    %1390 = vmatpush1.msra.mxu0 %v139
    %1391 = vmatprep.subr.mxu0 0.0
    %1392 = vmatpush1.msra.mxu0 %v134
    %1393 = vmatprep.subr.mxu0 0.0
    %1394 = vmatpush1.msra.mxu0 %v129
    %1395 = vmatprep.subr.mxu0 0.0
    %1396 = vmatpush1.msra.mxu0 %v124
    %1397 = vmatprep.subr.mxu0 0.0
    %1398 = vmatpush1.msra.mxu0 %v119
    %1399 = vmatprep.subr.mxu0 0.0
    %1400 = vmatpush1.msra.mxu0 %v114
    %1401 = vmatprep.subr.mxu0 0.0
    %1402 = vmatpush1.msra.mxu0 %v109
    %1403 = vmatprep.subr.mxu0 0.0
    %1404 = vmatpush1.msra.mxu0 %v104
    %1405 = vmatprep.subr.mxu0 0.0
    %1406 = vmatpush1.msra.mxu0 %v99
    %1407 = vmatprep.subr.mxu0 0.0
    %1408 = vmatpush1.msra.mxu0 %v94
    %1409 = vmatprep.subr.mxu0 0.0
    %1410 = vmatpush1.msra.mxu0 %v89
    %1411 = vmatprep.subr.mxu0 0.0
    %1412 = vmatpush1.msra.mxu0 %v84
    %1413 = vmatprep.subr.mxu0 0.0
    %1414 = vmatpush1.msra.mxu0 %v79
    %1415 = vmatprep.subr.mxu0 0.0
    %1416 = vmatpush2.msra.mxu0 0.0
    %1417 = vmatprep.subr.mxu0 0.0
    %1418 = vmatpush2.msra.mxu0 0.0
    %1419 = vmatprep.subr.mxu0 0.0
    %1420 = vmatpush2.msra.mxu0 0.0
    %1421 = vmatprep.subr.mxu0 0.0
    %1422 = vmatpush2.msra.mxu0 0.0
    %1423 = vmatprep.subr.mxu0 0.0
    %1424 = vmatpush2.msra.mxu0 0.0
    %1425 = vmatprep.subr.mxu0 0.0
    %1426 = vmatpush2.msra.mxu0 0.0
    %1427 = vmatprep.subr.mxu0 0.0
    %1428 = vmatpush2.msra.mxu0 0.0
    %1429 = vmatprep.subr.mxu0 0.0
    %1430 = vmatpush2.msra.mxu0 0.0
    %1431 = vmatprep.subr.mxu0 0.0
    %1432 = vmatpush2.msra.mxu0 0.0
    %1433 = vmatprep.subr.mxu0 0.0
    %1434 = vmatpush2.msra.mxu0 0.0
    %1435 = vmatprep.subr.mxu0 0.0
    %1436 = vmatpush2.msra.mxu0 0.0
    %1437 = vmatprep.subr.mxu0 0.0
    %1438 = vmatpush2.msra.mxu0 0.0
    %1439 = vmatprep.subr.mxu0 0.0
    %1440 = vmatpush2.msra.mxu0 0.0
    %1441 = vmatprep.subr.mxu0 0.0
    %1442 = vmatpush2.msra.mxu0 0.0
    %1443 = vmatprep.subr.mxu0 0.0
    %1444 = vmatpush2.msra.mxu0 0.0
    %1445 = vmatprep.subr.mxu0 0.0
    %1446 = vmatpush2.msra.mxu0 0.0
    %1447 = vmatprep.mubr.f32.mxu0 0.0
    %1448 = vmatmul.mubr.f32.gmra.mxu0 %v1240
    %v1449 = vpop.f32.mrf.mxu0
    %v1450 = vadd.f32 0.0, %v1449
    %v1451 = vpop.f32.mrf.mxu0
    %1452 = vdwg.mxu0
    %v1453 = vsel %vm449, %v1450, -1e+30
    %v1454 = vsel %vm663, %v1453, -inf
    %1455 = vmax.xlane.f32.xlu0 %v1454
    %v1456 = vpop.xlane.xlu0 %1455
    %v1457 = vsub.f32 %v1453, %v1456
    %v1458 = vmul.f32 %v1457, 1.442695
    %v1459 = vpow.pop %v1458
    %v1460 = vsel %vm663, %v1459, 0.0
    %1461 = vadd.xlane.f32.xlu0 %v1460
    %v1462 = vpop.xlane.xlu0 %1461
    %v1463 = vrcp.pop %v1462
    %v1464 = vmul.f32 %v1459, %v1463
    %1465 = vmatprep.subr.mxu0 %v216
    %1466 = vmatpush1.msra.mxu0 %v215
    %1467 = vmatprep.subr.mxu0 %v212
    %1468 = vmatpush1.msra.mxu0 %v211
    %1469 = vmatprep.subr.mxu0 %v208
    %1470 = vmatpush1.msra.mxu0 %v207
    %1471 = vmatprep.subr.mxu0 %v204
    %1472 = vmatpush1.msra.mxu0 %v203
    %1473 = vmatprep.subr.mxu0 %v200
    %1474 = vmatpush1.msra.mxu0 %v199
    %1475 = vmatprep.subr.mxu0 %v196
    %1476 = vmatpush1.msra.mxu0 %v195
    %1477 = vmatprep.subr.mxu0 %v192
    %1478 = vmatpush1.msra.mxu0 %v191
    %1479 = vmatprep.subr.mxu0 %v188
    %1480 = vmatpush1.msra.mxu0 %v187
    %1481 = vmatprep.subr.mxu0 %v184
    %1482 = vmatpush1.msra.mxu0 %v183
    %1483 = vmatprep.subr.mxu0 %v180
    %1484 = vmatpush1.msra.mxu0 %v179
    %1485 = vmatprep.subr.mxu0 %v176
    %1486 = vmatpush1.msra.mxu0 %v175
    %1487 = vmatprep.subr.mxu0 %v172
    %1488 = vmatpush1.msra.mxu0 %v171
    %1489 = vmatprep.subr.mxu0 %v168
    %1490 = vmatpush1.msra.mxu0 %v167
    %1491 = vmatprep.subr.mxu0 %v164
    %1492 = vmatpush1.msra.mxu0 %v163
    %1493 = vmatprep.subr.mxu0 %v160
    %1494 = vmatpush1.msra.mxu0 %v159
    %1495 = vmatprep.subr.mxu0 %v156
    %1496 = vmatpush1.msra.mxu0 %v155
    %1497 = vmatprep.subr.mxu0 0.0
    %1498 = vmatpush2.msra.mxu0 0.0
    %1499 = vmatprep.subr.mxu0 0.0
    %1500 = vmatpush2.msra.mxu0 0.0
    %1501 = vmatprep.subr.mxu0 0.0
    %1502 = vmatpush2.msra.mxu0 0.0
    %1503 = vmatprep.subr.mxu0 0.0
    %1504 = vmatpush2.msra.mxu0 0.0
    %1505 = vmatprep.subr.mxu0 0.0
    %1506 = vmatpush2.msra.mxu0 0.0
    %1507 = vmatprep.subr.mxu0 0.0
    %1508 = vmatpush2.msra.mxu0 0.0
    %1509 = vmatprep.subr.mxu0 0.0
    %1510 = vmatpush2.msra.mxu0 0.0
    %1511 = vmatprep.subr.mxu0 0.0
    %1512 = vmatpush2.msra.mxu0 0.0
    %1513 = vmatprep.subr.mxu0 0.0
    %1514 = vmatpush2.msra.mxu0 0.0
    %1515 = vmatprep.subr.mxu0 0.0
    %1516 = vmatpush2.msra.mxu0 0.0
    %1517 = vmatprep.subr.mxu0 0.0
    %1518 = vmatpush2.msra.mxu0 0.0
    %1519 = vmatprep.subr.mxu0 0.0
    %1520 = vmatpush2.msra.mxu0 0.0
    %1521 = vmatprep.subr.mxu0 0.0
    %1522 = vmatpush2.msra.mxu0 0.0
    %1523 = vmatprep.subr.mxu0 0.0
    %1524 = vmatpush2.msra.mxu0 0.0
    %1525 = vmatprep.subr.mxu0 0.0
    %1526 = vmatpush2.msra.mxu0 0.0
    %1527 = vmatprep.subr.mxu0 0.0
    %1528 = vmatpush2.msra.mxu0 0.0
    %1529 = vmatprep.mubr.f32.mxu0 0.0
    %1530 = vmatmul.mubr.f32.gmra.mxu0 %v1464
    %v1531 = vpop.f32.mrf.mxu0
    %v1532 = vadd.f32 %v1308, %v1531
    %v1533 = vpop.f32.mrf.mxu0
    %v1534 = vadd.f32 %v1310, %v1533
    %1535 = vdwg.mxu0
    %1536 = vmatprep.subr.mxu0 %v218
    %1537 = vmatpush1.msra.mxu0 %v217
    %1538 = vmatprep.subr.mxu0 %v214
    %1539 = vmatpush1.msra.mxu0 %v213
    %1540 = vmatprep.subr.mxu0 %v210
    %1541 = vmatpush1.msra.mxu0 %v209
    %1542 = vmatprep.subr.mxu0 %v206
    %1543 = vmatpush1.msra.mxu0 %v205
    %1544 = vmatprep.subr.mxu0 %v202
    %1545 = vmatpush1.msra.mxu0 %v201
    %1546 = vmatprep.subr.mxu0 %v198
    %1547 = vmatpush1.msra.mxu0 %v197
    %1548 = vmatprep.subr.mxu0 %v194
    %1549 = vmatpush1.msra.mxu0 %v193
    %1550 = vmatprep.subr.mxu0 %v190
    %1551 = vmatpush1.msra.mxu0 %v189
    %1552 = vmatprep.subr.mxu0 %v186
    %1553 = vmatpush1.msra.mxu0 %v185
    %1554 = vmatprep.subr.mxu0 %v182
    %1555 = vmatpush1.msra.mxu0 %v181
    %1556 = vmatprep.subr.mxu0 %v178
    %1557 = vmatpush1.msra.mxu0 %v177
    %1558 = vmatprep.subr.mxu0 %v174
    %1559 = vmatpush1.msra.mxu0 %v173
    %1560 = vmatprep.subr.mxu0 %v170
    %1561 = vmatpush1.msra.mxu0 %v169
    %1562 = vmatprep.subr.mxu0 %v166
    %1563 = vmatpush1.msra.mxu0 %v165
    %1564 = vmatprep.subr.mxu0 %v162
    %1565 = vmatpush1.msra.mxu0 %v161
    %1566 = vmatprep.subr.mxu0 %v158
    %1567 = vmatpush1.msra.mxu0 %v157
    %1568 = vmatprep.subr.mxu0 0.0
    %1569 = vmatpush2.msra.mxu0 0.0
    %1570 = vmatprep.subr.mxu0 0.0
    %1571 = vmatpush2.msra.mxu0 0.0
    %1572 = vmatprep.subr.mxu0 0.0
    %1573 = vmatpush2.msra.mxu0 0.0
    %1574 = vmatprep.subr.mxu0 0.0
    %1575 = vmatpush2.msra.mxu0 0.0
    %1576 = vmatprep.subr.mxu0 0.0
    %1577 = vmatpush2.msra.mxu0 0.0
    %1578 = vmatprep.subr.mxu0 0.0
    %1579 = vmatpush2.msra.mxu0 0.0
    %1580 = vmatprep.subr.mxu0 0.0
    %1581 = vmatpush2.msra.mxu0 0.0
    %1582 = vmatprep.subr.mxu0 0.0
    %1583 = vmatpush2.msra.mxu0 0.0
    %1584 = vmatprep.subr.mxu0 0.0
    %1585 = vmatpush2.msra.mxu0 0.0
    %1586 = vmatprep.subr.mxu0 0.0
    %1587 = vmatpush2.msra.mxu0 0.0
    %1588 = vmatprep.subr.mxu0 0.0
    %1589 = vmatpush2.msra.mxu0 0.0
    %1590 = vmatprep.subr.mxu0 0.0
    %1591 = vmatpush2.msra.mxu0 0.0
    %1592 = vmatprep.subr.mxu0 0.0
    %1593 = vmatpush2.msra.mxu0 0.0
    %1594 = vmatprep.subr.mxu0 0.0
    %1595 = vmatpush2.msra.mxu0 0.0
    %1596 = vmatprep.subr.mxu0 0.0
    %1597 = vmatpush2.msra.mxu0 0.0
    %1598 = vmatprep.subr.mxu0 0.0
    %1599 = vmatpush2.msra.mxu0 0.0
    %1600 = vmatprep.mubr.f32.mxu0 0.0
    %1601 = vmatmul.mubr.f32.gmra.mxu0 %v1464
    %v1602 = vpop.f32.mrf.mxu0
    %v1603 = vadd.f32 %v1379, %v1602
    %v1604 = vpop.f32.mrf.mxu0
    %v1605 = vadd.f32 %v1381, %v1604
    %1606 = vdwg.mxu0
    %v1607 = vadd.f32 %v1532, %v372
    %v1608 = vadd.f32 %v1534, %v374
    %v1609 = vadd.f32 %v1603, %v443
    %v1610 = vadd.f32 %v1605, %v445
    %v1611 = vxor.u32 %v1607, 2147483648
    %v1612 = vxor.u32 %v1608, 2147483648
    %v1613 = vxor.u32 %v1609, 2147483648
    %v1614 = vmul.f32 %v1611, 1.442695
    %v1615 = vpow.pop %v1614
    %v1616 = vmul.f32 %v1612, 1.442695
    %v1617 = vpow.pop %v1616
    %v1618 = vmul.f32 %v1613, 1.442695
    %v1619 = vpow.pop %v1618
    %v1620 = vadd.f32 %v1615, 1.0
    %v1621 = vadd.f32 %v1617, 1.0
    %v1622 = vadd.f32 %v1619, 1.0
    %v1623 = vrcp.pop %v1620
    %v1624 = vmul.f32 1.0, %v1623
    %v1625 = vrcp.pop %v1621
    %v1626 = vmul.f32 1.0, %v1625
    %v1627 = vrcp.pop %v1622
    %v1628 = vmul.f32 1.0, %v1627
    %v1629 = vtanh.pop %v1610
    %v1630 = vmul.f32 %v1626, %v1237
    %v1631 = vmul.f32 %v1624, %v1629
    %v1632 = vadd.f32 %v1630, %v1631
    %v1633 = vtanh.pop %v1632
    %v1634 = vmul.f32 %v1628, %v1633
    %v1635 = vadd.f32 %v1634, %v74
    %1636 = vmatprep.subr.mxu0 %v151
    %1637 = vmatpush1.msra.mxu0 %v150
    %1638 = vmatprep.subr.mxu0 %v146
    %1639 = vmatpush1.msra.mxu0 %v145
    %1640 = vmatprep.subr.mxu0 %v141
    %1641 = vmatpush1.msra.mxu0 %v140
    %1642 = vmatprep.subr.mxu0 %v136
    %1643 = vmatpush1.msra.mxu0 %v135
    %1644 = vmatprep.subr.mxu0 %v131
    %1645 = vmatpush1.msra.mxu0 %v130
    %1646 = vmatprep.subr.mxu0 %v126
    %1647 = vmatpush1.msra.mxu0 %v125
    %1648 = vmatprep.subr.mxu0 %v121
    %1649 = vmatpush1.msra.mxu0 %v120
    %1650 = vmatprep.subr.mxu0 %v116
    %1651 = vmatpush1.msra.mxu0 %v115
    %1652 = vmatprep.subr.mxu0 %v111
    %1653 = vmatpush1.msra.mxu0 %v110
    %1654 = vmatprep.subr.mxu0 %v106
    %1655 = vmatpush1.msra.mxu0 %v105
    %1656 = vmatprep.subr.mxu0 %v101
    %1657 = vmatpush1.msra.mxu0 %v100
    %1658 = vmatprep.subr.mxu0 %v96
    %1659 = vmatpush1.msra.mxu0 %v95
    %1660 = vmatprep.subr.mxu0 %v91
    %1661 = vmatpush1.msra.mxu0 %v90
    %1662 = vmatprep.subr.mxu0 %v86
    %1663 = vmatpush1.msra.mxu0 %v85
    %1664 = vmatprep.subr.mxu0 %v81
    %1665 = vmatpush1.msra.mxu0 %v80
    %1666 = vmatprep.subr.mxu0 %v76
    %1667 = vmatpush1.msra.mxu0 %v75
    %1668 = vmatprep.subr.mxu0 0.0
    %1669 = vmatpush2.msra.mxu0 0.0
    %1670 = vmatprep.subr.mxu0 0.0
    %1671 = vmatpush2.msra.mxu0 0.0
    %1672 = vmatprep.subr.mxu0 0.0
    %1673 = vmatpush2.msra.mxu0 0.0
    %1674 = vmatprep.subr.mxu0 0.0
    %1675 = vmatpush2.msra.mxu0 0.0
    %1676 = vmatprep.subr.mxu0 0.0
    %1677 = vmatpush2.msra.mxu0 0.0
    %1678 = vmatprep.subr.mxu0 0.0
    %1679 = vmatpush2.msra.mxu0 0.0
    %1680 = vmatprep.subr.mxu0 0.0
    %1681 = vmatpush2.msra.mxu0 0.0
    %1682 = vmatprep.subr.mxu0 0.0
    %1683 = vmatpush2.msra.mxu0 0.0
    %1684 = vmatprep.subr.mxu0 0.0
    %1685 = vmatpush2.msra.mxu0 0.0
    %1686 = vmatprep.subr.mxu0 0.0
    %1687 = vmatpush2.msra.mxu0 0.0
    %1688 = vmatprep.subr.mxu0 0.0
    %1689 = vmatpush2.msra.mxu0 0.0
    %1690 = vmatprep.subr.mxu0 0.0
    %1691 = vmatpush2.msra.mxu0 0.0
    %1692 = vmatprep.subr.mxu0 0.0
    %1693 = vmatpush2.msra.mxu0 0.0
    %1694 = vmatprep.subr.mxu0 0.0
    %1695 = vmatpush2.msra.mxu0 0.0
    %1696 = vmatprep.subr.mxu0 0.0
    %1697 = vmatpush2.msra.mxu0 0.0
    %1698 = vmatprep.subr.mxu0 0.0
    %1699 = vmatpush2.msra.mxu0 0.0
    %1700 = vmatprep.mubr.f32.mxu0 0.0
    %1701 = vmatmul.mubr.f32.gmra.mxu0 %v1635
    %v1702 = vpop.f32.mrf.mxu0
    %v1703 = vadd.f32 0.0, %v1702
    %v1704 = vpop.f32.mrf.mxu0
    %v1705 = vadd.f32 0.0, %v1704
    %1706 = vdwg.mxu0
    %1707 = vmatprep.subr.mxu0 %v153
    %1708 = vmatpush1.msra.mxu0 %v152
    %1709 = vmatprep.subr.mxu0 %v148
    %1710 = vmatpush1.msra.mxu0 %v147
    %1711 = vmatprep.subr.mxu0 %v143
    %1712 = vmatpush1.msra.mxu0 %v142
    %1713 = vmatprep.subr.mxu0 %v138
    %1714 = vmatpush1.msra.mxu0 %v137
    %1715 = vmatprep.subr.mxu0 %v133
    %1716 = vmatpush1.msra.mxu0 %v132
    %1717 = vmatprep.subr.mxu0 %v128
    %1718 = vmatpush1.msra.mxu0 %v127
    %1719 = vmatprep.subr.mxu0 %v123
    %1720 = vmatpush1.msra.mxu0 %v122
    %1721 = vmatprep.subr.mxu0 %v118
    %1722 = vmatpush1.msra.mxu0 %v117
    %1723 = vmatprep.subr.mxu0 %v113
    %1724 = vmatpush1.msra.mxu0 %v112
    %1725 = vmatprep.subr.mxu0 %v108
    %1726 = vmatpush1.msra.mxu0 %v107
    %1727 = vmatprep.subr.mxu0 %v103
    %1728 = vmatpush1.msra.mxu0 %v102
    %1729 = vmatprep.subr.mxu0 %v98
    %1730 = vmatpush1.msra.mxu0 %v97
    %1731 = vmatprep.subr.mxu0 %v93
    %1732 = vmatpush1.msra.mxu0 %v92
    %1733 = vmatprep.subr.mxu0 %v88
    %1734 = vmatpush1.msra.mxu0 %v87
    %1735 = vmatprep.subr.mxu0 %v83
    %1736 = vmatpush1.msra.mxu0 %v82
    %1737 = vmatprep.subr.mxu0 %v78
    %1738 = vmatpush1.msra.mxu0 %v77
    %1739 = vmatprep.subr.mxu0 0.0
    %1740 = vmatpush2.msra.mxu0 0.0
    %1741 = vmatprep.subr.mxu0 0.0
    %1742 = vmatpush2.msra.mxu0 0.0
    %1743 = vmatprep.subr.mxu0 0.0
    %1744 = vmatpush2.msra.mxu0 0.0
    %1745 = vmatprep.subr.mxu0 0.0
    %1746 = vmatpush2.msra.mxu0 0.0
    %1747 = vmatprep.subr.mxu0 0.0
    %1748 = vmatpush2.msra.mxu0 0.0
    %1749 = vmatprep.subr.mxu0 0.0
    %1750 = vmatpush2.msra.mxu0 0.0
    %1751 = vmatprep.subr.mxu0 0.0
    %1752 = vmatpush2.msra.mxu0 0.0
    %1753 = vmatprep.subr.mxu0 0.0
    %1754 = vmatpush2.msra.mxu0 0.0
    %1755 = vmatprep.subr.mxu0 0.0
    %1756 = vmatpush2.msra.mxu0 0.0
    %1757 = vmatprep.subr.mxu0 0.0
    %1758 = vmatpush2.msra.mxu0 0.0
    %1759 = vmatprep.subr.mxu0 0.0
    %1760 = vmatpush2.msra.mxu0 0.0
    %1761 = vmatprep.subr.mxu0 0.0
    %1762 = vmatpush2.msra.mxu0 0.0
    %1763 = vmatprep.subr.mxu0 0.0
    %1764 = vmatpush2.msra.mxu0 0.0
    %1765 = vmatprep.subr.mxu0 0.0
    %1766 = vmatpush2.msra.mxu0 0.0
    %1767 = vmatprep.subr.mxu0 0.0
    %1768 = vmatpush2.msra.mxu0 0.0
    %1769 = vmatprep.subr.mxu0 0.0
    %1770 = vmatpush2.msra.mxu0 0.0
    %1771 = vmatprep.mubr.f32.mxu0 0.0
    %1772 = vmatmul.mubr.f32.gmra.mxu0 %v1635
    %v1773 = vpop.f32.mrf.mxu0
    %v1774 = vadd.f32 0.0, %v1773
    %v1775 = vpop.f32.mrf.mxu0
    %v1776 = vadd.f32 0.0, %v1775
    %1777 = vdwg.mxu0
    %1778 = vmatprep.subr.mxu0 0.0
    %1779 = vmatpush1.msra.mxu0 %v154
    %1780 = vmatprep.subr.mxu0 0.0
    %1781 = vmatpush1.msra.mxu0 %v149
    %1782 = vmatprep.subr.mxu0 0.0
    %1783 = vmatpush1.msra.mxu0 %v144
    %1784 = vmatprep.subr.mxu0 0.0
    %1785 = vmatpush1.msra.mxu0 %v139
    %1786 = vmatprep.subr.mxu0 0.0
    %1787 = vmatpush1.msra.mxu0 %v134
    %1788 = vmatprep.subr.mxu0 0.0
    %1789 = vmatpush1.msra.mxu0 %v129
    %1790 = vmatprep.subr.mxu0 0.0
    %1791 = vmatpush1.msra.mxu0 %v124
    %1792 = vmatprep.subr.mxu0 0.0
    %1793 = vmatpush1.msra.mxu0 %v119
    %1794 = vmatprep.subr.mxu0 0.0
    %1795 = vmatpush1.msra.mxu0 %v114
    %1796 = vmatprep.subr.mxu0 0.0
    %1797 = vmatpush1.msra.mxu0 %v109
    %1798 = vmatprep.subr.mxu0 0.0
    %1799 = vmatpush1.msra.mxu0 %v104
    %1800 = vmatprep.subr.mxu0 0.0
    %1801 = vmatpush1.msra.mxu0 %v99
    %1802 = vmatprep.subr.mxu0 0.0
    %1803 = vmatpush1.msra.mxu0 %v94
    %1804 = vmatprep.subr.mxu0 0.0
    %1805 = vmatpush1.msra.mxu0 %v89
    %1806 = vmatprep.subr.mxu0 0.0
    %1807 = vmatpush1.msra.mxu0 %v84
    %1808 = vmatprep.subr.mxu0 0.0
    %1809 = vmatpush1.msra.mxu0 %v79
    %1810 = vmatprep.subr.mxu0 0.0
    %1811 = vmatpush2.msra.mxu0 0.0
    %1812 = vmatprep.subr.mxu0 0.0
    %1813 = vmatpush2.msra.mxu0 0.0
    %1814 = vmatprep.subr.mxu0 0.0
    %1815 = vmatpush2.msra.mxu0 0.0
    %1816 = vmatprep.subr.mxu0 0.0
    %1817 = vmatpush2.msra.mxu0 0.0
    %1818 = vmatprep.subr.mxu0 0.0
    %1819 = vmatpush2.msra.mxu0 0.0
    %1820 = vmatprep.subr.mxu0 0.0
    %1821 = vmatpush2.msra.mxu0 0.0
    %1822 = vmatprep.subr.mxu0 0.0
    %1823 = vmatpush2.msra.mxu0 0.0
    %1824 = vmatprep.subr.mxu0 0.0
    %1825 = vmatpush2.msra.mxu0 0.0
    %1826 = vmatprep.subr.mxu0 0.0
    %1827 = vmatpush2.msra.mxu0 0.0
    %1828 = vmatprep.subr.mxu0 0.0
    %1829 = vmatpush2.msra.mxu0 0.0
    %1830 = vmatprep.subr.mxu0 0.0
    %1831 = vmatpush2.msra.mxu0 0.0
    %1832 = vmatprep.subr.mxu0 0.0
    %1833 = vmatpush2.msra.mxu0 0.0
    %1834 = vmatprep.subr.mxu0 0.0
    %1835 = vmatpush2.msra.mxu0 0.0
    %1836 = vmatprep.subr.mxu0 0.0
    %1837 = vmatpush2.msra.mxu0 0.0
    %1838 = vmatprep.subr.mxu0 0.0
    %1839 = vmatpush2.msra.mxu0 0.0
    %1840 = vmatprep.subr.mxu0 0.0
    %1841 = vmatpush2.msra.mxu0 0.0
    %1842 = vmatprep.mubr.f32.mxu0 0.0
    %1843 = vmatmul.mubr.f32.gmra.mxu0 %v1635
    %v1844 = vpop.f32.mrf.mxu0
    %v1845 = vadd.f32 0.0, %v1844
    %v1846 = vpop.f32.mrf.mxu0
    %1847 = vdwg.mxu0
    %v1848 = vsel %vm449, %v1845, -1e+30
    %v1849 = vsel %vm663, %v1848, -inf
    %1850 = vmax.xlane.f32.xlu0 %v1849
    %v1851 = vpop.xlane.xlu0 %1850
    %v1852 = vsub.f32 %v1848, %v1851
    %v1853 = vmul.f32 %v1852, 1.442695
    %v1854 = vpow.pop %v1853
    %v1855 = vsel %vm663, %v1854, 0.0
    %1856 = vadd.xlane.f32.xlu0 %v1855
    %v1857 = vpop.xlane.xlu0 %1856
    %v1858 = vrcp.pop %v1857
    %v1859 = vmul.f32 %v1854, %v1858
    %1860 = vmatprep.subr.mxu0 %v216
    %1861 = vmatpush1.msra.mxu0 %v215
    %1862 = vmatprep.subr.mxu0 %v212
    %1863 = vmatpush1.msra.mxu0 %v211
    %1864 = vmatprep.subr.mxu0 %v208
    %1865 = vmatpush1.msra.mxu0 %v207
    %1866 = vmatprep.subr.mxu0 %v204
    %1867 = vmatpush1.msra.mxu0 %v203
    %1868 = vmatprep.subr.mxu0 %v200
    %1869 = vmatpush1.msra.mxu0 %v199
    %1870 = vmatprep.subr.mxu0 %v196
    %1871 = vmatpush1.msra.mxu0 %v195
    %1872 = vmatprep.subr.mxu0 %v192
    %1873 = vmatpush1.msra.mxu0 %v191
    %1874 = vmatprep.subr.mxu0 %v188
    %1875 = vmatpush1.msra.mxu0 %v187
    %1876 = vmatprep.subr.mxu0 %v184
    %1877 = vmatpush1.msra.mxu0 %v183
    %1878 = vmatprep.subr.mxu0 %v180
    %1879 = vmatpush1.msra.mxu0 %v179
    %1880 = vmatprep.subr.mxu0 %v176
    %1881 = vmatpush1.msra.mxu0 %v175
    %1882 = vmatprep.subr.mxu0 %v172
    %1883 = vmatpush1.msra.mxu0 %v171
    %1884 = vmatprep.subr.mxu0 %v168
    %1885 = vmatpush1.msra.mxu0 %v167
    %1886 = vmatprep.subr.mxu0 %v164
    %1887 = vmatpush1.msra.mxu0 %v163
    %1888 = vmatprep.subr.mxu0 %v160
    %1889 = vmatpush1.msra.mxu0 %v159
    %1890 = vmatprep.subr.mxu0 %v156
    %1891 = vmatpush1.msra.mxu0 %v155
    %1892 = vmatprep.subr.mxu0 0.0
    %1893 = vmatpush2.msra.mxu0 0.0
    %1894 = vmatprep.subr.mxu0 0.0
    %1895 = vmatpush2.msra.mxu0 0.0
    %1896 = vmatprep.subr.mxu0 0.0
    %1897 = vmatpush2.msra.mxu0 0.0
    %1898 = vmatprep.subr.mxu0 0.0
    %1899 = vmatpush2.msra.mxu0 0.0
    %1900 = vmatprep.subr.mxu0 0.0
    %1901 = vmatpush2.msra.mxu0 0.0
    %1902 = vmatprep.subr.mxu0 0.0
    %1903 = vmatpush2.msra.mxu0 0.0
    %1904 = vmatprep.subr.mxu0 0.0
    %1905 = vmatpush2.msra.mxu0 0.0
    %1906 = vmatprep.subr.mxu0 0.0
    %1907 = vmatpush2.msra.mxu0 0.0
    %1908 = vmatprep.subr.mxu0 0.0
    %1909 = vmatpush2.msra.mxu0 0.0
    %1910 = vmatprep.subr.mxu0 0.0
    %1911 = vmatpush2.msra.mxu0 0.0
    %1912 = vmatprep.subr.mxu0 0.0
    %1913 = vmatpush2.msra.mxu0 0.0
    %1914 = vmatprep.subr.mxu0 0.0
    %1915 = vmatpush2.msra.mxu0 0.0
    %1916 = vmatprep.subr.mxu0 0.0
    %1917 = vmatpush2.msra.mxu0 0.0
    %1918 = vmatprep.subr.mxu0 0.0
    %1919 = vmatpush2.msra.mxu0 0.0
    %1920 = vmatprep.subr.mxu0 0.0
    %1921 = vmatpush2.msra.mxu0 0.0
    %1922 = vmatprep.subr.mxu0 0.0
    %1923 = vmatpush2.msra.mxu0 0.0
    %1924 = vmatprep.mubr.f32.mxu0 0.0
    %1925 = vmatmul.mubr.f32.gmra.mxu0 %v1859
    %v1926 = vpop.f32.mrf.mxu0
    %v1927 = vadd.f32 %v1703, %v1926
    %v1928 = vpop.f32.mrf.mxu0
    %v1929 = vadd.f32 %v1705, %v1928
    %1930 = vdwg.mxu0
    %1931 = vmatprep.subr.mxu0 %v218
    %1932 = vmatpush1.msra.mxu0 %v217
    %1933 = vmatprep.subr.mxu0 %v214
    %1934 = vmatpush1.msra.mxu0 %v213
    %1935 = vmatprep.subr.mxu0 %v210
    %1936 = vmatpush1.msra.mxu0 %v209
    %1937 = vmatprep.subr.mxu0 %v206
    %1938 = vmatpush1.msra.mxu0 %v205
    %1939 = vmatprep.subr.mxu0 %v202
    %1940 = vmatpush1.msra.mxu0 %v201
    %1941 = vmatprep.subr.mxu0 %v198
    %1942 = vmatpush1.msra.mxu0 %v197
    %1943 = vmatprep.subr.mxu0 %v194
    %1944 = vmatpush1.msra.mxu0 %v193
    %1945 = vmatprep.subr.mxu0 %v190
    %1946 = vmatpush1.msra.mxu0 %v189
    %1947 = vmatprep.subr.mxu0 %v186
    %1948 = vmatpush1.msra.mxu0 %v185
    %1949 = vmatprep.subr.mxu0 %v182
    %1950 = vmatpush1.msra.mxu0 %v181
    %1951 = vmatprep.subr.mxu0 %v178
    %1952 = vmatpush1.msra.mxu0 %v177
    %1953 = vmatprep.subr.mxu0 %v174
    %1954 = vmatpush1.msra.mxu0 %v173
    %1955 = vmatprep.subr.mxu0 %v170
    %1956 = vmatpush1.msra.mxu0 %v169
    %1957 = vmatprep.subr.mxu0 %v166
    %1958 = vmatpush1.msra.mxu0 %v165
    %1959 = vmatprep.subr.mxu0 %v162
    %1960 = vmatpush1.msra.mxu0 %v161
    %1961 = vmatprep.subr.mxu0 %v158
    %1962 = vmatpush1.msra.mxu0 %v157
    %1963 = vmatprep.subr.mxu0 0.0
    %1964 = vmatpush2.msra.mxu0 0.0
    %1965 = vmatprep.subr.mxu0 0.0
    %1966 = vmatpush2.msra.mxu0 0.0
    %1967 = vmatprep.subr.mxu0 0.0
    %1968 = vmatpush2.msra.mxu0 0.0
    %1969 = vmatprep.subr.mxu0 0.0
    %1970 = vmatpush2.msra.mxu0 0.0
    %1971 = vmatprep.subr.mxu0 0.0
    %1972 = vmatpush2.msra.mxu0 0.0
    %1973 = vmatprep.subr.mxu0 0.0
    %1974 = vmatpush2.msra.mxu0 0.0
    %1975 = vmatprep.subr.mxu0 0.0
    %1976 = vmatpush2.msra.mxu0 0.0
    %1977 = vmatprep.subr.mxu0 0.0
    %1978 = vmatpush2.msra.mxu0 0.0
    %1979 = vmatprep.subr.mxu0 0.0
    %1980 = vmatpush2.msra.mxu0 0.0
    %1981 = vmatprep.subr.mxu0 0.0
    %1982 = vmatpush2.msra.mxu0 0.0
    %1983 = vmatprep.subr.mxu0 0.0
    %1984 = vmatpush2.msra.mxu0 0.0
    %1985 = vmatprep.subr.mxu0 0.0
    %1986 = vmatpush2.msra.mxu0 0.0
    %1987 = vmatprep.subr.mxu0 0.0
    %1988 = vmatpush2.msra.mxu0 0.0
    %1989 = vmatprep.subr.mxu0 0.0
    %1990 = vmatpush2.msra.mxu0 0.0
    %1991 = vmatprep.subr.mxu0 0.0
    %1992 = vmatpush2.msra.mxu0 0.0
    %1993 = vmatprep.subr.mxu0 0.0
    %1994 = vmatpush2.msra.mxu0 0.0
    %1995 = vmatprep.mubr.f32.mxu0 0.0
    %1996 = vmatmul.mubr.f32.gmra.mxu0 %v1859
    %v1997 = vpop.f32.mrf.mxu0
    %v1998 = vadd.f32 %v1774, %v1997
    %v1999 = vpop.f32.mrf.mxu0
    %v2000 = vadd.f32 %v1776, %v1999
    %2001 = vdwg.mxu0
    %v2002 = vadd.f32 %v1927, %v372
    %v2003 = vadd.f32 %v1929, %v374
    %v2004 = vadd.f32 %v1998, %v443
    %v2005 = vadd.f32 %v2000, %v445
    %v2006 = vxor.u32 %v2002, 2147483648
    %v2007 = vxor.u32 %v2003, 2147483648
    %v2008 = vxor.u32 %v2004, 2147483648
    %v2009 = vmul.f32 %v2006, 1.442695
    %v2010 = vpow.pop %v2009
    %v2011 = vmul.f32 %v2007, 1.442695
    %v2012 = vpow.pop %v2011
    %v2013 = vmul.f32 %v2008, 1.442695
    %v2014 = vpow.pop %v2013
    %v2015 = vadd.f32 %v2010, 1.0
    %v2016 = vadd.f32 %v2012, 1.0
    %v2017 = vadd.f32 %v2014, 1.0
    %v2018 = vrcp.pop %v2015
    %v2019 = vmul.f32 1.0, %v2018
    %v2020 = vrcp.pop %v2016
    %v2021 = vmul.f32 1.0, %v2020
    %v2022 = vrcp.pop %v2017
    %v2023 = vmul.f32 1.0, %v2022
    %v2024 = vtanh.pop %v2005
    %v2025 = vmul.f32 %v2021, %v1632
    %v2026 = vmul.f32 %v2019, %v2024
    %v2027 = vadd.f32 %v2025, %v2026
    %v2028 = vtanh.pop %v2027
    %v2029 = vmul.f32 %v2023, %v2028
    %v2030 = vadd.f32 %v2029, %v74
    %2031 = vmatprep.subr.mxu0 %v151
    %2032 = vmatpush1.msra.mxu0 %v150
    %2033 = vmatprep.subr.mxu0 %v146
    %2034 = vmatpush1.msra.mxu0 %v145
    %2035 = vmatprep.subr.mxu0 %v141
    %2036 = vmatpush1.msra.mxu0 %v140
    %2037 = vmatprep.subr.mxu0 %v136
    %2038 = vmatpush1.msra.mxu0 %v135
    %2039 = vmatprep.subr.mxu0 %v131
    %2040 = vmatpush1.msra.mxu0 %v130
    %2041 = vmatprep.subr.mxu0 %v126
    %2042 = vmatpush1.msra.mxu0 %v125
    %2043 = vmatprep.subr.mxu0 %v121
    %2044 = vmatpush1.msra.mxu0 %v120
    %2045 = vmatprep.subr.mxu0 %v116
    %2046 = vmatpush1.msra.mxu0 %v115
    %2047 = vmatprep.subr.mxu0 %v111
    %2048 = vmatpush1.msra.mxu0 %v110
    %2049 = vmatprep.subr.mxu0 %v106
    %2050 = vmatpush1.msra.mxu0 %v105
    %2051 = vmatprep.subr.mxu0 %v101
    %2052 = vmatpush1.msra.mxu0 %v100
    %2053 = vmatprep.subr.mxu0 %v96
    %2054 = vmatpush1.msra.mxu0 %v95
    %2055 = vmatprep.subr.mxu0 %v91
    %2056 = vmatpush1.msra.mxu0 %v90
    %2057 = vmatprep.subr.mxu0 %v86
    %2058 = vmatpush1.msra.mxu0 %v85
    %2059 = vmatprep.subr.mxu0 %v81
    %2060 = vmatpush1.msra.mxu0 %v80
    %2061 = vmatprep.subr.mxu0 %v76
    %2062 = vmatpush1.msra.mxu0 %v75
    %2063 = vmatprep.subr.mxu0 0.0
    %2064 = vmatpush2.msra.mxu0 0.0
    %2065 = vmatprep.subr.mxu0 0.0
    %2066 = vmatpush2.msra.mxu0 0.0
    %2067 = vmatprep.subr.mxu0 0.0
    %2068 = vmatpush2.msra.mxu0 0.0
    %2069 = vmatprep.subr.mxu0 0.0
    %2070 = vmatpush2.msra.mxu0 0.0
    %2071 = vmatprep.subr.mxu0 0.0
    %2072 = vmatpush2.msra.mxu0 0.0
    %2073 = vmatprep.subr.mxu0 0.0
    %2074 = vmatpush2.msra.mxu0 0.0
    %2075 = vmatprep.subr.mxu0 0.0
    %2076 = vmatpush2.msra.mxu0 0.0
    %2077 = vmatprep.subr.mxu0 0.0
    %2078 = vmatpush2.msra.mxu0 0.0
    %2079 = vmatprep.subr.mxu0 0.0
    %2080 = vmatpush2.msra.mxu0 0.0
    %2081 = vmatprep.subr.mxu0 0.0
    %2082 = vmatpush2.msra.mxu0 0.0
    %2083 = vmatprep.subr.mxu0 0.0
    %2084 = vmatpush2.msra.mxu0 0.0
    %2085 = vmatprep.subr.mxu0 0.0
    %2086 = vmatpush2.msra.mxu0 0.0
    %2087 = vmatprep.subr.mxu0 0.0
    %2088 = vmatpush2.msra.mxu0 0.0
    %2089 = vmatprep.subr.mxu0 0.0
    %2090 = vmatpush2.msra.mxu0 0.0
    %2091 = vmatprep.subr.mxu0 0.0
    %2092 = vmatpush2.msra.mxu0 0.0
    %2093 = vmatprep.subr.mxu0 0.0
    %2094 = vmatpush2.msra.mxu0 0.0
    %2095 = vmatprep.mubr.f32.mxu0 0.0
    %2096 = vmatmul.mubr.f32.gmra.mxu0 %v2030
    %v2097 = vpop.f32.mrf.mxu0
    %v2098 = vadd.f32 0.0, %v2097
    %v2099 = vpop.f32.mrf.mxu0
    %v2100 = vadd.f32 0.0, %v2099
    %2101 = vdwg.mxu0
    %2102 = vmatprep.subr.mxu0 %v153
    %2103 = vmatpush1.msra.mxu0 %v152
    %2104 = vmatprep.subr.mxu0 %v148
    %2105 = vmatpush1.msra.mxu0 %v147
    %2106 = vmatprep.subr.mxu0 %v143
    %2107 = vmatpush1.msra.mxu0 %v142
    %2108 = vmatprep.subr.mxu0 %v138
    %2109 = vmatpush1.msra.mxu0 %v137
    %2110 = vmatprep.subr.mxu0 %v133
    %2111 = vmatpush1.msra.mxu0 %v132
    %2112 = vmatprep.subr.mxu0 %v128
    %2113 = vmatpush1.msra.mxu0 %v127
    %2114 = vmatprep.subr.mxu0 %v123
    %2115 = vmatpush1.msra.mxu0 %v122
    %2116 = vmatprep.subr.mxu0 %v118
    %2117 = vmatpush1.msra.mxu0 %v117
    %2118 = vmatprep.subr.mxu0 %v113
    %2119 = vmatpush1.msra.mxu0 %v112
    %2120 = vmatprep.subr.mxu0 %v108
    %2121 = vmatpush1.msra.mxu0 %v107
    %2122 = vmatprep.subr.mxu0 %v103
    %2123 = vmatpush1.msra.mxu0 %v102
    %2124 = vmatprep.subr.mxu0 %v98
    %2125 = vmatpush1.msra.mxu0 %v97
    %2126 = vmatprep.subr.mxu0 %v93
    %2127 = vmatpush1.msra.mxu0 %v92
    %2128 = vmatprep.subr.mxu0 %v88
    %2129 = vmatpush1.msra.mxu0 %v87
    %2130 = vmatprep.subr.mxu0 %v83
    %2131 = vmatpush1.msra.mxu0 %v82
    %2132 = vmatprep.subr.mxu0 %v78
    %2133 = vmatpush1.msra.mxu0 %v77
    %2134 = vmatprep.subr.mxu0 0.0
    %2135 = vmatpush2.msra.mxu0 0.0
    %2136 = vmatprep.subr.mxu0 0.0
    %2137 = vmatpush2.msra.mxu0 0.0
    %2138 = vmatprep.subr.mxu0 0.0
    %2139 = vmatpush2.msra.mxu0 0.0
    %2140 = vmatprep.subr.mxu0 0.0
    %2141 = vmatpush2.msra.mxu0 0.0
    %2142 = vmatprep.subr.mxu0 0.0
    %2143 = vmatpush2.msra.mxu0 0.0
    %2144 = vmatprep.subr.mxu0 0.0
    %2145 = vmatpush2.msra.mxu0 0.0
    %2146 = vmatprep.subr.mxu0 0.0
    %2147 = vmatpush2.msra.mxu0 0.0
    %2148 = vmatprep.subr.mxu0 0.0
    %2149 = vmatpush2.msra.mxu0 0.0
    %2150 = vmatprep.subr.mxu0 0.0
    %2151 = vmatpush2.msra.mxu0 0.0
    %2152 = vmatprep.subr.mxu0 0.0
    %2153 = vmatpush2.msra.mxu0 0.0
    %2154 = vmatprep.subr.mxu0 0.0
    %2155 = vmatpush2.msra.mxu0 0.0
    %2156 = vmatprep.subr.mxu0 0.0
    %2157 = vmatpush2.msra.mxu0 0.0
    %2158 = vmatprep.subr.mxu0 0.0
    %2159 = vmatpush2.msra.mxu0 0.0
    %2160 = vmatprep.subr.mxu0 0.0
    %2161 = vmatpush2.msra.mxu0 0.0
    %2162 = vmatprep.subr.mxu0 0.0
    %2163 = vmatpush2.msra.mxu0 0.0
    %2164 = vmatprep.subr.mxu0 0.0
    %2165 = vmatpush2.msra.mxu0 0.0
    %2166 = vmatprep.mubr.f32.mxu0 0.0
    %2167 = vmatmul.mubr.f32.gmra.mxu0 %v2030
    %v2168 = vpop.f32.mrf.mxu0
    %v2169 = vadd.f32 0.0, %v2168
    %v2170 = vpop.f32.mrf.mxu0
    %v2171 = vadd.f32 0.0, %v2170
    %2172 = vdwg.mxu0
    %2173 = vmatprep.subr.mxu0 0.0
    %2174 = vmatpush1.msra.mxu0 %v154
    %2175 = vmatprep.subr.mxu0 0.0
    %2176 = vmatpush1.msra.mxu0 %v149
    %2177 = vmatprep.subr.mxu0 0.0
    %2178 = vmatpush1.msra.mxu0 %v144
    %2179 = vmatprep.subr.mxu0 0.0
    %2180 = vmatpush1.msra.mxu0 %v139
    %2181 = vmatprep.subr.mxu0 0.0
    %2182 = vmatpush1.msra.mxu0 %v134
    %2183 = vmatprep.subr.mxu0 0.0
    %2184 = vmatpush1.msra.mxu0 %v129
    %2185 = vmatprep.subr.mxu0 0.0
    %2186 = vmatpush1.msra.mxu0 %v124
    %2187 = vmatprep.subr.mxu0 0.0
    %2188 = vmatpush1.msra.mxu0 %v119
    %2189 = vmatprep.subr.mxu0 0.0
    %2190 = vmatpush1.msra.mxu0 %v114
    %2191 = vmatprep.subr.mxu0 0.0
    %2192 = vmatpush1.msra.mxu0 %v109
    %2193 = vmatprep.subr.mxu0 0.0
    %2194 = vmatpush1.msra.mxu0 %v104
    %2195 = vmatprep.subr.mxu0 0.0
    %2196 = vmatpush1.msra.mxu0 %v99
    %2197 = vmatprep.subr.mxu0 0.0
    %2198 = vmatpush1.msra.mxu0 %v94
    %2199 = vmatprep.subr.mxu0 0.0
    %2200 = vmatpush1.msra.mxu0 %v89
    %2201 = vmatprep.subr.mxu0 0.0
    %2202 = vmatpush1.msra.mxu0 %v84
    %2203 = vmatprep.subr.mxu0 0.0
    %2204 = vmatpush1.msra.mxu0 %v79
    %2205 = vmatprep.subr.mxu0 0.0
    %2206 = vmatpush2.msra.mxu0 0.0
    %2207 = vmatprep.subr.mxu0 0.0
    %2208 = vmatpush2.msra.mxu0 0.0
    %2209 = vmatprep.subr.mxu0 0.0
    %2210 = vmatpush2.msra.mxu0 0.0
    %2211 = vmatprep.subr.mxu0 0.0
    %2212 = vmatpush2.msra.mxu0 0.0
    %2213 = vmatprep.subr.mxu0 0.0
    %2214 = vmatpush2.msra.mxu0 0.0
    %2215 = vmatprep.subr.mxu0 0.0
    %2216 = vmatpush2.msra.mxu0 0.0
    %2217 = vmatprep.subr.mxu0 0.0
    %2218 = vmatpush2.msra.mxu0 0.0
    %2219 = vmatprep.subr.mxu0 0.0
    %2220 = vmatpush2.msra.mxu0 0.0
    %2221 = vmatprep.subr.mxu0 0.0
    %2222 = vmatpush2.msra.mxu0 0.0
    %2223 = vmatprep.subr.mxu0 0.0
    %2224 = vmatpush2.msra.mxu0 0.0
    %2225 = vmatprep.subr.mxu0 0.0
    %2226 = vmatpush2.msra.mxu0 0.0
    %2227 = vmatprep.subr.mxu0 0.0
    %2228 = vmatpush2.msra.mxu0 0.0
    %2229 = vmatprep.subr.mxu0 0.0
    %2230 = vmatpush2.msra.mxu0 0.0
    %2231 = vmatprep.subr.mxu0 0.0
    %2232 = vmatpush2.msra.mxu0 0.0
    %2233 = vmatprep.subr.mxu0 0.0
    %2234 = vmatpush2.msra.mxu0 0.0
    %2235 = vmatprep.subr.mxu0 0.0
    %2236 = vmatpush2.msra.mxu0 0.0
    %2237 = vmatprep.mubr.f32.mxu0 0.0
    %2238 = vmatmul.mubr.f32.gmra.mxu0 %v2030
    %v2239 = vpop.f32.mrf.mxu0
    %v2240 = vadd.f32 0.0, %v2239
    %v2241 = vpop.f32.mrf.mxu0
    %2242 = vdwg.mxu0
    %v2243 = vsel %vm449, %v2240, -1e+30
    %v2244 = vsel %vm663, %v2243, -inf
    %2245 = vmax.xlane.f32.xlu0 %v2244
    %v2246 = vpop.xlane.xlu0 %2245
    %v2247 = vsub.f32 %v2243, %v2246
    %v2248 = vmul.f32 %v2247, 1.442695
    %v2249 = vpow.pop %v2248
    %v2250 = vsel %vm663, %v2249, 0.0
    %2251 = vadd.xlane.f32.xlu0 %v2250
    %v2252 = vpop.xlane.xlu0 %2251
    %v2253 = vrcp.pop %v2252
    %v2254 = vmul.f32 %v2249, %v2253
    %2255 = vmatprep.subr.mxu0 %v216
    %2256 = vmatpush1.msra.mxu0 %v215
    %2257 = vmatprep.subr.mxu0 %v212
    %2258 = vmatpush1.msra.mxu0 %v211
    %2259 = vmatprep.subr.mxu0 %v208
    %2260 = vmatpush1.msra.mxu0 %v207
    %2261 = vmatprep.subr.mxu0 %v204
    %2262 = vmatpush1.msra.mxu0 %v203
    %2263 = vmatprep.subr.mxu0 %v200
    %2264 = vmatpush1.msra.mxu0 %v199
    %2265 = vmatprep.subr.mxu0 %v196
    %2266 = vmatpush1.msra.mxu0 %v195
    %2267 = vmatprep.subr.mxu0 %v192
    %2268 = vmatpush1.msra.mxu0 %v191
    %2269 = vmatprep.subr.mxu0 %v188
    %2270 = vmatpush1.msra.mxu0 %v187
    %2271 = vmatprep.subr.mxu0 %v184
    %2272 = vmatpush1.msra.mxu0 %v183
    %2273 = vmatprep.subr.mxu0 %v180
    %2274 = vmatpush1.msra.mxu0 %v179
    %2275 = vmatprep.subr.mxu0 %v176
    %2276 = vmatpush1.msra.mxu0 %v175
    %2277 = vmatprep.subr.mxu0 %v172
    %2278 = vmatpush1.msra.mxu0 %v171
    %2279 = vmatprep.subr.mxu0 %v168
    %2280 = vmatpush1.msra.mxu0 %v167
    %2281 = vmatprep.subr.mxu0 %v164
    %2282 = vmatpush1.msra.mxu0 %v163
    %2283 = vmatprep.subr.mxu0 %v160
    %2284 = vmatpush1.msra.mxu0 %v159
    %2285 = vmatprep.subr.mxu0 %v156
    %2286 = vmatpush1.msra.mxu0 %v155
    %2287 = vmatprep.subr.mxu0 0.0
    %2288 = vmatpush2.msra.mxu0 0.0
    %2289 = vmatprep.subr.mxu0 0.0
    %2290 = vmatpush2.msra.mxu0 0.0
    %2291 = vmatprep.subr.mxu0 0.0
    %2292 = vmatpush2.msra.mxu0 0.0
    %2293 = vmatprep.subr.mxu0 0.0
    %2294 = vmatpush2.msra.mxu0 0.0
    %2295 = vmatprep.subr.mxu0 0.0
    %2296 = vmatpush2.msra.mxu0 0.0
    %2297 = vmatprep.subr.mxu0 0.0
    %2298 = vmatpush2.msra.mxu0 0.0
    %2299 = vmatprep.subr.mxu0 0.0
    %2300 = vmatpush2.msra.mxu0 0.0
    %2301 = vmatprep.subr.mxu0 0.0
    %2302 = vmatpush2.msra.mxu0 0.0
    %2303 = vmatprep.subr.mxu0 0.0
    %2304 = vmatpush2.msra.mxu0 0.0
    %2305 = vmatprep.subr.mxu0 0.0
    %2306 = vmatpush2.msra.mxu0 0.0
    %2307 = vmatprep.subr.mxu0 0.0
    %2308 = vmatpush2.msra.mxu0 0.0
    %2309 = vmatprep.subr.mxu0 0.0
    %2310 = vmatpush2.msra.mxu0 0.0
    %2311 = vmatprep.subr.mxu0 0.0
    %2312 = vmatpush2.msra.mxu0 0.0
    %2313 = vmatprep.subr.mxu0 0.0
    %2314 = vmatpush2.msra.mxu0 0.0
    %2315 = vmatprep.subr.mxu0 0.0
    %2316 = vmatpush2.msra.mxu0 0.0
    %2317 = vmatprep.subr.mxu0 0.0
    %2318 = vmatpush2.msra.mxu0 0.0
    %2319 = vmatprep.mubr.f32.mxu0 0.0
    %2320 = vmatmul.mubr.f32.gmra.mxu0 %v2254
    %v2321 = vpop.f32.mrf.mxu0
    %v2322 = vadd.f32 %v2098, %v2321
    %v2323 = vpop.f32.mrf.mxu0
    %v2324 = vadd.f32 %v2100, %v2323
    %2325 = vdwg.mxu0
    %2326 = vmatprep.subr.mxu0 %v218
    %2327 = vmatpush1.msra.mxu0 %v217
    %2328 = vmatprep.subr.mxu0 %v214
    %2329 = vmatpush1.msra.mxu0 %v213
    %2330 = vmatprep.subr.mxu0 %v210
    %2331 = vmatpush1.msra.mxu0 %v209
    %2332 = vmatprep.subr.mxu0 %v206
    %2333 = vmatpush1.msra.mxu0 %v205
    %2334 = vmatprep.subr.mxu0 %v202
    %2335 = vmatpush1.msra.mxu0 %v201
    %2336 = vmatprep.subr.mxu0 %v198
    %2337 = vmatpush1.msra.mxu0 %v197
    %2338 = vmatprep.subr.mxu0 %v194
    %2339 = vmatpush1.msra.mxu0 %v193
    %2340 = vmatprep.subr.mxu0 %v190
    %2341 = vmatpush1.msra.mxu0 %v189
    %2342 = vmatprep.subr.mxu0 %v186
    %2343 = vmatpush1.msra.mxu0 %v185
    %2344 = vmatprep.subr.mxu0 %v182
    %2345 = vmatpush1.msra.mxu0 %v181
    %2346 = vmatprep.subr.mxu0 %v178
    %2347 = vmatpush1.msra.mxu0 %v177
    %2348 = vmatprep.subr.mxu0 %v174
    %2349 = vmatpush1.msra.mxu0 %v173
    %2350 = vmatprep.subr.mxu0 %v170
    %2351 = vmatpush1.msra.mxu0 %v169
    %2352 = vmatprep.subr.mxu0 %v166
    %2353 = vmatpush1.msra.mxu0 %v165
    %2354 = vmatprep.subr.mxu0 %v162
    %2355 = vmatpush1.msra.mxu0 %v161
    %2356 = vmatprep.subr.mxu0 %v158
    %2357 = vmatpush1.msra.mxu0 %v157
    %2358 = vmatprep.subr.mxu0 0.0
    %2359 = vmatpush2.msra.mxu0 0.0
    %2360 = vmatprep.subr.mxu0 0.0
    %2361 = vmatpush2.msra.mxu0 0.0
    %2362 = vmatprep.subr.mxu0 0.0
    %2363 = vmatpush2.msra.mxu0 0.0
    %2364 = vmatprep.subr.mxu0 0.0
    %2365 = vmatpush2.msra.mxu0 0.0
    %2366 = vmatprep.subr.mxu0 0.0
    %2367 = vmatpush2.msra.mxu0 0.0
    %2368 = vmatprep.subr.mxu0 0.0
    %2369 = vmatpush2.msra.mxu0 0.0
    %2370 = vmatprep.subr.mxu0 0.0
    %2371 = vmatpush2.msra.mxu0 0.0
    %2372 = vmatprep.subr.mxu0 0.0
    %2373 = vmatpush2.msra.mxu0 0.0
    %2374 = vmatprep.subr.mxu0 0.0
    %2375 = vmatpush2.msra.mxu0 0.0
    %2376 = vmatprep.subr.mxu0 0.0
    %2377 = vmatpush2.msra.mxu0 0.0
    %2378 = vmatprep.subr.mxu0 0.0
    %2379 = vmatpush2.msra.mxu0 0.0
    %2380 = vmatprep.subr.mxu0 0.0
    %2381 = vmatpush2.msra.mxu0 0.0
    %2382 = vmatprep.subr.mxu0 0.0
    %2383 = vmatpush2.msra.mxu0 0.0
    %2384 = vmatprep.subr.mxu0 0.0
    %2385 = vmatpush2.msra.mxu0 0.0
    %2386 = vmatprep.subr.mxu0 0.0
    %2387 = vmatpush2.msra.mxu0 0.0
    %2388 = vmatprep.subr.mxu0 0.0
    %2389 = vmatpush2.msra.mxu0 0.0
    %2390 = vmatprep.mubr.f32.mxu0 0.0
    %2391 = vmatmul.mubr.f32.gmra.mxu0 %v2254
    %v2392 = vpop.f32.mrf.mxu0
    %v2393 = vadd.f32 %v2169, %v2392
    %v2394 = vpop.f32.mrf.mxu0
    %v2395 = vadd.f32 %v2171, %v2394
    %2396 = vdwg.mxu0
    %v2397 = vadd.f32 %v2322, %v372
    %v2398 = vadd.f32 %v2324, %v374
    %v2399 = vadd.f32 %v2393, %v443
    %v2400 = vadd.f32 %v2395, %v445
    %v2401 = vxor.u32 %v2397, 2147483648
    %v2402 = vxor.u32 %v2398, 2147483648
    %v2403 = vxor.u32 %v2399, 2147483648
    %v2404 = vmul.f32 %v2401, 1.442695
    %v2405 = vpow.pop %v2404
    %v2406 = vmul.f32 %v2402, 1.442695
    %v2407 = vpow.pop %v2406
    %v2408 = vmul.f32 %v2403, 1.442695
    %v2409 = vpow.pop %v2408
    %v2410 = vadd.f32 %v2405, 1.0
    %v2411 = vadd.f32 %v2407, 1.0
    %v2412 = vadd.f32 %v2409, 1.0
    %v2413 = vrcp.pop %v2410
    %v2414 = vmul.f32 1.0, %v2413
    %v2415 = vrcp.pop %v2411
    %v2416 = vmul.f32 1.0, %v2415
    %v2417 = vrcp.pop %v2412
    %v2418 = vmul.f32 1.0, %v2417
    %v2419 = vtanh.pop %v2400
    %v2420 = vmul.f32 %v2416, %v2027
    %v2421 = vmul.f32 %v2414, %v2419
    %v2422 = vadd.f32 %v2420, %v2421
    %v2423 = vtanh.pop %v2422
    %v2424 = vmul.f32 %v2418, %v2423
    %v2425 = vadd.f32 %v2424, %v74
    %2426 = vmatprep.subr.mxu0 %v151
    %2427 = vmatpush1.msra.mxu0 %v150
    %2428 = vmatprep.subr.mxu0 %v146
    %2429 = vmatpush1.msra.mxu0 %v145
    %2430 = vmatprep.subr.mxu0 %v141
    %2431 = vmatpush1.msra.mxu0 %v140
    %2432 = vmatprep.subr.mxu0 %v136
    %2433 = vmatpush1.msra.mxu0 %v135
    %2434 = vmatprep.subr.mxu0 %v131
    %2435 = vmatpush1.msra.mxu0 %v130
    %2436 = vmatprep.subr.mxu0 %v126
    %2437 = vmatpush1.msra.mxu0 %v125
    %2438 = vmatprep.subr.mxu0 %v121
    %2439 = vmatpush1.msra.mxu0 %v120
    %2440 = vmatprep.subr.mxu0 %v116
    %2441 = vmatpush1.msra.mxu0 %v115
    %2442 = vmatprep.subr.mxu0 %v111
    %2443 = vmatpush1.msra.mxu0 %v110
    %2444 = vmatprep.subr.mxu0 %v106
    %2445 = vmatpush1.msra.mxu0 %v105
    %2446 = vmatprep.subr.mxu0 %v101
    %2447 = vmatpush1.msra.mxu0 %v100
    %2448 = vmatprep.subr.mxu0 %v96
    %2449 = vmatpush1.msra.mxu0 %v95
    %2450 = vmatprep.subr.mxu0 %v91
    %2451 = vmatpush1.msra.mxu0 %v90
    %2452 = vmatprep.subr.mxu0 %v86
    %2453 = vmatpush1.msra.mxu0 %v85
    %2454 = vmatprep.subr.mxu0 %v81
    %2455 = vmatpush1.msra.mxu0 %v80
    %2456 = vmatprep.subr.mxu0 %v76
    %2457 = vmatpush1.msra.mxu0 %v75
    %2458 = vmatprep.subr.mxu0 0.0
    %2459 = vmatpush2.msra.mxu0 0.0
    %2460 = vmatprep.subr.mxu0 0.0
    %2461 = vmatpush2.msra.mxu0 0.0
    %2462 = vmatprep.subr.mxu0 0.0
    %2463 = vmatpush2.msra.mxu0 0.0
    %2464 = vmatprep.subr.mxu0 0.0
    %2465 = vmatpush2.msra.mxu0 0.0
    %2466 = vmatprep.subr.mxu0 0.0
    %2467 = vmatpush2.msra.mxu0 0.0
    %2468 = vmatprep.subr.mxu0 0.0
    %2469 = vmatpush2.msra.mxu0 0.0
    %2470 = vmatprep.subr.mxu0 0.0
    %2471 = vmatpush2.msra.mxu0 0.0
    %2472 = vmatprep.subr.mxu0 0.0
    %2473 = vmatpush2.msra.mxu0 0.0
    %2474 = vmatprep.subr.mxu0 0.0
    %2475 = vmatpush2.msra.mxu0 0.0
    %2476 = vmatprep.subr.mxu0 0.0
    %2477 = vmatpush2.msra.mxu0 0.0
    %2478 = vmatprep.subr.mxu0 0.0
    %2479 = vmatpush2.msra.mxu0 0.0
    %2480 = vmatprep.subr.mxu0 0.0
    %2481 = vmatpush2.msra.mxu0 0.0
    %2482 = vmatprep.subr.mxu0 0.0
    %2483 = vmatpush2.msra.mxu0 0.0
    %2484 = vmatprep.subr.mxu0 0.0
    %2485 = vmatpush2.msra.mxu0 0.0
    %2486 = vmatprep.subr.mxu0 0.0
    %2487 = vmatpush2.msra.mxu0 0.0
    %2488 = vmatprep.subr.mxu0 0.0
    %2489 = vmatpush2.msra.mxu0 0.0
    %2490 = vmatprep.mubr.f32.mxu0 0.0
    %2491 = vmatmul.mubr.f32.gmra.mxu0 %v2425
    %v2492 = vpop.f32.mrf.mxu0
    %v2493 = vadd.f32 0.0, %v2492
    %v2494 = vpop.f32.mrf.mxu0
    %v2495 = vadd.f32 0.0, %v2494
    %2496 = vdwg.mxu0
    %2497 = vmatprep.subr.mxu0 %v153
    %2498 = vmatpush1.msra.mxu0 %v152
    %2499 = vmatprep.subr.mxu0 %v148
    %2500 = vmatpush1.msra.mxu0 %v147
    %2501 = vmatprep.subr.mxu0 %v143
    %2502 = vmatpush1.msra.mxu0 %v142
    %2503 = vmatprep.subr.mxu0 %v138
    %2504 = vmatpush1.msra.mxu0 %v137
    %2505 = vmatprep.subr.mxu0 %v133
    %2506 = vmatpush1.msra.mxu0 %v132
    %2507 = vmatprep.subr.mxu0 %v128
    %2508 = vmatpush1.msra.mxu0 %v127
    %2509 = vmatprep.subr.mxu0 %v123
    %2510 = vmatpush1.msra.mxu0 %v122
    %2511 = vmatprep.subr.mxu0 %v118
    %2512 = vmatpush1.msra.mxu0 %v117
    %2513 = vmatprep.subr.mxu0 %v113
    %2514 = vmatpush1.msra.mxu0 %v112
    %2515 = vmatprep.subr.mxu0 %v108
    %2516 = vmatpush1.msra.mxu0 %v107
    %2517 = vmatprep.subr.mxu0 %v103
    %2518 = vmatpush1.msra.mxu0 %v102
    %2519 = vmatprep.subr.mxu0 %v98
    %2520 = vmatpush1.msra.mxu0 %v97
    %2521 = vmatprep.subr.mxu0 %v93
    %2522 = vmatpush1.msra.mxu0 %v92
    %2523 = vmatprep.subr.mxu0 %v88
    %2524 = vmatpush1.msra.mxu0 %v87
    %2525 = vmatprep.subr.mxu0 %v83
    %2526 = vmatpush1.msra.mxu0 %v82
    %2527 = vmatprep.subr.mxu0 %v78
    %2528 = vmatpush1.msra.mxu0 %v77
    %2529 = vmatprep.subr.mxu0 0.0
    %2530 = vmatpush2.msra.mxu0 0.0
    %2531 = vmatprep.subr.mxu0 0.0
    %2532 = vmatpush2.msra.mxu0 0.0
    %2533 = vmatprep.subr.mxu0 0.0
    %2534 = vmatpush2.msra.mxu0 0.0
    %2535 = vmatprep.subr.mxu0 0.0
    %2536 = vmatpush2.msra.mxu0 0.0
    %2537 = vmatprep.subr.mxu0 0.0
    %2538 = vmatpush2.msra.mxu0 0.0
    %2539 = vmatprep.subr.mxu0 0.0
    %2540 = vmatpush2.msra.mxu0 0.0
    %2541 = vmatprep.subr.mxu0 0.0
    %2542 = vmatpush2.msra.mxu0 0.0
    %2543 = vmatprep.subr.mxu0 0.0
    %2544 = vmatpush2.msra.mxu0 0.0
    %2545 = vmatprep.subr.mxu0 0.0
    %2546 = vmatpush2.msra.mxu0 0.0
    %2547 = vmatprep.subr.mxu0 0.0
    %2548 = vmatpush2.msra.mxu0 0.0
    %2549 = vmatprep.subr.mxu0 0.0
    %2550 = vmatpush2.msra.mxu0 0.0
    %2551 = vmatprep.subr.mxu0 0.0
    %2552 = vmatpush2.msra.mxu0 0.0
    %2553 = vmatprep.subr.mxu0 0.0
    %2554 = vmatpush2.msra.mxu0 0.0
    %2555 = vmatprep.subr.mxu0 0.0
    %2556 = vmatpush2.msra.mxu0 0.0
    %2557 = vmatprep.subr.mxu0 0.0
    %2558 = vmatpush2.msra.mxu0 0.0
    %2559 = vmatprep.subr.mxu0 0.0
    %2560 = vmatpush2.msra.mxu0 0.0
    %2561 = vmatprep.mubr.f32.mxu0 0.0
    %2562 = vmatmul.mubr.f32.gmra.mxu0 %v2425
    %v2563 = vpop.f32.mrf.mxu0
    %v2564 = vadd.f32 0.0, %v2563
    %v2565 = vpop.f32.mrf.mxu0
    %v2566 = vadd.f32 0.0, %v2565
    %2567 = vdwg.mxu0
    %2568 = vmatprep.subr.mxu0 0.0
    %2569 = vmatpush1.msra.mxu0 %v154
    %2570 = vmatprep.subr.mxu0 0.0
    %2571 = vmatpush1.msra.mxu0 %v149
    %2572 = vmatprep.subr.mxu0 0.0
    %2573 = vmatpush1.msra.mxu0 %v144
    %2574 = vmatprep.subr.mxu0 0.0
    %2575 = vmatpush1.msra.mxu0 %v139
    %2576 = vmatprep.subr.mxu0 0.0
    %2577 = vmatpush1.msra.mxu0 %v134
    %2578 = vmatprep.subr.mxu0 0.0
    %2579 = vmatpush1.msra.mxu0 %v129
    %2580 = vmatprep.subr.mxu0 0.0
    %2581 = vmatpush1.msra.mxu0 %v124
    %2582 = vmatprep.subr.mxu0 0.0
    %2583 = vmatpush1.msra.mxu0 %v119
    %2584 = vmatprep.subr.mxu0 0.0
    %2585 = vmatpush1.msra.mxu0 %v114
    %2586 = vmatprep.subr.mxu0 0.0
    %2587 = vmatpush1.msra.mxu0 %v109
    %2588 = vmatprep.subr.mxu0 0.0
    %2589 = vmatpush1.msra.mxu0 %v104
    %2590 = vmatprep.subr.mxu0 0.0
    %2591 = vmatpush1.msra.mxu0 %v99
    %2592 = vmatprep.subr.mxu0 0.0
    %2593 = vmatpush1.msra.mxu0 %v94
    %2594 = vmatprep.subr.mxu0 0.0
    %2595 = vmatpush1.msra.mxu0 %v89
    %2596 = vmatprep.subr.mxu0 0.0
    %2597 = vmatpush1.msra.mxu0 %v84
    %2598 = vmatprep.subr.mxu0 0.0
    %2599 = vmatpush1.msra.mxu0 %v79
    %2600 = vmatprep.subr.mxu0 0.0
    %2601 = vmatpush2.msra.mxu0 0.0
    %2602 = vmatprep.subr.mxu0 0.0
    %2603 = vmatpush2.msra.mxu0 0.0
    %2604 = vmatprep.subr.mxu0 0.0
    %2605 = vmatpush2.msra.mxu0 0.0
    %2606 = vmatprep.subr.mxu0 0.0
    %2607 = vmatpush2.msra.mxu0 0.0
    %2608 = vmatprep.subr.mxu0 0.0
    %2609 = vmatpush2.msra.mxu0 0.0
    %2610 = vmatprep.subr.mxu0 0.0
    %2611 = vmatpush2.msra.mxu0 0.0
    %2612 = vmatprep.subr.mxu0 0.0
    %2613 = vmatpush2.msra.mxu0 0.0
    %2614 = vmatprep.subr.mxu0 0.0
    %2615 = vmatpush2.msra.mxu0 0.0
    %2616 = vmatprep.subr.mxu0 0.0
    %2617 = vmatpush2.msra.mxu0 0.0
    %2618 = vmatprep.subr.mxu0 0.0
    %2619 = vmatpush2.msra.mxu0 0.0
    %2620 = vmatprep.subr.mxu0 0.0
    %2621 = vmatpush2.msra.mxu0 0.0
    %2622 = vmatprep.subr.mxu0 0.0
    %2623 = vmatpush2.msra.mxu0 0.0
    %2624 = vmatprep.subr.mxu0 0.0
    %2625 = vmatpush2.msra.mxu0 0.0
    %2626 = vmatprep.subr.mxu0 0.0
    %2627 = vmatpush2.msra.mxu0 0.0
    %2628 = vmatprep.subr.mxu0 0.0
    %2629 = vmatpush2.msra.mxu0 0.0
    %2630 = vmatprep.subr.mxu0 0.0
    %2631 = vmatpush2.msra.mxu0 0.0
    %2632 = vmatprep.mubr.f32.mxu0 0.0
    %2633 = vmatmul.mubr.f32.gmra.mxu0 %v2425
    %v2634 = vpop.f32.mrf.mxu0
    %v2635 = vadd.f32 0.0, %v2634
    %v2636 = vpop.f32.mrf.mxu0
    %2637 = vdwg.mxu0
    %v2638 = vsel %vm449, %v2635, -1e+30
    %v2639 = vsel %vm663, %v2638, -inf
    %2640 = vmax.xlane.f32.xlu0 %v2639
    %v2641 = vpop.xlane.xlu0 %2640
    %v2642 = vsub.f32 %v2638, %v2641
    %v2643 = vmul.f32 %v2642, 1.442695
    %v2644 = vpow.pop %v2643
    %v2645 = vsel %vm663, %v2644, 0.0
    %2646 = vadd.xlane.f32.xlu0 %v2645
    %v2647 = vpop.xlane.xlu0 %2646
    %v2648 = vrcp.pop %v2647
    %v2649 = vmul.f32 %v2644, %v2648
    %2650 = vmatprep.subr.mxu0 %v216
    %2651 = vmatpush1.msra.mxu0 %v215
    %2652 = vmatprep.subr.mxu0 %v212
    %2653 = vmatpush1.msra.mxu0 %v211
    %2654 = vmatprep.subr.mxu0 %v208
    %2655 = vmatpush1.msra.mxu0 %v207
    %2656 = vmatprep.subr.mxu0 %v204
    %2657 = vmatpush1.msra.mxu0 %v203
    %2658 = vmatprep.subr.mxu0 %v200
    %2659 = vmatpush1.msra.mxu0 %v199
    %2660 = vmatprep.subr.mxu0 %v196
    %2661 = vmatpush1.msra.mxu0 %v195
    %2662 = vmatprep.subr.mxu0 %v192
    %2663 = vmatpush1.msra.mxu0 %v191
    %2664 = vmatprep.subr.mxu0 %v188
    %2665 = vmatpush1.msra.mxu0 %v187
    %2666 = vmatprep.subr.mxu0 %v184
    %2667 = vmatpush1.msra.mxu0 %v183
    %2668 = vmatprep.subr.mxu0 %v180
    %2669 = vmatpush1.msra.mxu0 %v179
    %2670 = vmatprep.subr.mxu0 %v176
    %2671 = vmatpush1.msra.mxu0 %v175
    %2672 = vmatprep.subr.mxu0 %v172
    %2673 = vmatpush1.msra.mxu0 %v171
    %2674 = vmatprep.subr.mxu0 %v168
    %2675 = vmatpush1.msra.mxu0 %v167
    %2676 = vmatprep.subr.mxu0 %v164
    %2677 = vmatpush1.msra.mxu0 %v163
    %2678 = vmatprep.subr.mxu0 %v160
    %2679 = vmatpush1.msra.mxu0 %v159
    %2680 = vmatprep.subr.mxu0 %v156
    %2681 = vmatpush1.msra.mxu0 %v155
    %2682 = vmatprep.subr.mxu0 0.0
    %2683 = vmatpush2.msra.mxu0 0.0
    %2684 = vmatprep.subr.mxu0 0.0
    %2685 = vmatpush2.msra.mxu0 0.0
    %2686 = vmatprep.subr.mxu0 0.0
    %2687 = vmatpush2.msra.mxu0 0.0
    %2688 = vmatprep.subr.mxu0 0.0
    %2689 = vmatpush2.msra.mxu0 0.0
    %2690 = vmatprep.subr.mxu0 0.0
    %2691 = vmatpush2.msra.mxu0 0.0
    %2692 = vmatprep.subr.mxu0 0.0
    %2693 = vmatpush2.msra.mxu0 0.0
    %2694 = vmatprep.subr.mxu0 0.0
    %2695 = vmatpush2.msra.mxu0 0.0
    %2696 = vmatprep.subr.mxu0 0.0
    %2697 = vmatpush2.msra.mxu0 0.0
    %2698 = vmatprep.subr.mxu0 0.0
    %2699 = vmatpush2.msra.mxu0 0.0
    %2700 = vmatprep.subr.mxu0 0.0
    %2701 = vmatpush2.msra.mxu0 0.0
    %2702 = vmatprep.subr.mxu0 0.0
    %2703 = vmatpush2.msra.mxu0 0.0
    %2704 = vmatprep.subr.mxu0 0.0
    %2705 = vmatpush2.msra.mxu0 0.0
    %2706 = vmatprep.subr.mxu0 0.0
    %2707 = vmatpush2.msra.mxu0 0.0
    %2708 = vmatprep.subr.mxu0 0.0
    %2709 = vmatpush2.msra.mxu0 0.0
    %2710 = vmatprep.subr.mxu0 0.0
    %2711 = vmatpush2.msra.mxu0 0.0
    %2712 = vmatprep.subr.mxu0 0.0
    %2713 = vmatpush2.msra.mxu0 0.0
    %2714 = vmatprep.mubr.f32.mxu0 0.0
    %2715 = vmatmul.mubr.f32.gmra.mxu0 %v2649
    %v2716 = vpop.f32.mrf.mxu0
    %v2717 = vadd.f32 %v2493, %v2716
    %v2718 = vpop.f32.mrf.mxu0
    %v2719 = vadd.f32 %v2495, %v2718
    %2720 = vdwg.mxu0
    %2721 = vmatprep.subr.mxu0 %v218
    %2722 = vmatpush1.msra.mxu0 %v217
    %2723 = vmatprep.subr.mxu0 %v214
    %2724 = vmatpush1.msra.mxu0 %v213
    %2725 = vmatprep.subr.mxu0 %v210
    %2726 = vmatpush1.msra.mxu0 %v209
    %2727 = vmatprep.subr.mxu0 %v206
    %2728 = vmatpush1.msra.mxu0 %v205
    %2729 = vmatprep.subr.mxu0 %v202
    %2730 = vmatpush1.msra.mxu0 %v201
    %2731 = vmatprep.subr.mxu0 %v198
    %2732 = vmatpush1.msra.mxu0 %v197
    %2733 = vmatprep.subr.mxu0 %v194
    %2734 = vmatpush1.msra.mxu0 %v193
    %2735 = vmatprep.subr.mxu0 %v190
    %2736 = vmatpush1.msra.mxu0 %v189
    %2737 = vmatprep.subr.mxu0 %v186
    %2738 = vmatpush1.msra.mxu0 %v185
    %2739 = vmatprep.subr.mxu0 %v182
    %2740 = vmatpush1.msra.mxu0 %v181
    %2741 = vmatprep.subr.mxu0 %v178
    %2742 = vmatpush1.msra.mxu0 %v177
    %2743 = vmatprep.subr.mxu0 %v174
    %2744 = vmatpush1.msra.mxu0 %v173
    %2745 = vmatprep.subr.mxu0 %v170
    %2746 = vmatpush1.msra.mxu0 %v169
    %2747 = vmatprep.subr.mxu0 %v166
    %2748 = vmatpush1.msra.mxu0 %v165
    %2749 = vmatprep.subr.mxu0 %v162
    %2750 = vmatpush1.msra.mxu0 %v161
    %2751 = vmatprep.subr.mxu0 %v158
    %2752 = vmatpush1.msra.mxu0 %v157
    %2753 = vmatprep.subr.mxu0 0.0
    %2754 = vmatpush2.msra.mxu0 0.0
    %2755 = vmatprep.subr.mxu0 0.0
    %2756 = vmatpush2.msra.mxu0 0.0
    %2757 = vmatprep.subr.mxu0 0.0
    %2758 = vmatpush2.msra.mxu0 0.0
    %2759 = vmatprep.subr.mxu0 0.0
    %2760 = vmatpush2.msra.mxu0 0.0
    %2761 = vmatprep.subr.mxu0 0.0
    %2762 = vmatpush2.msra.mxu0 0.0
    %2763 = vmatprep.subr.mxu0 0.0
    %2764 = vmatpush2.msra.mxu0 0.0
    %2765 = vmatprep.subr.mxu0 0.0
    %2766 = vmatpush2.msra.mxu0 0.0
    %2767 = vmatprep.subr.mxu0 0.0
    %2768 = vmatpush2.msra.mxu0 0.0
    %2769 = vmatprep.subr.mxu0 0.0
    %2770 = vmatpush2.msra.mxu0 0.0
    %2771 = vmatprep.subr.mxu0 0.0
    %2772 = vmatpush2.msra.mxu0 0.0
    %2773 = vmatprep.subr.mxu0 0.0
    %2774 = vmatpush2.msra.mxu0 0.0
    %2775 = vmatprep.subr.mxu0 0.0
    %2776 = vmatpush2.msra.mxu0 0.0
    %2777 = vmatprep.subr.mxu0 0.0
    %2778 = vmatpush2.msra.mxu0 0.0
    %2779 = vmatprep.subr.mxu0 0.0
    %2780 = vmatpush2.msra.mxu0 0.0
    %2781 = vmatprep.subr.mxu0 0.0
    %2782 = vmatpush2.msra.mxu0 0.0
    %2783 = vmatprep.subr.mxu0 0.0
    %2784 = vmatpush2.msra.mxu0 0.0
    %2785 = vmatprep.mubr.f32.mxu0 0.0
    %2786 = vmatmul.mubr.f32.gmra.mxu0 %v2649
    %v2787 = vpop.f32.mrf.mxu0
    %v2788 = vadd.f32 %v2564, %v2787
    %v2789 = vpop.f32.mrf.mxu0
    %v2790 = vadd.f32 %v2566, %v2789
    %2791 = vdwg.mxu0
    %v2792 = vadd.f32 %v2717, %v372
    %v2793 = vadd.f32 %v2719, %v374
    %v2794 = vadd.f32 %v2788, %v443
    %v2795 = vadd.f32 %v2790, %v445
    %v2796 = vxor.u32 %v2792, 2147483648
    %v2797 = vxor.u32 %v2793, 2147483648
    %v2798 = vxor.u32 %v2794, 2147483648
    %v2799 = vmul.f32 %v2796, 1.442695
    %v2800 = vpow.pop %v2799
    %v2801 = vmul.f32 %v2797, 1.442695
    %v2802 = vpow.pop %v2801
    %v2803 = vmul.f32 %v2798, 1.442695
    %v2804 = vpow.pop %v2803
    %v2805 = vadd.f32 %v2800, 1.0
    %v2806 = vadd.f32 %v2802, 1.0
    %v2807 = vadd.f32 %v2804, 1.0
    %v2808 = vrcp.pop %v2805
    %v2809 = vmul.f32 1.0, %v2808
    %v2810 = vrcp.pop %v2806
    %v2811 = vmul.f32 1.0, %v2810
    %v2812 = vrcp.pop %v2807
    %v2813 = vmul.f32 1.0, %v2812
    %v2814 = vtanh.pop %v2795
    %v2815 = vmul.f32 %v2811, %v2422
    %v2816 = vmul.f32 %v2809, %v2814
    %v2817 = vadd.f32 %v2815, %v2816
    %v2818 = vtanh.pop %v2817
    %v2819 = vmul.f32 %v2813, %v2818
    %v2820 = vadd.f32 %v2819, %v74
    %2821 = vmatprep.subr.mxu0 %v151
    %2822 = vmatpush1.msra.mxu0 %v150
    %2823 = vmatprep.subr.mxu0 %v146
    %2824 = vmatpush1.msra.mxu0 %v145
    %2825 = vmatprep.subr.mxu0 %v141
    %2826 = vmatpush1.msra.mxu0 %v140
    %2827 = vmatprep.subr.mxu0 %v136
    %2828 = vmatpush1.msra.mxu0 %v135
    %2829 = vmatprep.subr.mxu0 %v131
    %2830 = vmatpush1.msra.mxu0 %v130
    %2831 = vmatprep.subr.mxu0 %v126
    %2832 = vmatpush1.msra.mxu0 %v125
    %2833 = vmatprep.subr.mxu0 %v121
    %2834 = vmatpush1.msra.mxu0 %v120
    %2835 = vmatprep.subr.mxu0 %v116
    %2836 = vmatpush1.msra.mxu0 %v115
    %2837 = vmatprep.subr.mxu0 %v111
    %2838 = vmatpush1.msra.mxu0 %v110
    %2839 = vmatprep.subr.mxu0 %v106
    %2840 = vmatpush1.msra.mxu0 %v105
    %2841 = vmatprep.subr.mxu0 %v101
    %2842 = vmatpush1.msra.mxu0 %v100
    %2843 = vmatprep.subr.mxu0 %v96
    %2844 = vmatpush1.msra.mxu0 %v95
    %2845 = vmatprep.subr.mxu0 %v91
    %2846 = vmatpush1.msra.mxu0 %v90
    %2847 = vmatprep.subr.mxu0 %v86
    %2848 = vmatpush1.msra.mxu0 %v85
    %2849 = vmatprep.subr.mxu0 %v81
    %2850 = vmatpush1.msra.mxu0 %v80
    %2851 = vmatprep.subr.mxu0 %v76
    %2852 = vmatpush1.msra.mxu0 %v75
    %2853 = vmatprep.subr.mxu0 0.0
    %2854 = vmatpush2.msra.mxu0 0.0
    %2855 = vmatprep.subr.mxu0 0.0
    %2856 = vmatpush2.msra.mxu0 0.0
    %2857 = vmatprep.subr.mxu0 0.0
    %2858 = vmatpush2.msra.mxu0 0.0
    %2859 = vmatprep.subr.mxu0 0.0
    %2860 = vmatpush2.msra.mxu0 0.0
    %2861 = vmatprep.subr.mxu0 0.0
    %2862 = vmatpush2.msra.mxu0 0.0
    %2863 = vmatprep.subr.mxu0 0.0
    %2864 = vmatpush2.msra.mxu0 0.0
    %2865 = vmatprep.subr.mxu0 0.0
    %2866 = vmatpush2.msra.mxu0 0.0
    %2867 = vmatprep.subr.mxu0 0.0
    %2868 = vmatpush2.msra.mxu0 0.0
    %2869 = vmatprep.subr.mxu0 0.0
    %2870 = vmatpush2.msra.mxu0 0.0
    %2871 = vmatprep.subr.mxu0 0.0
    %2872 = vmatpush2.msra.mxu0 0.0
    %2873 = vmatprep.subr.mxu0 0.0
    %2874 = vmatpush2.msra.mxu0 0.0
    %2875 = vmatprep.subr.mxu0 0.0
    %2876 = vmatpush2.msra.mxu0 0.0
    %2877 = vmatprep.subr.mxu0 0.0
    %2878 = vmatpush2.msra.mxu0 0.0
    %2879 = vmatprep.subr.mxu0 0.0
    %2880 = vmatpush2.msra.mxu0 0.0
    %2881 = vmatprep.subr.mxu0 0.0
    %2882 = vmatpush2.msra.mxu0 0.0
    %2883 = vmatprep.subr.mxu0 0.0
    %2884 = vmatpush2.msra.mxu0 0.0
    %2885 = vmatprep.mubr.f32.mxu0 0.0
    %2886 = vmatmul.mubr.f32.gmra.mxu0 %v2820
    %v2887 = vpop.f32.mrf.mxu0
    %v2888 = vadd.f32 0.0, %v2887
    %v2889 = vpop.f32.mrf.mxu0
    %v2890 = vadd.f32 0.0, %v2889
    %2891 = vdwg.mxu0
    %2892 = vmatprep.subr.mxu0 %v153
    %2893 = vmatpush1.msra.mxu0 %v152
    %2894 = vmatprep.subr.mxu0 %v148
    %2895 = vmatpush1.msra.mxu0 %v147
    %2896 = vmatprep.subr.mxu0 %v143
    %2897 = vmatpush1.msra.mxu0 %v142
    %2898 = vmatprep.subr.mxu0 %v138
    %2899 = vmatpush1.msra.mxu0 %v137
    %2900 = vmatprep.subr.mxu0 %v133
    %2901 = vmatpush1.msra.mxu0 %v132
    %2902 = vmatprep.subr.mxu0 %v128
    %2903 = vmatpush1.msra.mxu0 %v127
    %2904 = vmatprep.subr.mxu0 %v123
    %2905 = vmatpush1.msra.mxu0 %v122
    %2906 = vmatprep.subr.mxu0 %v118
    %2907 = vmatpush1.msra.mxu0 %v117
    %2908 = vmatprep.subr.mxu0 %v113
    %2909 = vmatpush1.msra.mxu0 %v112
    %2910 = vmatprep.subr.mxu0 %v108
    %2911 = vmatpush1.msra.mxu0 %v107
    %2912 = vmatprep.subr.mxu0 %v103
    %2913 = vmatpush1.msra.mxu0 %v102
    %2914 = vmatprep.subr.mxu0 %v98
    %2915 = vmatpush1.msra.mxu0 %v97
    %2916 = vmatprep.subr.mxu0 %v93
    %2917 = vmatpush1.msra.mxu0 %v92
    %2918 = vmatprep.subr.mxu0 %v88
    %2919 = vmatpush1.msra.mxu0 %v87
    %2920 = vmatprep.subr.mxu0 %v83
    %2921 = vmatpush1.msra.mxu0 %v82
    %2922 = vmatprep.subr.mxu0 %v78
    %2923 = vmatpush1.msra.mxu0 %v77
    %2924 = vmatprep.subr.mxu0 0.0
    %2925 = vmatpush2.msra.mxu0 0.0
    %2926 = vmatprep.subr.mxu0 0.0
    %2927 = vmatpush2.msra.mxu0 0.0
    %2928 = vmatprep.subr.mxu0 0.0
    %2929 = vmatpush2.msra.mxu0 0.0
    %2930 = vmatprep.subr.mxu0 0.0
    %2931 = vmatpush2.msra.mxu0 0.0
    %2932 = vmatprep.subr.mxu0 0.0
    %2933 = vmatpush2.msra.mxu0 0.0
    %2934 = vmatprep.subr.mxu0 0.0
    %2935 = vmatpush2.msra.mxu0 0.0
    %2936 = vmatprep.subr.mxu0 0.0
    %2937 = vmatpush2.msra.mxu0 0.0
    %2938 = vmatprep.subr.mxu0 0.0
    %2939 = vmatpush2.msra.mxu0 0.0
    %2940 = vmatprep.subr.mxu0 0.0
    %2941 = vmatpush2.msra.mxu0 0.0
    %2942 = vmatprep.subr.mxu0 0.0
    %2943 = vmatpush2.msra.mxu0 0.0
    %2944 = vmatprep.subr.mxu0 0.0
    %2945 = vmatpush2.msra.mxu0 0.0
    %2946 = vmatprep.subr.mxu0 0.0
    %2947 = vmatpush2.msra.mxu0 0.0
    %2948 = vmatprep.subr.mxu0 0.0
    %2949 = vmatpush2.msra.mxu0 0.0
    %2950 = vmatprep.subr.mxu0 0.0
    %2951 = vmatpush2.msra.mxu0 0.0
    %2952 = vmatprep.subr.mxu0 0.0
    %2953 = vmatpush2.msra.mxu0 0.0
    %2954 = vmatprep.subr.mxu0 0.0
    %2955 = vmatpush2.msra.mxu0 0.0
    %2956 = vmatprep.mubr.f32.mxu0 0.0
    %2957 = vmatmul.mubr.f32.gmra.mxu0 %v2820
    %v2958 = vpop.f32.mrf.mxu0
    %v2959 = vadd.f32 0.0, %v2958
    %v2960 = vpop.f32.mrf.mxu0
    %v2961 = vadd.f32 0.0, %v2960
    %2962 = vdwg.mxu0
    %2963 = vmatprep.subr.mxu0 0.0
    %2964 = vmatpush1.msra.mxu0 %v154
    %2965 = vmatprep.subr.mxu0 0.0
    %2966 = vmatpush1.msra.mxu0 %v149
    %2967 = vmatprep.subr.mxu0 0.0
    %2968 = vmatpush1.msra.mxu0 %v144
    %2969 = vmatprep.subr.mxu0 0.0
    %2970 = vmatpush1.msra.mxu0 %v139
    %2971 = vmatprep.subr.mxu0 0.0
    %2972 = vmatpush1.msra.mxu0 %v134
    %2973 = vmatprep.subr.mxu0 0.0
    %2974 = vmatpush1.msra.mxu0 %v129
    %2975 = vmatprep.subr.mxu0 0.0
    %2976 = vmatpush1.msra.mxu0 %v124
    %2977 = vmatprep.subr.mxu0 0.0
    %2978 = vmatpush1.msra.mxu0 %v119
    %2979 = vmatprep.subr.mxu0 0.0
    %2980 = vmatpush1.msra.mxu0 %v114
    %2981 = vmatprep.subr.mxu0 0.0
    %2982 = vmatpush1.msra.mxu0 %v109
    %2983 = vmatprep.subr.mxu0 0.0
    %2984 = vmatpush1.msra.mxu0 %v104
    %2985 = vmatprep.subr.mxu0 0.0
    %2986 = vmatpush1.msra.mxu0 %v99
    %2987 = vmatprep.subr.mxu0 0.0
    %2988 = vmatpush1.msra.mxu0 %v94
    %2989 = vmatprep.subr.mxu0 0.0
    %2990 = vmatpush1.msra.mxu0 %v89
    %2991 = vmatprep.subr.mxu0 0.0
    %2992 = vmatpush1.msra.mxu0 %v84
    %2993 = vmatprep.subr.mxu0 0.0
    %2994 = vmatpush1.msra.mxu0 %v79
    %2995 = vmatprep.subr.mxu0 0.0
    %2996 = vmatpush2.msra.mxu0 0.0
    %2997 = vmatprep.subr.mxu0 0.0
    %2998 = vmatpush2.msra.mxu0 0.0
    %2999 = vmatprep.subr.mxu0 0.0
    %3000 = vmatpush2.msra.mxu0 0.0
    %3001 = vmatprep.subr.mxu0 0.0
    %3002 = vmatpush2.msra.mxu0 0.0
    %3003 = vmatprep.subr.mxu0 0.0
    %3004 = vmatpush2.msra.mxu0 0.0
    %3005 = vmatprep.subr.mxu0 0.0
    %3006 = vmatpush2.msra.mxu0 0.0
    %3007 = vmatprep.subr.mxu0 0.0
    %3008 = vmatpush2.msra.mxu0 0.0
    %3009 = vmatprep.subr.mxu0 0.0
    %3010 = vmatpush2.msra.mxu0 0.0
    %3011 = vmatprep.subr.mxu0 0.0
    %3012 = vmatpush2.msra.mxu0 0.0
    %3013 = vmatprep.subr.mxu0 0.0
    %3014 = vmatpush2.msra.mxu0 0.0
    %3015 = vmatprep.subr.mxu0 0.0
    %3016 = vmatpush2.msra.mxu0 0.0
    %3017 = vmatprep.subr.mxu0 0.0
    %3018 = vmatpush2.msra.mxu0 0.0
    %3019 = vmatprep.subr.mxu0 0.0
    %3020 = vmatpush2.msra.mxu0 0.0
    %3021 = vmatprep.subr.mxu0 0.0
    %3022 = vmatpush2.msra.mxu0 0.0
    %3023 = vmatprep.subr.mxu0 0.0
    %3024 = vmatpush2.msra.mxu0 0.0
    %3025 = vmatprep.subr.mxu0 0.0
    %3026 = vmatpush2.msra.mxu0 0.0
    %3027 = vmatprep.mubr.f32.mxu0 0.0
    %3028 = vmatmul.mubr.f32.gmra.mxu0 %v2820
    %v3029 = vpop.f32.mrf.mxu0
    %v3030 = vadd.f32 0.0, %v3029
    %v3031 = vpop.f32.mrf.mxu0
    %3032 = vdwg.mxu0
    %v3033 = vsel %vm449, %v3030, -1e+30
    %v3034 = vsel %vm663, %v3033, -inf
    %3035 = vmax.xlane.f32.xlu0 %v3034
    %v3036 = vpop.xlane.xlu0 %3035
    %v3037 = vsub.f32 %v3033, %v3036
    %v3038 = vmul.f32 %v3037, 1.442695
    %v3039 = vpow.pop %v3038
    %v3040 = vsel %vm663, %v3039, 0.0
    %3041 = vadd.xlane.f32.xlu0 %v3040
    %v3042 = vpop.xlane.xlu0 %3041
    %v3043 = vrcp.pop %v3042
    %v3044 = vmul.f32 %v3039, %v3043
    %3045 = vmatprep.subr.mxu0 %v216
    %3046 = vmatpush1.msra.mxu0 %v215
    %3047 = vmatprep.subr.mxu0 %v212
    %3048 = vmatpush1.msra.mxu0 %v211
    %3049 = vmatprep.subr.mxu0 %v208
    %3050 = vmatpush1.msra.mxu0 %v207
    %3051 = vmatprep.subr.mxu0 %v204
    %3052 = vmatpush1.msra.mxu0 %v203
    %3053 = vmatprep.subr.mxu0 %v200
    %3054 = vmatpush1.msra.mxu0 %v199
    %3055 = vmatprep.subr.mxu0 %v196
    %3056 = vmatpush1.msra.mxu0 %v195
    %3057 = vmatprep.subr.mxu0 %v192
    %3058 = vmatpush1.msra.mxu0 %v191
    %3059 = vmatprep.subr.mxu0 %v188
    %3060 = vmatpush1.msra.mxu0 %v187
    %3061 = vmatprep.subr.mxu0 %v184
    %3062 = vmatpush1.msra.mxu0 %v183
    %3063 = vmatprep.subr.mxu0 %v180
    %3064 = vmatpush1.msra.mxu0 %v179
    %3065 = vmatprep.subr.mxu0 %v176
    %3066 = vmatpush1.msra.mxu0 %v175
    %3067 = vmatprep.subr.mxu0 %v172
    %3068 = vmatpush1.msra.mxu0 %v171
    %3069 = vmatprep.subr.mxu0 %v168
    %3070 = vmatpush1.msra.mxu0 %v167
    %3071 = vmatprep.subr.mxu0 %v164
    %3072 = vmatpush1.msra.mxu0 %v163
    %3073 = vmatprep.subr.mxu0 %v160
    %3074 = vmatpush1.msra.mxu0 %v159
    %3075 = vmatprep.subr.mxu0 %v156
    %3076 = vmatpush1.msra.mxu0 %v155
    %3077 = vmatprep.subr.mxu0 0.0
    %3078 = vmatpush2.msra.mxu0 0.0
    %3079 = vmatprep.subr.mxu0 0.0
    %3080 = vmatpush2.msra.mxu0 0.0
    %3081 = vmatprep.subr.mxu0 0.0
    %3082 = vmatpush2.msra.mxu0 0.0
    %3083 = vmatprep.subr.mxu0 0.0
    %3084 = vmatpush2.msra.mxu0 0.0
    %3085 = vmatprep.subr.mxu0 0.0
    %3086 = vmatpush2.msra.mxu0 0.0
    %3087 = vmatprep.subr.mxu0 0.0
    %3088 = vmatpush2.msra.mxu0 0.0
    %3089 = vmatprep.subr.mxu0 0.0
    %3090 = vmatpush2.msra.mxu0 0.0
    %3091 = vmatprep.subr.mxu0 0.0
    %3092 = vmatpush2.msra.mxu0 0.0
    %3093 = vmatprep.subr.mxu0 0.0
    %3094 = vmatpush2.msra.mxu0 0.0
    %3095 = vmatprep.subr.mxu0 0.0
    %3096 = vmatpush2.msra.mxu0 0.0
    %3097 = vmatprep.subr.mxu0 0.0
    %3098 = vmatpush2.msra.mxu0 0.0
    %3099 = vmatprep.subr.mxu0 0.0
    %3100 = vmatpush2.msra.mxu0 0.0
    %3101 = vmatprep.subr.mxu0 0.0
    %3102 = vmatpush2.msra.mxu0 0.0
    %3103 = vmatprep.subr.mxu0 0.0
    %3104 = vmatpush2.msra.mxu0 0.0
    %3105 = vmatprep.subr.mxu0 0.0
    %3106 = vmatpush2.msra.mxu0 0.0
    %3107 = vmatprep.subr.mxu0 0.0
    %3108 = vmatpush2.msra.mxu0 0.0
    %3109 = vmatprep.mubr.f32.mxu0 0.0
    %3110 = vmatmul.mubr.f32.gmra.mxu0 %v3044
    %v3111 = vpop.f32.mrf.mxu0
    %v3112 = vadd.f32 %v2888, %v3111
    %v3113 = vpop.f32.mrf.mxu0
    %v3114 = vadd.f32 %v2890, %v3113
    %3115 = vdwg.mxu0
    %3116 = vmatprep.subr.mxu0 %v218
    %3117 = vmatpush1.msra.mxu0 %v217
    %3118 = vmatprep.subr.mxu0 %v214
    %3119 = vmatpush1.msra.mxu0 %v213
    %3120 = vmatprep.subr.mxu0 %v210
    %3121 = vmatpush1.msra.mxu0 %v209
    %3122 = vmatprep.subr.mxu0 %v206
    %3123 = vmatpush1.msra.mxu0 %v205
    %3124 = vmatprep.subr.mxu0 %v202
    %3125 = vmatpush1.msra.mxu0 %v201
    %3126 = vmatprep.subr.mxu0 %v198
    %3127 = vmatpush1.msra.mxu0 %v197
    %3128 = vmatprep.subr.mxu0 %v194
    %3129 = vmatpush1.msra.mxu0 %v193
    %3130 = vmatprep.subr.mxu0 %v190
    %3131 = vmatpush1.msra.mxu0 %v189
    %3132 = vmatprep.subr.mxu0 %v186
    %3133 = vmatpush1.msra.mxu0 %v185
    %3134 = vmatprep.subr.mxu0 %v182
    %3135 = vmatpush1.msra.mxu0 %v181
    %3136 = vmatprep.subr.mxu0 %v178
    %3137 = vmatpush1.msra.mxu0 %v177
    %3138 = vmatprep.subr.mxu0 %v174
    %3139 = vmatpush1.msra.mxu0 %v173
    %3140 = vmatprep.subr.mxu0 %v170
    %3141 = vmatpush1.msra.mxu0 %v169
    %3142 = vmatprep.subr.mxu0 %v166
    %3143 = vmatpush1.msra.mxu0 %v165
    %3144 = vmatprep.subr.mxu0 %v162
    %3145 = vmatpush1.msra.mxu0 %v161
    %3146 = vmatprep.subr.mxu0 %v158
    %3147 = vmatpush1.msra.mxu0 %v157
    %3148 = vmatprep.subr.mxu0 0.0
    %3149 = vmatpush2.msra.mxu0 0.0
    %3150 = vmatprep.subr.mxu0 0.0
    %3151 = vmatpush2.msra.mxu0 0.0
    %3152 = vmatprep.subr.mxu0 0.0
    %3153 = vmatpush2.msra.mxu0 0.0
    %3154 = vmatprep.subr.mxu0 0.0
    %3155 = vmatpush2.msra.mxu0 0.0
    %3156 = vmatprep.subr.mxu0 0.0
    %3157 = vmatpush2.msra.mxu0 0.0
    %3158 = vmatprep.subr.mxu0 0.0
    %3159 = vmatpush2.msra.mxu0 0.0
    %3160 = vmatprep.subr.mxu0 0.0
    %3161 = vmatpush2.msra.mxu0 0.0
    %3162 = vmatprep.subr.mxu0 0.0
    %3163 = vmatpush2.msra.mxu0 0.0
    %3164 = vmatprep.subr.mxu0 0.0
    %3165 = vmatpush2.msra.mxu0 0.0
    %3166 = vmatprep.subr.mxu0 0.0
    %3167 = vmatpush2.msra.mxu0 0.0
    %3168 = vmatprep.subr.mxu0 0.0
    %3169 = vmatpush2.msra.mxu0 0.0
    %3170 = vmatprep.subr.mxu0 0.0
    %3171 = vmatpush2.msra.mxu0 0.0
    %3172 = vmatprep.subr.mxu0 0.0
    %3173 = vmatpush2.msra.mxu0 0.0
    %3174 = vmatprep.subr.mxu0 0.0
    %3175 = vmatpush2.msra.mxu0 0.0
    %3176 = vmatprep.subr.mxu0 0.0
    %3177 = vmatpush2.msra.mxu0 0.0
    %3178 = vmatprep.subr.mxu0 0.0
    %3179 = vmatpush2.msra.mxu0 0.0
    %3180 = vmatprep.mubr.f32.mxu0 0.0
    %3181 = vmatmul.mubr.f32.gmra.mxu0 %v3044
    %v3182 = vpop.f32.mrf.mxu0
    %v3183 = vadd.f32 %v2959, %v3182
    %v3184 = vpop.f32.mrf.mxu0
    %v3185 = vadd.f32 %v2961, %v3184
    %3186 = vdwg.mxu0
    %v3187 = vadd.f32 %v3112, %v372
    %v3188 = vadd.f32 %v3114, %v374
    %v3189 = vadd.f32 %v3183, %v443
    %v3190 = vadd.f32 %v3185, %v445
    %v3191 = vxor.u32 %v3187, 2147483648
    %v3192 = vxor.u32 %v3188, 2147483648
    %v3193 = vxor.u32 %v3189, 2147483648
    %v3194 = vmul.f32 %v3191, 1.442695
    %v3195 = vpow.pop %v3194
    %v3196 = vmul.f32 %v3192, 1.442695
    %v3197 = vpow.pop %v3196
    %v3198 = vmul.f32 %v3193, 1.442695
    %v3199 = vpow.pop %v3198
    %v3200 = vadd.f32 %v3195, 1.0
    %v3201 = vadd.f32 %v3197, 1.0
    %v3202 = vadd.f32 %v3199, 1.0
    %v3203 = vrcp.pop %v3200
    %v3204 = vmul.f32 1.0, %v3203
    %v3205 = vrcp.pop %v3201
    %v3206 = vmul.f32 1.0, %v3205
    %v3207 = vrcp.pop %v3202
    %v3208 = vmul.f32 1.0, %v3207
    %v3209 = vtanh.pop %v3190
    %v3210 = vmul.f32 %v3206, %v2817
    %v3211 = vmul.f32 %v3204, %v3209
    %v3212 = vadd.f32 %v3210, %v3211
    %v3213 = vtanh.pop %v3212
    %v3214 = vmul.f32 %v3208, %v3213
    %v3215 = vadd.f32 %v3214, %v74
    %3216 = vmatprep.subr.mxu0 %v151
    %3217 = vmatpush1.msra.mxu0 %v150
    %3218 = vmatprep.subr.mxu0 %v146
    %3219 = vmatpush1.msra.mxu0 %v145
    %3220 = vmatprep.subr.mxu0 %v141
    %3221 = vmatpush1.msra.mxu0 %v140
    %3222 = vmatprep.subr.mxu0 %v136
    %3223 = vmatpush1.msra.mxu0 %v135
    %3224 = vmatprep.subr.mxu0 %v131
    %3225 = vmatpush1.msra.mxu0 %v130
    %3226 = vmatprep.subr.mxu0 %v126
    %3227 = vmatpush1.msra.mxu0 %v125
    %3228 = vmatprep.subr.mxu0 %v121
    %3229 = vmatpush1.msra.mxu0 %v120
    %3230 = vmatprep.subr.mxu0 %v116
    %3231 = vmatpush1.msra.mxu0 %v115
    %3232 = vmatprep.subr.mxu0 %v111
    %3233 = vmatpush1.msra.mxu0 %v110
    %3234 = vmatprep.subr.mxu0 %v106
    %3235 = vmatpush1.msra.mxu0 %v105
    %3236 = vmatprep.subr.mxu0 %v101
    %3237 = vmatpush1.msra.mxu0 %v100
    %3238 = vmatprep.subr.mxu0 %v96
    %3239 = vmatpush1.msra.mxu0 %v95
    %3240 = vmatprep.subr.mxu0 %v91
    %3241 = vmatpush1.msra.mxu0 %v90
    %3242 = vmatprep.subr.mxu0 %v86
    %3243 = vmatpush1.msra.mxu0 %v85
    %3244 = vmatprep.subr.mxu0 %v81
    %3245 = vmatpush1.msra.mxu0 %v80
    %3246 = vmatprep.subr.mxu0 %v76
    %3247 = vmatpush1.msra.mxu0 %v75
    %3248 = vmatprep.subr.mxu0 0.0
    %3249 = vmatpush2.msra.mxu0 0.0
    %3250 = vmatprep.subr.mxu0 0.0
    %3251 = vmatpush2.msra.mxu0 0.0
    %3252 = vmatprep.subr.mxu0 0.0
    %3253 = vmatpush2.msra.mxu0 0.0
    %3254 = vmatprep.subr.mxu0 0.0
    %3255 = vmatpush2.msra.mxu0 0.0
    %3256 = vmatprep.subr.mxu0 0.0
    %3257 = vmatpush2.msra.mxu0 0.0
    %3258 = vmatprep.subr.mxu0 0.0
    %3259 = vmatpush2.msra.mxu0 0.0
    %3260 = vmatprep.subr.mxu0 0.0
    %3261 = vmatpush2.msra.mxu0 0.0
    %3262 = vmatprep.subr.mxu0 0.0
    %3263 = vmatpush2.msra.mxu0 0.0
    %3264 = vmatprep.subr.mxu0 0.0
    %3265 = vmatpush2.msra.mxu0 0.0
    %3266 = vmatprep.subr.mxu0 0.0
    %3267 = vmatpush2.msra.mxu0 0.0
    %3268 = vmatprep.subr.mxu0 0.0
    %3269 = vmatpush2.msra.mxu0 0.0
    %3270 = vmatprep.subr.mxu0 0.0
    %3271 = vmatpush2.msra.mxu0 0.0
    %3272 = vmatprep.subr.mxu0 0.0
    %3273 = vmatpush2.msra.mxu0 0.0
    %3274 = vmatprep.subr.mxu0 0.0
    %3275 = vmatpush2.msra.mxu0 0.0
    %3276 = vmatprep.subr.mxu0 0.0
    %3277 = vmatpush2.msra.mxu0 0.0
    %3278 = vmatprep.subr.mxu0 0.0
    %3279 = vmatpush2.msra.mxu0 0.0
    %3280 = vmatprep.mubr.f32.mxu0 0.0
    %3281 = vmatmul.mubr.f32.gmra.mxu0 %v3215
    %v3282 = vpop.f32.mrf.mxu0
    %v3283 = vadd.f32 0.0, %v3282
    %v3284 = vpop.f32.mrf.mxu0
    %v3285 = vadd.f32 0.0, %v3284
    %3286 = vdwg.mxu0
    %3287 = vmatprep.subr.mxu0 %v153
    %3288 = vmatpush1.msra.mxu0 %v152
    %3289 = vmatprep.subr.mxu0 %v148
    %3290 = vmatpush1.msra.mxu0 %v147
    %3291 = vmatprep.subr.mxu0 %v143
    %3292 = vmatpush1.msra.mxu0 %v142
    %3293 = vmatprep.subr.mxu0 %v138
    %3294 = vmatpush1.msra.mxu0 %v137
    %3295 = vmatprep.subr.mxu0 %v133
    %3296 = vmatpush1.msra.mxu0 %v132
    %3297 = vmatprep.subr.mxu0 %v128
    %3298 = vmatpush1.msra.mxu0 %v127
    %3299 = vmatprep.subr.mxu0 %v123
    %3300 = vmatpush1.msra.mxu0 %v122
    %3301 = vmatprep.subr.mxu0 %v118
    %3302 = vmatpush1.msra.mxu0 %v117
    %3303 = vmatprep.subr.mxu0 %v113
    %3304 = vmatpush1.msra.mxu0 %v112
    %3305 = vmatprep.subr.mxu0 %v108
    %3306 = vmatpush1.msra.mxu0 %v107
    %3307 = vmatprep.subr.mxu0 %v103
    %3308 = vmatpush1.msra.mxu0 %v102
    %3309 = vmatprep.subr.mxu0 %v98
    %3310 = vmatpush1.msra.mxu0 %v97
    %3311 = vmatprep.subr.mxu0 %v93
    %3312 = vmatpush1.msra.mxu0 %v92
    %3313 = vmatprep.subr.mxu0 %v88
    %3314 = vmatpush1.msra.mxu0 %v87
    %3315 = vmatprep.subr.mxu0 %v83
    %3316 = vmatpush1.msra.mxu0 %v82
    %3317 = vmatprep.subr.mxu0 %v78
    %3318 = vmatpush1.msra.mxu0 %v77
    %3319 = vmatprep.subr.mxu0 0.0
    %3320 = vmatpush2.msra.mxu0 0.0
    %3321 = vmatprep.subr.mxu0 0.0
    %3322 = vmatpush2.msra.mxu0 0.0
    %3323 = vmatprep.subr.mxu0 0.0
    %3324 = vmatpush2.msra.mxu0 0.0
    %3325 = vmatprep.subr.mxu0 0.0
    %3326 = vmatpush2.msra.mxu0 0.0
    %3327 = vmatprep.subr.mxu0 0.0
    %3328 = vmatpush2.msra.mxu0 0.0
    %3329 = vmatprep.subr.mxu0 0.0
    %3330 = vmatpush2.msra.mxu0 0.0
    %3331 = vmatprep.subr.mxu0 0.0
    %3332 = vmatpush2.msra.mxu0 0.0
    %3333 = vmatprep.subr.mxu0 0.0
    %3334 = vmatpush2.msra.mxu0 0.0
    %3335 = vmatprep.subr.mxu0 0.0
    %3336 = vmatpush2.msra.mxu0 0.0
    %3337 = vmatprep.subr.mxu0 0.0
    %3338 = vmatpush2.msra.mxu0 0.0
    %3339 = vmatprep.subr.mxu0 0.0
    %3340 = vmatpush2.msra.mxu0 0.0
    %3341 = vmatprep.subr.mxu0 0.0
    %3342 = vmatpush2.msra.mxu0 0.0
    %3343 = vmatprep.subr.mxu0 0.0
    %3344 = vmatpush2.msra.mxu0 0.0
    %3345 = vmatprep.subr.mxu0 0.0
    %3346 = vmatpush2.msra.mxu0 0.0
    %3347 = vmatprep.subr.mxu0 0.0
    %3348 = vmatpush2.msra.mxu0 0.0
    %3349 = vmatprep.subr.mxu0 0.0
    %3350 = vmatpush2.msra.mxu0 0.0
    %3351 = vmatprep.mubr.f32.mxu0 0.0
    %3352 = vmatmul.mubr.f32.gmra.mxu0 %v3215
    %v3353 = vpop.f32.mrf.mxu0
    %v3354 = vadd.f32 0.0, %v3353
    %v3355 = vpop.f32.mrf.mxu0
    %v3356 = vadd.f32 0.0, %v3355
    %3357 = vdwg.mxu0
    %3358 = vmatprep.subr.mxu0 0.0
    %3359 = vmatpush1.msra.mxu0 %v154
    %3360 = vmatprep.subr.mxu0 0.0
    %3361 = vmatpush1.msra.mxu0 %v149
    %3362 = vmatprep.subr.mxu0 0.0
    %3363 = vmatpush1.msra.mxu0 %v144
    %3364 = vmatprep.subr.mxu0 0.0
    %3365 = vmatpush1.msra.mxu0 %v139
    %3366 = vmatprep.subr.mxu0 0.0
    %3367 = vmatpush1.msra.mxu0 %v134
    %3368 = vmatprep.subr.mxu0 0.0
    %3369 = vmatpush1.msra.mxu0 %v129
    %3370 = vmatprep.subr.mxu0 0.0
    %3371 = vmatpush1.msra.mxu0 %v124
    %3372 = vmatprep.subr.mxu0 0.0
    %3373 = vmatpush1.msra.mxu0 %v119
    %3374 = vmatprep.subr.mxu0 0.0
    %3375 = vmatpush1.msra.mxu0 %v114
    %3376 = vmatprep.subr.mxu0 0.0
    %3377 = vmatpush1.msra.mxu0 %v109
    %3378 = vmatprep.subr.mxu0 0.0
    %3379 = vmatpush1.msra.mxu0 %v104
    %3380 = vmatprep.subr.mxu0 0.0
    %3381 = vmatpush1.msra.mxu0 %v99
    %3382 = vmatprep.subr.mxu0 0.0
    %3383 = vmatpush1.msra.mxu0 %v94
    %3384 = vmatprep.subr.mxu0 0.0
    %3385 = vmatpush1.msra.mxu0 %v89
    %3386 = vmatprep.subr.mxu0 0.0
    %3387 = vmatpush1.msra.mxu0 %v84
    %3388 = vmatprep.subr.mxu0 0.0
    %3389 = vmatpush1.msra.mxu0 %v79
    %3390 = vmatprep.subr.mxu0 0.0
    %3391 = vmatpush2.msra.mxu0 0.0
    %3392 = vmatprep.subr.mxu0 0.0
    %3393 = vmatpush2.msra.mxu0 0.0
    %3394 = vmatprep.subr.mxu0 0.0
    %3395 = vmatpush2.msra.mxu0 0.0
    %3396 = vmatprep.subr.mxu0 0.0
    %3397 = vmatpush2.msra.mxu0 0.0
    %3398 = vmatprep.subr.mxu0 0.0
    %3399 = vmatpush2.msra.mxu0 0.0
    %3400 = vmatprep.subr.mxu0 0.0
    %3401 = vmatpush2.msra.mxu0 0.0
    %3402 = vmatprep.subr.mxu0 0.0
    %3403 = vmatpush2.msra.mxu0 0.0
    %3404 = vmatprep.subr.mxu0 0.0
    %3405 = vmatpush2.msra.mxu0 0.0
    %3406 = vmatprep.subr.mxu0 0.0
    %3407 = vmatpush2.msra.mxu0 0.0
    %3408 = vmatprep.subr.mxu0 0.0
    %3409 = vmatpush2.msra.mxu0 0.0
    %3410 = vmatprep.subr.mxu0 0.0
    %3411 = vmatpush2.msra.mxu0 0.0
    %3412 = vmatprep.subr.mxu0 0.0
    %3413 = vmatpush2.msra.mxu0 0.0
    %3414 = vmatprep.subr.mxu0 0.0
    %3415 = vmatpush2.msra.mxu0 0.0
    %3416 = vmatprep.subr.mxu0 0.0
    %3417 = vmatpush2.msra.mxu0 0.0
    %3418 = vmatprep.subr.mxu0 0.0
    %3419 = vmatpush2.msra.mxu0 0.0
    %3420 = vmatprep.subr.mxu0 0.0
    %3421 = vmatpush2.msra.mxu0 0.0
    %3422 = vmatprep.mubr.f32.mxu0 0.0
    %3423 = vmatmul.mubr.f32.gmra.mxu0 %v3215
    %v3424 = vpop.f32.mrf.mxu0
    %v3425 = vadd.f32 0.0, %v3424
    %v3426 = vpop.f32.mrf.mxu0
    %3427 = vdwg.mxu0
    %v3428 = vsel %vm449, %v3425, -1e+30
    %v3429 = vsel %vm663, %v3428, -inf
    %3430 = vmax.xlane.f32.xlu0 %v3429
    %v3431 = vpop.xlane.xlu0 %3430
    %v3432 = vsub.f32 %v3428, %v3431
    %v3433 = vmul.f32 %v3432, 1.442695
    %v3434 = vpow.pop %v3433
    %v3435 = vsel %vm663, %v3434, 0.0
    %3436 = vadd.xlane.f32.xlu0 %v3435
    %v3437 = vpop.xlane.xlu0 %3436
    %v3438 = vrcp.pop %v3437
    %v3439 = vmul.f32 %v3434, %v3438
    %3440 = vmatprep.subr.mxu0 %v216
    %3441 = vmatpush1.msra.mxu0 %v215
    %3442 = vmatprep.subr.mxu0 %v212
    %3443 = vmatpush1.msra.mxu0 %v211
    %3444 = vmatprep.subr.mxu0 %v208
    %3445 = vmatpush1.msra.mxu0 %v207
    %3446 = vmatprep.subr.mxu0 %v204
    %3447 = vmatpush1.msra.mxu0 %v203
    %3448 = vmatprep.subr.mxu0 %v200
    %3449 = vmatpush1.msra.mxu0 %v199
    %3450 = vmatprep.subr.mxu0 %v196
    %3451 = vmatpush1.msra.mxu0 %v195
    %3452 = vmatprep.subr.mxu0 %v192
    %3453 = vmatpush1.msra.mxu0 %v191
    %3454 = vmatprep.subr.mxu0 %v188
    %3455 = vmatpush1.msra.mxu0 %v187
    %3456 = vmatprep.subr.mxu0 %v184
    %3457 = vmatpush1.msra.mxu0 %v183
    %3458 = vmatprep.subr.mxu0 %v180
    %3459 = vmatpush1.msra.mxu0 %v179
    %3460 = vmatprep.subr.mxu0 %v176
    %3461 = vmatpush1.msra.mxu0 %v175
    %3462 = vmatprep.subr.mxu0 %v172
    %3463 = vmatpush1.msra.mxu0 %v171
    %3464 = vmatprep.subr.mxu0 %v168
    %3465 = vmatpush1.msra.mxu0 %v167
    %3466 = vmatprep.subr.mxu0 %v164
    %3467 = vmatpush1.msra.mxu0 %v163
    %3468 = vmatprep.subr.mxu0 %v160
    %3469 = vmatpush1.msra.mxu0 %v159
    %3470 = vmatprep.subr.mxu0 %v156
    %3471 = vmatpush1.msra.mxu0 %v155
    %3472 = vmatprep.subr.mxu0 0.0
    %3473 = vmatpush2.msra.mxu0 0.0
    %3474 = vmatprep.subr.mxu0 0.0
    %3475 = vmatpush2.msra.mxu0 0.0
    %3476 = vmatprep.subr.mxu0 0.0
    %3477 = vmatpush2.msra.mxu0 0.0
    %3478 = vmatprep.subr.mxu0 0.0
    %3479 = vmatpush2.msra.mxu0 0.0
    %3480 = vmatprep.subr.mxu0 0.0
    %3481 = vmatpush2.msra.mxu0 0.0
    %3482 = vmatprep.subr.mxu0 0.0
    %3483 = vmatpush2.msra.mxu0 0.0
    %3484 = vmatprep.subr.mxu0 0.0
    %3485 = vmatpush2.msra.mxu0 0.0
    %3486 = vmatprep.subr.mxu0 0.0
    %3487 = vmatpush2.msra.mxu0 0.0
    %3488 = vmatprep.subr.mxu0 0.0
    %3489 = vmatpush2.msra.mxu0 0.0
    %3490 = vmatprep.subr.mxu0 0.0
    %3491 = vmatpush2.msra.mxu0 0.0
    %3492 = vmatprep.subr.mxu0 0.0
    %3493 = vmatpush2.msra.mxu0 0.0
    %3494 = vmatprep.subr.mxu0 0.0
    %3495 = vmatpush2.msra.mxu0 0.0
    %3496 = vmatprep.subr.mxu0 0.0
    %3497 = vmatpush2.msra.mxu0 0.0
    %3498 = vmatprep.subr.mxu0 0.0
    %3499 = vmatpush2.msra.mxu0 0.0
    %3500 = vmatprep.subr.mxu0 0.0
    %3501 = vmatpush2.msra.mxu0 0.0
    %3502 = vmatprep.subr.mxu0 0.0
    %3503 = vmatpush2.msra.mxu0 0.0
    %3504 = vmatprep.mubr.f32.mxu0 0.0
    %3505 = vmatmul.mubr.f32.gmra.mxu0 %v3439
    %v3506 = vpop.f32.mrf.mxu0
    %v3507 = vadd.f32 %v3283, %v3506
    %v3508 = vpop.f32.mrf.mxu0
    %v3509 = vadd.f32 %v3285, %v3508
    %3510 = vdwg.mxu0
    %3511 = vmatprep.subr.mxu0 %v218
    %3512 = vmatpush1.msra.mxu0 %v217
    %3513 = vmatprep.subr.mxu0 %v214
    %3514 = vmatpush1.msra.mxu0 %v213
    %3515 = vmatprep.subr.mxu0 %v210
    %3516 = vmatpush1.msra.mxu0 %v209
    %3517 = vmatprep.subr.mxu0 %v206
    %3518 = vmatpush1.msra.mxu0 %v205
    %3519 = vmatprep.subr.mxu0 %v202
    %3520 = vmatpush1.msra.mxu0 %v201
    %3521 = vmatprep.subr.mxu0 %v198
    %3522 = vmatpush1.msra.mxu0 %v197
    %3523 = vmatprep.subr.mxu0 %v194
    %3524 = vmatpush1.msra.mxu0 %v193
    %3525 = vmatprep.subr.mxu0 %v190
    %3526 = vmatpush1.msra.mxu0 %v189
    %3527 = vmatprep.subr.mxu0 %v186
    %3528 = vmatpush1.msra.mxu0 %v185
    %3529 = vmatprep.subr.mxu0 %v182
    %3530 = vmatpush1.msra.mxu0 %v181
    %3531 = vmatprep.subr.mxu0 %v178
    %3532 = vmatpush1.msra.mxu0 %v177
    %3533 = vmatprep.subr.mxu0 %v174
    %3534 = vmatpush1.msra.mxu0 %v173
    %3535 = vmatprep.subr.mxu0 %v170
    %3536 = vmatpush1.msra.mxu0 %v169
    %3537 = vmatprep.subr.mxu0 %v166
    %3538 = vmatpush1.msra.mxu0 %v165
    %3539 = vmatprep.subr.mxu0 %v162
    %3540 = vmatpush1.msra.mxu0 %v161
    %3541 = vmatprep.subr.mxu0 %v158
    %3542 = vmatpush1.msra.mxu0 %v157
    %3543 = vmatprep.subr.mxu0 0.0
    %3544 = vmatpush2.msra.mxu0 0.0
    %3545 = vmatprep.subr.mxu0 0.0
    %3546 = vmatpush2.msra.mxu0 0.0
    %3547 = vmatprep.subr.mxu0 0.0
    %3548 = vmatpush2.msra.mxu0 0.0
    %3549 = vmatprep.subr.mxu0 0.0
    %3550 = vmatpush2.msra.mxu0 0.0
    %3551 = vmatprep.subr.mxu0 0.0
    %3552 = vmatpush2.msra.mxu0 0.0
    %3553 = vmatprep.subr.mxu0 0.0
    %3554 = vmatpush2.msra.mxu0 0.0
    %3555 = vmatprep.subr.mxu0 0.0
    %3556 = vmatpush2.msra.mxu0 0.0
    %3557 = vmatprep.subr.mxu0 0.0
    %3558 = vmatpush2.msra.mxu0 0.0
    %3559 = vmatprep.subr.mxu0 0.0
    %3560 = vmatpush2.msra.mxu0 0.0
    %3561 = vmatprep.subr.mxu0 0.0
    %3562 = vmatpush2.msra.mxu0 0.0
    %3563 = vmatprep.subr.mxu0 0.0
    %3564 = vmatpush2.msra.mxu0 0.0
    %3565 = vmatprep.subr.mxu0 0.0
    %3566 = vmatpush2.msra.mxu0 0.0
    %3567 = vmatprep.subr.mxu0 0.0
    %3568 = vmatpush2.msra.mxu0 0.0
    %3569 = vmatprep.subr.mxu0 0.0
    %3570 = vmatpush2.msra.mxu0 0.0
    %3571 = vmatprep.subr.mxu0 0.0
    %3572 = vmatpush2.msra.mxu0 0.0
    %3573 = vmatprep.subr.mxu0 0.0
    %3574 = vmatpush2.msra.mxu0 0.0
    %3575 = vmatprep.mubr.f32.mxu0 0.0
    %3576 = vmatmul.mubr.f32.gmra.mxu0 %v3439
    %v3577 = vpop.f32.mrf.mxu0
    %v3578 = vadd.f32 %v3354, %v3577
    %v3579 = vpop.f32.mrf.mxu0
    %v3580 = vadd.f32 %v3356, %v3579
    %3581 = vdwg.mxu0
    %v3582 = vadd.f32 %v3507, %v372
    %v3583 = vadd.f32 %v3509, %v374
    %v3584 = vadd.f32 %v3578, %v443
    %v3585 = vadd.f32 %v3580, %v445
    %v3586 = vxor.u32 %v3582, 2147483648
    %v3587 = vxor.u32 %v3583, 2147483648
    %v3588 = vxor.u32 %v3584, 2147483648
    %v3589 = vmul.f32 %v3586, 1.442695
    %v3590 = vpow.pop %v3589
    %v3591 = vmul.f32 %v3587, 1.442695
    %v3592 = vpow.pop %v3591
    %v3593 = vmul.f32 %v3588, 1.442695
    %v3594 = vpow.pop %v3593
    %v3595 = vadd.f32 %v3590, 1.0
    %v3596 = vadd.f32 %v3592, 1.0
    %v3597 = vadd.f32 %v3594, 1.0
    %v3598 = vrcp.pop %v3595
    %v3599 = vmul.f32 1.0, %v3598
    %v3600 = vrcp.pop %v3596
    %v3601 = vmul.f32 1.0, %v3600
    %v3602 = vrcp.pop %v3597
    %v3603 = vmul.f32 1.0, %v3602
    %v3604 = vtanh.pop %v3585
    %v3605 = vmul.f32 %v3601, %v3212
    %v3606 = vmul.f32 %v3599, %v3604
    %v3607 = vadd.f32 %v3605, %v3606
    %v3608 = vtanh.pop %v3607
    %v3609 = vmul.f32 %v3603, %v3608
    %v3610 = vadd.f32 %v3609, %v74
    %3611 = vst [vmem:[#allocation10] sm:$0x3] %v3610
    // Predicated region
    $region38: #{tpu_custom_call.1} parent=1 // pred_check
      _
    $region39: #{tpu_custom_call.1} parent=1 // pred_check_branch
      %3613 = sbr.rel (0) target = $region41
    $region40: #{tpu_custom_call.1} parent=1 // pred_region
      %s3615 = ssub.s32 32, 32
      %3616 = vsyncadd [#allocation4], %s3615
      %s3618 = sshll.u32 [#allocation10], 4
      %s3619 = int_to_ptr.vmem [resolvable:$true] %s3618
      %3621 = dma.vmem_to_hbm [thread:$0]  %s3619, 32, %s5, [#allocation4]
    $region41: #{tpu_custom_call.1} parent=1 // pred_fallthru
      _
    // Predicated region
    $region42: #{tpu_custom_call.1} parent=1 // pred_check
      _
    $region43: #{tpu_custom_call.1} parent=1 // pred_check_branch
      %3623 = sbr.rel (0) target = $region45
    $region44: #{tpu_custom_call.1} parent=1 // pred_region
      %3624 = dma.done [#allocation4], 32
    $region45: #{tpu_custom_call.1} parent=1 // pred_fallthru
      _
    %3625 = vsyncpa [#allocation3], 1
    %3626 = vsyncpa [#allocation6], 1
    %3627 = vsyncpa [#allocation9], 1
    %3628 = vsyncpa [#allocation4], 1

</llo_original>
